<compile_context>
chip_gen: v7x
topology: tpu7x:2x2x1
jax: 0.10.0
libtpu: 0.0.40
codegen_flags: <defaults>
</compile_context>

<pallas_src>
import functools

import jax
import jax.numpy as jnp
from jax import lax
from jax.experimental import pallas as pl
from jax.experimental.pallas import tpu as pltpu

_LANES = 128


def _conv_pool_stats_kernel(x_ref, w_ref, pmax_ref, pmin_ref, stats_ref, *,
                            sh, sw, OH, OW, pk, ps, PH, PW):
    """Conv (tap-accumulated MXU matmuls) + in-VMEM max/min pooling of the raw
    conv output + per-tile BatchNorm partial statistics.

    x_ref:     (1, Hp, Wp, Cin)   zero-padded NHWC input image (bf16)
    w_ref:     (KH, KW, Cin, Cp)  conv weight, channels zero-padded to lanes (bf16)
    pmax_ref:  (1, PH, PW, Cp)    pool-window max of the raw conv output (f32)
    pmin_ref:  (1, PH, PW, Cp)    pool-window min of the raw conv output (f32)
    stats_ref: (1, 2, Cp)         this tile's [sum, sum_of_squares] (f32)
    """
    x = x_ref[...]                      # (1, Hp, Wp, Cin) bf16
    w = w_ref[...]                      # (KH, KW, Cin, Cp) bf16
    KH, KW, _, Cp = w_ref.shape
    rows = OH * OW

    # ---- conv: accumulate over the KH*KW taps on the MXU (f32 acc) --------
    acc = jnp.zeros((rows, Cp), jnp.float32)
    for i in range(KH):
        for j in range(KW):
            tap = x[0,
                    i:i + sh * (OH - 1) + 1:sh,
                    j:j + sw * (OW - 1) + 1:sw, :]          # (OH, OW, Cin)
            tap = tap.reshape(rows, -1)                     # (rows, Cin)
            acc = acc + jnp.dot(tap, w[i, j],
                                preferred_element_type=jnp.float32)

    # ---- per-tile BN partial statistics (reduced across tiles in kernel 2) -
    stats = jnp.stack([jnp.sum(acc, axis=0), jnp.sum(acc * acc, axis=0)],
                      axis=0)                               # (2, Cp)
    stats_ref[...] = stats.reshape(1, 2, Cp)

    # ---- max/min pool the RAW conv output (affine + ReLU applied later) ----
    y = acc.reshape(OH, OW, Cp)
    if ps == pk and OH == PH * ps and OW == PW * ps:
        # Non-overlapping, exactly-covering windows: reshape + reduce.
        y5 = y.reshape(PH, ps, PW, ps, Cp)
        pmax = jnp.max(jnp.max(y5, axis=3), axis=1)          # (PH, PW, Cp)
        pmin = jnp.min(jnp.min(y5, axis=3), axis=1)
    else:
        # General window gather via strided slices.
        pmax = None
        pmin = None
        for i in range(pk):
            for j in range(pk):
                win = y[i:i + ps * (PH - 1) + 1:ps,
                        j:j + ps * (PW - 1) + 1:ps, :]       # (PH, PW, Cp)
                pmax = win if pmax is None else jnp.maximum(pmax, win)
                pmin = win if pmin is None else jnp.minimum(pmin, win)
    pmax_ref[...] = pmax.reshape(1, PH, PW, Cp)
    pmin_ref[...] = pmin.reshape(1, PH, PW, Cp)


def _bn_affine_relu_kernel(stats_ref, pmax_ref, pmin_ref, gb_ref, o_ref, *,
                           inv_count, eps):
    """Reduce BN partials -> per-channel scale/shift, then apply the affine to
    the pooled extrema (sign-selected so negative gamma is correct) + ReLU.

    stats_ref: (T, 2, Cp)       per-tile [sum, sumsq] partials from kernel 1
    pmax_ref:  (1, PH, PW, Cp)
    pmin_ref:  (1, PH, PW, Cp)
    gb_ref:    (2, Cp)          row 0 = gamma, row 1 = beta (lane-padded)
    o_ref:     (1, PH, PW, Cp)
    """
    s = jnp.sum(stats_ref[...], axis=0)                     # (2, Cp)
    mean = s[0:1, :] * inv_count                            # (1, Cp)
    var = jnp.maximum(s[1:2, :] * inv_count - mean * mean, 0.0)
    gamma = gb_ref[0:1, :]
    beta = gb_ref[1:2, :]
    scale = gamma * lax.rsqrt(var + eps)                    # rsqrt -> EUP slot
    shift = beta - mean * scale
    scale4 = scale.reshape(1, 1, 1, -1)
    shift4 = shift.reshape(1, 1, 1, -1)
    # max over a window of (a*x + b) == a*max(x)+b if a>=0, a*min(x)+b if a<0.
    pooled = jnp.where(scale4 >= 0.0, pmax_ref[...], pmin_ref[...])
    o_ref[...] = jnp.maximum(pooled * scale4 + shift4, 0.0)


def conv_block_apply(x_nchw, conv_weight, conv_bias, bn_gamma, bn_beta, *,
                     conv_stride, conv_padding,
                     pool_kernel_size, pool_stride, pool_padding,
                     eps=1e-5):
    # TODO(synk): pool_padding > 0 (-inf border handling after BN) not implemented.
    assert pool_padding == 0

    N, Cin, H, W = x_nchw.shape
    Cout, _, KH, KW = conv_weight.shape
    sh = sw = int(conv_stride)
    ph = pw = int(conv_padding)
    OH = (H + 2 * ph - KH) // sh + 1
    OW = (W + 2 * pw - KW) // sw + 1
    pk, ps = int(pool_kernel_size), int(pool_stride)
    PH = (OH - pk) // ps + 1
    PW = (OW - pk) // ps + 1
    Hp, Wp = H + 2 * ph, W + 2 * pw

    # Lane-dense channel padding (outputs / matmul N-edge at >=128 lanes).
    Cp = ((Cout + _LANES - 1) // _LANES) * _LANES

    # conv bias is mathematically cancelled by training-mode BN's batch-mean
    # subtraction, so it is dropped from the kernel entirely.
    del conv_bias

    # ---- layout glue: NCHW -> NHWC, spatial zero-pad, bf16 MXU operands ----
    x = jnp.transpose(x_nchw, (0, 2, 3, 1)).astype(jnp.float32)
    x = jnp.pad(x, ((0, 0), (ph, ph), (pw, pw), (0, 0))).astype(jnp.bfloat16)

    w = jnp.transpose(conv_weight, (2, 3, 1, 0)).astype(jnp.float32)
    w = jnp.pad(w, ((0, 0), (0, 0), (0, 0), (0, Cp - Cout))).astype(jnp.bfloat16)

    gamma = jnp.pad(bn_gamma.astype(jnp.float32), (0, Cp - Cout))
    beta = jnp.pad(bn_beta.astype(jnp.float32), (0, Cp - Cout))
    gb = jnp.stack([gamma, beta], axis=0)                    # (2, Cp)

    # ---- kernel 1: conv + in-VMEM max/min pool + per-tile BN partials ------
    k1 = functools.partial(_conv_pool_stats_kernel,
                           sh=sh, sw=sw, OH=OH, OW=OW,
                           pk=pk, ps=ps, PH=PH, PW=PW)
    pmax, pmin, stats = pl.pallas_call(
        k1,
        out_shape=(jax.ShapeDtypeStruct((N, PH, PW, Cp), jnp.float32),
                   jax.ShapeDtypeStruct((N, PH, PW, Cp), jnp.float32),
                   jax.ShapeDtypeStruct((N, 2, Cp), jnp.float32)),
        grid=(N,),
        in_specs=[pl.BlockSpec((1, Hp, Wp, Cin), lambda n: (n, 0, 0, 0)),
                  pl.BlockSpec((KH, KW, Cin, Cp), lambda n: (0, 0, 0, 0))],
        out_specs=(pl.BlockSpec((1, PH, PW, Cp), lambda n: (n, 0, 0, 0)),
                   pl.BlockSpec((1, PH, PW, Cp), lambda n: (n, 0, 0, 0)),
                   pl.BlockSpec((1, 2, Cp), lambda n: (n, 0, 0))),
        compiler_params=pltpu.CompilerParams(
            dimension_semantics=("parallel",)),
    )(x, w)

    # ---- kernel 2: reduce partials -> BN affine (sign-selected) + ReLU -----
    k2 = functools.partial(_bn_affine_relu_kernel,
                           inv_count=1.0 / float(N * OH * OW), eps=float(eps))
    out_nhwc = pl.pallas_call(
        k2,
        out_shape=jax.ShapeDtypeStruct((N, PH, PW, Cp), jnp.float32),
        grid=(N,),
        in_specs=[pl.BlockSpec((N, 2, Cp), lambda n: (0, 0, 0)),
                  pl.BlockSpec((1, PH, PW, Cp), lambda n: (n, 0, 0, 0)),
                  pl.BlockSpec((1, PH, PW, Cp), lambda n: (n, 0, 0, 0)),
                  pl.BlockSpec((2, Cp), lambda n: (0, 0))],
        out_specs=pl.BlockSpec((1, PH, PW, Cp), lambda n: (n, 0, 0, 0)),
        compiler_params=pltpu.CompilerParams(
            dimension_semantics=("parallel",)),
    )(stats, pmax, pmin, gb)

    out = out_nhwc[:, :, :, :Cout]              # drop lane padding
    return jnp.transpose(out, (0, 3, 1, 2))     # NHWC -> NCHW


def _reference(x, w, b, gamma, beta, *, conv_stride, conv_padding,
               pool_kernel_size, pool_stride, eps=1e-5):
    """Pure-JAX reference matching PyTorch ConvBlock (training-mode BN)."""
    y = lax.conv_general_dilated(
        x, w, window_strides=(conv_stride, conv_stride),
        padding=[(conv_padding, conv_padding)] * 2,
        dimension_numbers=("NCHW", "OIHW", "NCHW"))
    y = y + b.reshape(1, -1, 1, 1)
    mean = jnp.mean(y, axis=(0, 2, 3), keepdims=True)
    var = jnp.var(y, axis=(0, 2, 3), keepdims=True)   # biased (training mode)
    y = (y - mean) * lax.rsqrt(var + eps) * gamma.reshape(1, -1, 1, 1) \
        + beta.reshape(1, -1, 1, 1)
    y = lax.reduce_window(y, -jnp.inf, lax.max,
                          (1, 1, pool_kernel_size, pool_kernel_size),
                          (1, 1, pool_stride, pool_stride), "VALID")
    return jnp.maximum(y, 0.0)


if __name__ == "__main__":
    key = jax.random.PRNGKey(0)
    k_x, k_w, k_b, k_beta = jax.random.split(key, 4)

    # ConvBlock(in_channels=4, out_channels=8, conv_kernel_size=3, conv_stride=1,
    #           conv_padding=1, pool_kernel_size=2, pool_stride=2, pool_padding=0)
    N, Cin, H, W = 2, 4, 16, 16
    Cout, KH = 8, 3

    x = jax.random.normal(k_x, (N, Cin, H, W), dtype=jnp.float32)
    conv_weight = 0.1 * jax.random.normal(k_w, (Cout, Cin, KH, KH), dtype=jnp.float32)
    conv_bias = 0.1 * jax.random.normal(k_b, (Cout,), dtype=jnp.float32)
    # Mixed-sign gamma exercises both the max- and min-pool affine branches.
    bn_gamma = jnp.array([1.0, -0.8, 0.5, -1.2, 0.9, 1.1, -0.3, 0.7], jnp.float32)
    bn_beta = 0.1 * jax.random.normal(k_beta, (Cout,), dtype=jnp.float32)

    out = conv_block_apply(x, conv_weight, conv_bias, bn_gamma, bn_beta,
                           conv_stride=1, conv_padding=1,
                           pool_kernel_size=2, pool_stride=2, pool_padding=0)
    out = jax.block_until_ready(out)
    assert out.shape == (N, Cout, H // 2, W // 2) and out.dtype == jnp.float32

    ref = _reference(x, conv_weight, conv_bias, bn_gamma, bn_beta,
                     conv_stride=1, conv_padding=1,
                     pool_kernel_size=2, pool_stride=2)
    max_err = float(jnp.max(jnp.abs(out - ref)))
    assert jnp.allclose(out, ref, rtol=5e-2, atol=5e-2), max_err

    print("KERNEL_OK")
</pallas_src>

<mosaic_0001>
module attributes {stable_mosaic.version = 11 : i64} {
  func.func @_conv_pool_stats_kernel(%arg0: i32, %arg1: memref<1x18x18x4xbf16, #tpu.memory_space<vmem>>, %arg2: memref<3x3x4x128xbf16, #tpu.memory_space<vmem>>, %arg3: memref<1x8x8x128xf32, #tpu.memory_space<vmem>>, %arg4: memref<1x8x8x128xf32, #tpu.memory_space<vmem>>, %arg5: memref<1x2x128xf32, #tpu.memory_space<vmem>>) attributes {dimension_semantics = [#tpu.dimension_semantics<parallel>], iteration_bounds = array<i64: 2>, scalar_prefetch = 0 : i64, scratch_operands = 0 : i64, tpu.core_type = #tpu.core_type<tc>, window_params = [{transform_indices = @transform_0, window_bounds = array<i64: 1, 18, 18, 4>}, {pipeline_mode = #tpu.pipeline_mode<synchronous>, transform_indices = @transform_1, window_bounds = array<i64: 3, 3, 4, 128>}, {transform_indices = @transform_2, window_bounds = array<i64: 1, 8, 8, 128>}, {transform_indices = @transform_3, window_bounds = array<i64: 1, 8, 8, 128>}, {transform_indices = @transform_4, window_bounds = array<i64: 1, 2, 128>}]} {
    %c0 = arith.constant 0 : index
    %c0_0 = arith.constant 0 : index
    %c0_1 = arith.constant 0 : index
    %c0_2 = arith.constant 0 : index
    %0 = vector.load %arg1[%c0, %c0_0, %c0_1, %c0_2] : memref<1x18x18x4xbf16, #tpu.memory_space<vmem>>, vector<1x18x18x4xbf16>
    %c0_3 = arith.constant 0 : index
    %c0_4 = arith.constant 0 : index
    %c0_5 = arith.constant 0 : index
    %c0_6 = arith.constant 0 : index
    %1 = vector.load %arg2[%c0_3, %c0_4, %c0_5, %c0_6] : memref<3x3x4x128xbf16, #tpu.memory_space<vmem>>, vector<3x3x4x128xbf16>
    %cst = arith.constant 0.000000e+00 : f32
    %2 = vector.broadcast %cst : f32 to vector<256x128xf32>
    %3 = vector.extract_strided_slice %0 {offsets = [0, 0, 0, 0], sizes = [1, 16, 16, 4], strides = [1, 1, 1, 1]} : vector<1x18x18x4xbf16> to vector<1x16x16x4xbf16>
    %4 = vector.shape_cast %3 : vector<1x16x16x4xbf16> to vector<16x16x4xbf16>
    %5 = vector.shape_cast %4 : vector<16x16x4xbf16> to vector<256x4xbf16>
    %6 = vector.extract_strided_slice %1 {offsets = [0, 0, 0, 0], sizes = [1, 1, 4, 128], strides = [1, 1, 1, 1]} : vector<3x3x4x128xbf16> to vector<1x1x4x128xbf16>
    %7 = vector.shape_cast %6 : vector<1x1x4x128xbf16> to vector<4x128xbf16>
    %cst_7 = arith.constant dense<0.000000e+00> : vector<256x128xf32>
    %8 = tpu.matmul %5, %7, %cst_7 {dimension_numbers = #tpu.dot_dimension_numbers<[1], [0], [0], [1], [0, 0, 1, 1], [], []>} : vector<256x4xbf16>, vector<4x128xbf16>, vector<256x128xf32> -> vector<256x128xf32>
    %9 = arith.addf %2, %8 : vector<256x128xf32>
    %10 = vector.extract_strided_slice %0 {offsets = [0, 0, 1, 0], sizes = [1, 16, 16, 4], strides = [1, 1, 1, 1]} : vector<1x18x18x4xbf16> to vector<1x16x16x4xbf16>
    %11 = vector.shape_cast %10 : vector<1x16x16x4xbf16> to vector<16x16x4xbf16>
    %12 = vector.shape_cast %11 : vector<16x16x4xbf16> to vector<256x4xbf16>
    %13 = vector.extract_strided_slice %1 {offsets = [0, 1, 0, 0], sizes = [1, 1, 4, 128], strides = [1, 1, 1, 1]} : vector<3x3x4x128xbf16> to vector<1x1x4x128xbf16>
    %14 = vector.shape_cast %13 : vector<1x1x4x128xbf16> to vector<4x128xbf16>
    %cst_8 = arith.constant dense<0.000000e+00> : vector<256x128xf32>
    %15 = tpu.matmul %12, %14, %cst_8 {dimension_numbers = #tpu.dot_dimension_numbers<[1], [0], [0], [1], [0, 0, 1, 1], [], []>} : vector<256x4xbf16>, vector<4x128xbf16>, vector<256x128xf32> -> vector<256x128xf32>
    %16 = arith.addf %9, %15 : vector<256x128xf32>
    %17 = vector.extract_strided_slice %0 {offsets = [0, 0, 2, 0], sizes = [1, 16, 16, 4], strides = [1, 1, 1, 1]} : vector<1x18x18x4xbf16> to vector<1x16x16x4xbf16>
    %18 = vector.shape_cast %17 : vector<1x16x16x4xbf16> to vector<16x16x4xbf16>
    %19 = vector.shape_cast %18 : vector<16x16x4xbf16> to vector<256x4xbf16>
    %20 = vector.extract_strided_slice %1 {offsets = [0, 2, 0, 0], sizes = [1, 1, 4, 128], strides = [1, 1, 1, 1]} : vector<3x3x4x128xbf16> to vector<1x1x4x128xbf16>
    %21 = vector.shape_cast %20 : vector<1x1x4x128xbf16> to vector<4x128xbf16>
    %cst_9 = arith.constant dense<0.000000e+00> : vector<256x128xf32>
    %22 = tpu.matmul %19, %21, %cst_9 {dimension_numbers = #tpu.dot_dimension_numbers<[1], [0], [0], [1], [0, 0, 1, 1], [], []>} : vector<256x4xbf16>, vector<4x128xbf16>, vector<256x128xf32> -> vector<256x128xf32>
    %23 = arith.addf %16, %22 : vector<256x128xf32>
    %24 = vector.extract_strided_slice %0 {offsets = [0, 1, 0, 0], sizes = [1, 16, 16, 4], strides = [1, 1, 1, 1]} : vector<1x18x18x4xbf16> to vector<1x16x16x4xbf16>
    %25 = vector.shape_cast %24 : vector<1x16x16x4xbf16> to vector<16x16x4xbf16>
    %26 = vector.shape_cast %25 : vector<16x16x4xbf16> to vector<256x4xbf16>
    %27 = vector.extract_strided_slice %1 {offsets = [1, 0, 0, 0], sizes = [1, 1, 4, 128], strides = [1, 1, 1, 1]} : vector<3x3x4x128xbf16> to vector<1x1x4x128xbf16>
    %28 = vector.shape_cast %27 : vector<1x1x4x128xbf16> to vector<4x128xbf16>
    %cst_10 = arith.constant dense<0.000000e+00> : vector<256x128xf32>
    %29 = tpu.matmul %26, %28, %cst_10 {dimension_numbers = #tpu.dot_dimension_numbers<[1], [0], [0], [1], [0, 0, 1, 1], [], []>} : vector<256x4xbf16>, vector<4x128xbf16>, vector<256x128xf32> -> vector<256x128xf32>
    %30 = arith.addf %23, %29 : vector<256x128xf32>
    %31 = vector.extract_strided_slice %0 {offsets = [0, 1, 1, 0], sizes = [1, 16, 16, 4], strides = [1, 1, 1, 1]} : vector<1x18x18x4xbf16> to vector<1x16x16x4xbf16>
    %32 = vector.shape_cast %31 : vector<1x16x16x4xbf16> to vector<16x16x4xbf16>
    %33 = vector.shape_cast %32 : vector<16x16x4xbf16> to vector<256x4xbf16>
    %34 = vector.extract_strided_slice %1 {offsets = [1, 1, 0, 0], sizes = [1, 1, 4, 128], strides = [1, 1, 1, 1]} : vector<3x3x4x128xbf16> to vector<1x1x4x128xbf16>
    %35 = vector.shape_cast %34 : vector<1x1x4x128xbf16> to vector<4x128xbf16>
    %cst_11 = arith.constant dense<0.000000e+00> : vector<256x128xf32>
    %36 = tpu.matmul %33, %35, %cst_11 {dimension_numbers = #tpu.dot_dimension_numbers<[1], [0], [0], [1], [0, 0, 1, 1], [], []>} : vector<256x4xbf16>, vector<4x128xbf16>, vector<256x128xf32> -> vector<256x128xf32>
    %37 = arith.addf %30, %36 : vector<256x128xf32>
    %38 = vector.extract_strided_slice %0 {offsets = [0, 1, 2, 0], sizes = [1, 16, 16, 4], strides = [1, 1, 1, 1]} : vector<1x18x18x4xbf16> to vector<1x16x16x4xbf16>
    %39 = vector.shape_cast %38 : vector<1x16x16x4xbf16> to vector<16x16x4xbf16>
    %40 = vector.shape_cast %39 : vector<16x16x4xbf16> to vector<256x4xbf16>
    %41 = vector.extract_strided_slice %1 {offsets = [1, 2, 0, 0], sizes = [1, 1, 4, 128], strides = [1, 1, 1, 1]} : vector<3x3x4x128xbf16> to vector<1x1x4x128xbf16>
    %42 = vector.shape_cast %41 : vector<1x1x4x128xbf16> to vector<4x128xbf16>
    %cst_12 = arith.constant dense<0.000000e+00> : vector<256x128xf32>
    %43 = tpu.matmul %40, %42, %cst_12 {dimension_numbers = #tpu.dot_dimension_numbers<[1], [0], [0], [1], [0, 0, 1, 1], [], []>} : vector<256x4xbf16>, vector<4x128xbf16>, vector<256x128xf32> -> vector<256x128xf32>
    %44 = arith.addf %37, %43 : vector<256x128xf32>
    %45 = vector.extract_strided_slice %0 {offsets = [0, 2, 0, 0], sizes = [1, 16, 16, 4], strides = [1, 1, 1, 1]} : vector<1x18x18x4xbf16> to vector<1x16x16x4xbf16>
    %46 = vector.shape_cast %45 : vector<1x16x16x4xbf16> to vector<16x16x4xbf16>
    %47 = vector.shape_cast %46 : vector<16x16x4xbf16> to vector<256x4xbf16>
    %48 = vector.extract_strided_slice %1 {offsets = [2, 0, 0, 0], sizes = [1, 1, 4, 128], strides = [1, 1, 1, 1]} : vector<3x3x4x128xbf16> to vector<1x1x4x128xbf16>
    %49 = vector.shape_cast %48 : vector<1x1x4x128xbf16> to vector<4x128xbf16>
    %cst_13 = arith.constant dense<0.000000e+00> : vector<256x128xf32>
    %50 = tpu.matmul %47, %49, %cst_13 {dimension_numbers = #tpu.dot_dimension_numbers<[1], [0], [0], [1], [0, 0, 1, 1], [], []>} : vector<256x4xbf16>, vector<4x128xbf16>, vector<256x128xf32> -> vector<256x128xf32>
    %51 = arith.addf %44, %50 : vector<256x128xf32>
    %52 = vector.extract_strided_slice %0 {offsets = [0, 2, 1, 0], sizes = [1, 16, 16, 4], strides = [1, 1, 1, 1]} : vector<1x18x18x4xbf16> to vector<1x16x16x4xbf16>
    %53 = vector.shape_cast %52 : vector<1x16x16x4xbf16> to vector<16x16x4xbf16>
    %54 = vector.shape_cast %53 : vector<16x16x4xbf16> to vector<256x4xbf16>
    %55 = vector.extract_strided_slice %1 {offsets = [2, 1, 0, 0], sizes = [1, 1, 4, 128], strides = [1, 1, 1, 1]} : vector<3x3x4x128xbf16> to vector<1x1x4x128xbf16>
    %56 = vector.shape_cast %55 : vector<1x1x4x128xbf16> to vector<4x128xbf16>
    %cst_14 = arith.constant dense<0.000000e+00> : vector<256x128xf32>
    %57 = tpu.matmul %54, %56, %cst_14 {dimension_numbers = #tpu.dot_dimension_numbers<[1], [0], [0], [1], [0, 0, 1, 1], [], []>} : vector<256x4xbf16>, vector<4x128xbf16>, vector<256x128xf32> -> vector<256x128xf32>
    %58 = arith.addf %51, %57 : vector<256x128xf32>
    %59 = vector.extract_strided_slice %0 {offsets = [0, 2, 2, 0], sizes = [1, 16, 16, 4], strides = [1, 1, 1, 1]} : vector<1x18x18x4xbf16> to vector<1x16x16x4xbf16>
    %60 = vector.shape_cast %59 : vector<1x16x16x4xbf16> to vector<16x16x4xbf16>
    %61 = vector.shape_cast %60 : vector<16x16x4xbf16> to vector<256x4xbf16>
    %62 = vector.extract_strided_slice %1 {offsets = [2, 2, 0, 0], sizes = [1, 1, 4, 128], strides = [1, 1, 1, 1]} : vector<3x3x4x128xbf16> to vector<1x1x4x128xbf16>
    %63 = vector.shape_cast %62 : vector<1x1x4x128xbf16> to vector<4x128xbf16>
    %cst_15 = arith.constant dense<0.000000e+00> : vector<256x128xf32>
    %64 = tpu.matmul %61, %63, %cst_15 {dimension_numbers = #tpu.dot_dimension_numbers<[1], [0], [0], [1], [0, 0, 1, 1], [], []>} : vector<256x4xbf16>, vector<4x128xbf16>, vector<256x128xf32> -> vector<256x128xf32>
    %65 = arith.addf %58, %64 : vector<256x128xf32>
    %cst_16 = arith.constant dense<0.000000e+00> : vector<128xf32>
    %66 = vector.multi_reduction <add>, %65, %cst_16 [0] : vector<256x128xf32> to vector<128xf32>
    %67 = arith.mulf %65, %65 : vector<256x128xf32>
    %cst_17 = arith.constant dense<0.000000e+00> : vector<128xf32>
    %68 = vector.multi_reduction <add>, %67, %cst_17 [0] : vector<256x128xf32> to vector<128xf32>
    %69 = vector.shape_cast %66 : vector<128xf32> to vector<1x128xf32>
    %70 = vector.shape_cast %68 : vector<128xf32> to vector<1x128xf32>
    %71 = tpu.concatenate %69, %70 in 0 : vector<1x128xf32>, vector<1x128xf32> -> vector<2x128xf32>
    %72 = vector.shape_cast %71 : vector<2x128xf32> to vector<1x2x128xf32>
    %c0_18 = arith.constant 0 : index
    %c0_19 = arith.constant 0 : index
    %c0_20 = arith.constant 0 : index
    %73 = vector.load %arg5[%c0_18, %c0_19, %c0_20] : memref<1x2x128xf32, #tpu.memory_space<vmem>>, vector<1x2x128xf32>
    tpu.vector_store %arg5[%c0_18, %c0_19, %c0_20], %72 {strides = array<i32>} : memref<1x2x128xf32, #tpu.memory_space<vmem>>, vector<1x2x128xf32>,
    %74 = vector.shape_cast %65 : vector<256x128xf32> to vector<16x16x128xf32>
    %75 = vector.shape_cast %74 : vector<16x16x128xf32> to vector<8x2x8x2x128xf32>
    %cst_21 = arith.constant dense<0xFF800000> : vector<8x2x8x128xf32>
    %76 = vector.multi_reduction <maximumf>, %75, %cst_21 [3] : vector<8x2x8x2x128xf32> to vector<8x2x8x128xf32>
    %cst_22 = arith.constant dense<0xFF800000> : vector<8x8x128xf32>
    %77 = vector.multi_reduction <maximumf>, %76, %cst_22 [1] : vector<8x2x8x128xf32> to vector<8x8x128xf32>
    %cst_23 = arith.constant dense<0x7F800000> : vector<8x2x8x128xf32>
    %78 = vector.multi_reduction <minimumf>, %75, %cst_23 [3] : vector<8x2x8x2x128xf32> to vector<8x2x8x128xf32>
    %cst_24 = arith.constant dense<0x7F800000> : vector<8x8x128xf32>
    %79 = vector.multi_reduction <minimumf>, %78, %cst_24 [1] : vector<8x2x8x128xf32> to vector<8x8x128xf32>
    %80 = vector.shape_cast %77 : vector<8x8x128xf32> to vector<1x8x8x128xf32>
    %c0_25 = arith.constant 0 : index
    %c0_26 = arith.constant 0 : index
    %c0_27 = arith.constant 0 : index
    %c0_28 = arith.constant 0 : index
    %81 = vector.load %arg3[%c0_25, %c0_26, %c0_27, %c0_28] : memref<1x8x8x128xf32, #tpu.memory_space<vmem>>, vector<1x8x8x128xf32>
    tpu.vector_store %arg3[%c0_25, %c0_26, %c0_27, %c0_28], %80 {strides = array<i32>} : memref<1x8x8x128xf32, #tpu.memory_space<vmem>>, vector<1x8x8x128xf32>,
    %82 = vector.shape_cast %79 : vector<8x8x128xf32> to vector<1x8x8x128xf32>
    %c0_29 = arith.constant 0 : index
    %c0_30 = arith.constant 0 : index
    %c0_31 = arith.constant 0 : index
    %c0_32 = arith.constant 0 : index
    %83 = vector.load %arg4[%c0_29, %c0_30, %c0_31, %c0_32] : memref<1x8x8x128xf32, #tpu.memory_space<vmem>>, vector<1x8x8x128xf32>
    tpu.vector_store %arg4[%c0_29, %c0_30, %c0_31, %c0_32], %82 {strides = array<i32>} : memref<1x8x8x128xf32, #tpu.memory_space<vmem>>, vector<1x8x8x128xf32>,
    return
  }
  func.func @transform_0(%arg0: i32) -> (i32, i32, i32, i32) {
    %c0_i32 = arith.constant 0 : i32
    %c0_i32_0 = arith.constant 0 : i32
    %c0_i32_1 = arith.constant 0 : i32
    %c0_i32_2 = arith.constant 0 : i32
    return %arg0, %c0_i32, %c0_i32_0, %c0_i32_1 : i32, i32, i32, i32
  }
  func.func @transform_1(%arg0: i32) -> (i32, i32, i32, i32) {
    %c0_i32 = arith.constant 0 : i32
    %c0_i32_0 = arith.constant 0 : i32
    %c0_i32_1 = arith.constant 0 : i32
    %c0_i32_2 = arith.constant 0 : i32
    %c0_i32_3 = arith.constant 0 : i32
    return %c0_i32, %c0_i32_0, %c0_i32_1, %c0_i32_2 : i32, i32, i32, i32
  }
  func.func @transform_2(%arg0: i32) -> (i32, i32, i32, i32) {
    %c0_i32 = arith.constant 0 : i32
    %c0_i32_0 = arith.constant 0 : i32
    %c0_i32_1 = arith.constant 0 : i32
    %c0_i32_2 = arith.constant 0 : i32
    return %arg0, %c0_i32, %c0_i32_0, %c0_i32_1 : i32, i32, i32, i32
  }
  func.func @transform_3(%arg0: i32) -> (i32, i32, i32, i32) {
    %c0_i32 = arith.constant 0 : i32
    %c0_i32_0 = arith.constant 0 : i32
    %c0_i32_1 = arith.constant 0 : i32
    %c0_i32_2 = arith.constant 0 : i32
    return %arg0, %c0_i32, %c0_i32_0, %c0_i32_1 : i32, i32, i32, i32
  }
  func.func @transform_4(%arg0: i32) -> (i32, i32, i32) {
    %c0_i32 = arith.constant 0 : i32
    %c0_i32_0 = arith.constant 0 : i32
    %c0_i32_1 = arith.constant 0 : i32
    return %arg0, %c0_i32, %c0_i32_0 : i32, i32, i32
  }
}

</mosaic_0001>

<llo_original>
// kernel: tpu_custom_call.1
$region0: #{tpu_custom_call.1}
  #allocation0 [shape = 'u32[]', space=smem, size = 0x4, offset = 0x4, fixed_abs, tag = 'smem constant byte address 0x4 - core index']
  #allocation1 [shape = 'u32[144,128]{1,0:T(1,128)}', space=vmem, size = 0x12000, scoped, tag = 'internal scratch']
  %s0 = inlined_call_operand.vmem [shape: bf16[2,18,18,4], index: 0, kind: input, shape index: {}]
  %s1 = inlined_call_operand.vmem [shape: bf16[3,3,4,128], index: 1, kind: input, shape index: {}]
  %s2 = inlined_call_operand.hbm [shape: f32[2,8,8,128], index: 2, kind: output, shape index: {0}]
  %s3 = inlined_call_operand.hbm [shape: f32[2,8,8,128], index: 3, kind: output, shape index: {1}]
  %s4 = inlined_call_operand.hbm [shape: f32[2,2,128], index: 4, kind: output, shape index: {2}]
  %5 = xla_tuple %s2, %s3, %s4
  %s6 = sld [smem:[#allocation0]]
  $region57: #{tpu_custom_call.1} parent=0
    _
  %s8 = ssub.s32 1, %s6
  %s9 = scalar_select 0, %s8, %s6
  $region1: #{tpu_custom_call.1} parent=0
    #allocation2 [shape = 'u8[65536]{0}', space=vmem, size = 0x10000, scoped, tag = 'output window, operand 0']
    #allocation3 [shape = 's32[2]{0}', space=sflag, size = 0x8, scoped, tag = 'scoped memory for tpu_custom_call.1']
    #allocation4 [shape = 'u8[65536]{0}', space=vmem, size = 0x10000, scoped, tag = 'output window, operand 1']
    #allocation5 [shape = 's32[2]{0}', space=sflag, size = 0x8, scoped, tag = 'scoped memory for tpu_custom_call.1']
    #allocation6 [shape = 'u8[2048]{0}', space=vmem, size = 0x800, scoped, tag = 'output window, operand 2']
    %10 = vsyncpa [#allocation3], 0
    %s11 = scalar_lea.sflag [#allocation3], 1
    %12 = vsyncpa %s11, 0
    %13 = vsyncpa [#allocation5], 0
    %s14 = scalar_lea.sflag [#allocation5], 1
    %15 = vsyncpa %s14, 0
    loop: start=0, step=1, limit=4
    $region2: #{tpu_custom_call.1} parent=1 // loop_pre_header
      _
    $region3: #{tpu_custom_call.1} parent=1 // loop_header
      %s17 = sphi 0, %s21
      %p18 = scmp.ge.s32.totalorder %s17, 4
      %s27 = sphi 0, %s29
      %s30 = sphi 0, %s27
      %s31 = sphi 0, %s30
      %s47 = sphi 0, %s31
      %s51 = sphi 0, %s51
      %s53 = sphi 0, %s51
      %s54 = sphi 0, %s53
      %s68 = sphi 0, %s54
      %s74 = sphi 0, %s76
      %s77 = sphi 0, %s74
      %s78 = sphi 0, %s77
      %s94 = sphi 0, %s78
      %s100 = sphi 0, %s102
      %s103 = sphi 0, %s100
      %s104 = sphi 0, %s103
      %s120 = sphi 0, %s104
      %s126 = sphi 0, %s128
      %s129 = sphi 0, %s126
      %s130 = sphi 0, %s129
      %s146 = sphi 0, %s130
    $region4: #{tpu_custom_call.1} parent=1 // loop_header_branch
      %20 = sbr.rel (%p18) target = $region8
    $region5: #{tpu_custom_call.1} parent=1 // loop_body
      %s22 = ssub.s32 %s17, 1
      %s23 = ssub.s32 %s17, 2
      %s24 = sadd.s32 %s17, 1
      %s25 = ssub.s32 %s17, %s24
      %p26 = scmp.eq.s32.totalorder %s25, 0
      %s28 = sadd.s32 %s27, 1
      %s29 = scalar_select %p26, %s27, %s28
      %p32 = pneg %p26
      %p33 = scmp.eq.s32.totalorder %s17, 1
      %p34 = por %p32, %p33
      %p35 = scmp.ne.s32.totalorder %s27, %s30
      %p36 = scmp.eq.s32.totalorder %s17, 0
      %p37 = por %p35, %p36
      %p38 = scmp.ne.s32.totalorder %s27, %s30
      %p39 = scmp.eq.s32.totalorder %s22, 1
      %p40 = por %p38, %p39
      %p41 = scmp.ne.s32.totalorder %s30, %s31
      %p42 = scmp.eq.s32.totalorder %s22, 0
      %p43 = por %p41, %p42
      %p44 = scmp.ne.s32.totalorder %s30, %s31
      %p45 = scmp.eq.s32.totalorder %s23, 1
      %p46 = por %p44, %p45
      %p48 = scmp.ne.s32.totalorder %s31, %s47
      %p49 = scmp.eq.s32.totalorder %s23, 0
      %p50 = por %p48, %p49
      %s52 = sadd.s32 %s51, 1
      %p55 = scmp.eq.s32.totalorder %s17, 1
      %p56 = scmp.ne.s32.totalorder %s51, %s53
      %p57 = scmp.eq.s32.totalorder %s17, 0
      %p58 = por %p56, %p57
      %p59 = scmp.ne.s32.totalorder %s51, %s53
      %p60 = scmp.eq.s32.totalorder %s22, 1
      %p61 = por %p59, %p60
      %p62 = scmp.ne.s32.totalorder %s53, %s54
      %p63 = scmp.eq.s32.totalorder %s22, 0
      %p64 = por %p62, %p63
      %p65 = scmp.ne.s32.totalorder %s53, %s54
      %p66 = scmp.eq.s32.totalorder %s23, 1
      %p67 = por %p65, %p66
      %p69 = scmp.ne.s32.totalorder %s54, %s68
      %p70 = scmp.eq.s32.totalorder %s23, 0
      %p71 = por %p69, %p70
      %s72 = ssub.s32 %s17, %s24
      %p73 = scmp.eq.s32.totalorder %s72, 0
      %s75 = sadd.s32 %s74, 1
      %s76 = scalar_select %p73, %s74, %s75
      %p79 = pneg %p73
      %p80 = scmp.eq.s32.totalorder %s17, 1
      %p81 = por %p79, %p80
      %p82 = scmp.ne.s32.totalorder %s74, %s77
      %p83 = scmp.eq.s32.totalorder %s17, 0
      %p84 = por %p82, %p83
      %p85 = scmp.ne.s32.totalorder %s74, %s77
      %p86 = scmp.eq.s32.totalorder %s22, 1
      %p87 = por %p85, %p86
      %p88 = scmp.ne.s32.totalorder %s77, %s78
      %p89 = scmp.eq.s32.totalorder %s22, 0
      %p90 = por %p88, %p89
      %p91 = scmp.ne.s32.totalorder %s77, %s78
      %p92 = scmp.eq.s32.totalorder %s23, 1
      %p93 = por %p91, %p92
      %p95 = scmp.ne.s32.totalorder %s78, %s94
      %p96 = scmp.eq.s32.totalorder %s23, 0
      %p97 = por %p95, %p96
      %s98 = ssub.s32 %s17, %s24
      %p99 = scmp.eq.s32.totalorder %s98, 0
      %s101 = sadd.s32 %s100, 1
      %s102 = scalar_select %p99, %s100, %s101
      %p105 = pneg %p99
      %p106 = scmp.eq.s32.totalorder %s17, 1
      %p107 = por %p105, %p106
      %p108 = scmp.ne.s32.totalorder %s100, %s103
      %p109 = scmp.eq.s32.totalorder %s17, 0
      %p110 = por %p108, %p109
      %p111 = scmp.ne.s32.totalorder %s100, %s103
      %p112 = scmp.eq.s32.totalorder %s22, 1
      %p113 = por %p111, %p112
      %p114 = scmp.ne.s32.totalorder %s103, %s104
      %p115 = scmp.eq.s32.totalorder %s22, 0
      %p116 = por %p114, %p115
      %p117 = scmp.ne.s32.totalorder %s103, %s104
      %p118 = scmp.eq.s32.totalorder %s23, 1
      %p119 = por %p117, %p118
      %p121 = scmp.ne.s32.totalorder %s104, %s120
      %p122 = scmp.eq.s32.totalorder %s23, 0
      %p123 = por %p121, %p122
      %s124 = ssub.s32 %s17, %s24
      %p125 = scmp.eq.s32.totalorder %s124, 0
      %s127 = sadd.s32 %s126, 1
      %s128 = scalar_select %p125, %s126, %s127
      %p131 = pneg %p125
      %p132 = scmp.eq.s32.totalorder %s17, 1
      %p133 = por %p131, %p132
      %p134 = scmp.ne.s32.totalorder %s126, %s129
      %p135 = scmp.eq.s32.totalorder %s17, 0
      %p136 = por %p134, %p135
      %p137 = scmp.ne.s32.totalorder %s126, %s129
      %p138 = scmp.eq.s32.totalorder %s22, 1
      %p139 = por %p137, %p138
      %p140 = scmp.ne.s32.totalorder %s129, %s130
      %p141 = scmp.eq.s32.totalorder %s22, 0
      %p142 = por %p140, %p141
      %p143 = scmp.ne.s32.totalorder %s129, %s130
      %p144 = scmp.eq.s32.totalorder %s23, 1
      %p145 = por %p143, %p144
      %p147 = scmp.ne.s32.totalorder %s130, %s146
      %p148 = scmp.eq.s32.totalorder %s23, 0
      %p149 = por %p147, %p148
      %p150 = scmp.le.s32.totalorder 1, %s17
      %p151 = scmp.lt.s32.totalorder %s17, 3
      %p152 = pnand %p150, %p151
      %p153 = pneg %p152
      // Predicated region
      $region9: #{tpu_custom_call.1} parent=5 // pred_check
        _
      $region10: #{tpu_custom_call.1} parent=5 // pred_check_branch
        %155 = sbr.rel (%p152) target = $region12
      $region11: #{tpu_custom_call.1} parent=5 // pred_region
        %s156 = ssub.s32 %s17, 1
        // Predicated region
        $region13: #{tpu_custom_call.1} parent=11 // pred_check
          %p157 = pneg %p64
        $region14: #{tpu_custom_call.1} parent=11 // pred_check_branch
          %159 = sbr.rel (%p157) target = $region16
        $region15: #{tpu_custom_call.1} parent=11 // pred_region
          _
        $region16: #{tpu_custom_call.1} parent=11 // pred_fallthru
          _
      $region12: #{tpu_custom_call.1} parent=5 // pred_fallthru
        _
      %p160 = scmp.lt.s32.totalorder %s17, 2
      // Predicated region
      $region17: #{tpu_custom_call.1} parent=5 // pred_check
        %p161 = pneg %p160
      $region18: #{tpu_custom_call.1} parent=5 // pred_check_branch
        %163 = sbr.rel (%p161) target = $region20
      $region19: #{tpu_custom_call.1} parent=5 // pred_region
        // Predicated region
        $region21: #{tpu_custom_call.1} parent=19 // pred_check
          %p164 = pneg %p37
        $region22: #{tpu_custom_call.1} parent=19 // pred_check_branch
          %166 = sbr.rel (%p164) target = $region24
        $region23: #{tpu_custom_call.1} parent=19 // pred_region
          %p167 = scmp.lt.s32.totalorder %s17, 1
          %s168 = scalar_select %p167, %s17, 1
          %s169 = smul.addr %s168, 54
          %s170 = smul.addr %s169, 4
          %s171 = scalar_lea.vmem %s0, %s170
        $region24: #{tpu_custom_call.1} parent=19 // pred_fallthru
          _
      $region20: #{tpu_custom_call.1} parent=5 // pred_fallthru
        _
      %p172 = scmp.le.s32.totalorder 1, %s17
      %p173 = scmp.lt.s32.totalorder %s17, 3
      %p174 = pnand %p172, %p173
      %p175 = pneg %p174
      // Predicated region
      $region25: #{tpu_custom_call.1} parent=5 // pred_check
        _
      $region26: #{tpu_custom_call.1} parent=5 // pred_check_branch
        %177 = sbr.rel (%p174) target = $region28
      $region27: #{tpu_custom_call.1} parent=5 // pred_region
        %s178 = ssub.s32 %s17, 1
        %p179 = scmp.lt.s32.totalorder %s22, 1
        %s180 = scalar_select %p179, %s22, 1
        %s181 = smul.addr %s180, 54
        %s182 = smul.addr %s181, 4
        %s183 = scalar_lea.vmem %s0, %s182
        %p184 = pneg %p43
        %p185 = pneg %p40
        %p186 = pneg %p64
        %p187 = pneg %p61
        %p188 = pneg %p90
        %p189 = pneg %p87
        %s190 = sand.u32 %s77, 1
        %s191 = scalar_lea.sflag [#allocation3], %s190
        %s192 = sand.u32 %s77, 1
        %s193 = smul.addr %s192, 64
        %s194 = scalar_lea.vmem [#allocation2], %s193
        %p195 = pneg %p116
        %p196 = pneg %p113
        %s197 = sand.u32 %s22, 1
        %s198 = scalar_lea.sflag [#allocation5], %s197
        %s199 = sand.u32 %s103, 1
        %s200 = smul.addr %s199, 64
        %s201 = scalar_lea.vmem [#allocation4], %s200
        %p202 = pneg %p142
        %p203 = pneg %p139
        %s204 = sand.u32 %s22, 1
        %s205 = scalar_lea.sflag [#allocation5], %s204
        %s206 = sand.u32 %s129, 1
        %s207 = smul.addr %s206, 2
        %s208 = scalar_lea.vmem [#allocation6], %s207
        %p209 = scmp.lt.s32.totalorder %s22, 1
        %s210 = scalar_select %p209, %s22, 1
        %s211 = smul.addr %s210, 54
        %s212 = smul.addr %s211, 4
        %s213 = scalar_lea.vmem %s0, %s212
        %v215 = vld [vmem:[%s213] sm:$0xf]
        %v216 = vld [vmem:[%s213 + $0x4] sm:$0xf]
        %v217 = vld [vmem:[%s213 + $0x8] sm:$0x1]
        %v218 = vld [vmem:[%s213 + $0xc] sm:$0xf]
        %v219 = vld [vmem:[%s213 + $0x10] sm:$0xf]
        %v220 = vld [vmem:[%s213 + $0x14] sm:$0x1]
        %v221 = vld [vmem:[%s213 + $0x18] sm:$0xf]
        %v222 = vld [vmem:[%s213 + $0x1c] sm:$0xf]
        %v223 = vld [vmem:[%s213 + $0x20] sm:$0x1]
        %v224 = vld [vmem:[%s213 + $0x24] sm:$0xf]
        %v225 = vld [vmem:[%s213 + $0x28] sm:$0xf]
        %v226 = vld [vmem:[%s213 + $0x2c] sm:$0x1]
        %v227 = vld [vmem:[%s213 + $0x30] sm:$0xf]
        %v228 = vld [vmem:[%s213 + $0x34] sm:$0xf]
        %v229 = vld [vmem:[%s213 + $0x38] sm:$0x1]
        %v230 = vld [vmem:[%s213 + $0x3c] sm:$0xf]
        %v231 = vld [vmem:[%s213 + $0x40] sm:$0xf]
        %v232 = vld [vmem:[%s213 + $0x44] sm:$0x1]
        %v233 = vld [vmem:[%s213 + $0x48] sm:$0xf]
        %v234 = vld [vmem:[%s213 + $0x4c] sm:$0xf]
        %v235 = vld [vmem:[%s213 + $0x50] sm:$0x1]
        %v236 = vld [vmem:[%s213 + $0x54] sm:$0xf]
        %v237 = vld [vmem:[%s213 + $0x58] sm:$0xf]
        %v238 = vld [vmem:[%s213 + $0x5c] sm:$0x1]
        %v239 = vld [vmem:[%s213 + $0x60] sm:$0xf]
        %v240 = vld [vmem:[%s213 + $0x64] sm:$0xf]
        %v241 = vld [vmem:[%s213 + $0x68] sm:$0x1]
        %v242 = vld [vmem:[%s213 + $0x6c] sm:$0xf]
        %v243 = vld [vmem:[%s213 + $0x70] sm:$0xf]
        %v244 = vld [vmem:[%s213 + $0x74] sm:$0x1]
        %v245 = vld [vmem:[%s213 + $0x78] sm:$0xf]
        %v246 = vld [vmem:[%s213 + $0x7c] sm:$0xf]
        %v247 = vld [vmem:[%s213 + $0x80] sm:$0x1]
        %v248 = vld [vmem:[%s213 + $0x84] sm:$0xf]
        %v249 = vld [vmem:[%s213 + $0x88] sm:$0xf]
        %v250 = vld [vmem:[%s213 + $0x8c] sm:$0x1]
        %v251 = vld [vmem:[%s213 + $0x90] sm:$0xf]
        %v252 = vld [vmem:[%s213 + $0x94] sm:$0xf]
        %v253 = vld [vmem:[%s213 + $0x98] sm:$0x1]
        %v254 = vld [vmem:[%s213 + $0x9c] sm:$0xf]
        %v255 = vld [vmem:[%s213 + $0xa0] sm:$0xf]
        %v256 = vld [vmem:[%s213 + $0xa4] sm:$0x1]
        %v257 = vld [vmem:[%s213 + $0xa8] sm:$0xf]
        %v258 = vld [vmem:[%s213 + $0xac] sm:$0xf]
        %v259 = vld [vmem:[%s213 + $0xb0] sm:$0x1]
        %v260 = vld [vmem:[%s213 + $0xb4] sm:$0xf]
        %v261 = vld [vmem:[%s213 + $0xb8] sm:$0xf]
        %v262 = vld [vmem:[%s213 + $0xbc] sm:$0x1]
        %v263 = vld [vmem:[%s213 + $0xc0] sm:$0xf]
        %v264 = vld [vmem:[%s213 + $0xc4] sm:$0xf]
        %v265 = vld [vmem:[%s213 + $0xc8] sm:$0x1]
        %v266 = vld [vmem:[%s213 + $0xcc] sm:$0xf]
        %v267 = vld [vmem:[%s213 + $0xd0] sm:$0xf]
        %v268 = vld [vmem:[%s213 + $0xd4] sm:$0x1]
        %v269 = vld [vmem:[%s1] sm:$0x3]
        %v270 = vld [vmem:[%s1 + $0x2] sm:$0x3]
        %v271 = vld [vmem:[%s1 + $0x4] sm:$0x3]
        %v272 = vld [vmem:[%s1 + $0x6] sm:$0x3]
        %v273 = vld [vmem:[%s1 + $0x8] sm:$0x3]
        %v274 = vld [vmem:[%s1 + $0xa] sm:$0x3]
        %v275 = vld [vmem:[%s1 + $0xc] sm:$0x3]
        %v276 = vld [vmem:[%s1 + $0xe] sm:$0x3]
        %v277 = vld [vmem:[%s1 + $0x10] sm:$0x3]
        %vm278 = vsmask.f32 3328
        %vm279 = vsmask.f32 7440
        %vm280 = vmor %vm278, %vm279
        %v282 = vshrl.u32 %v215, 16
        %v284 = vrot.slane %v282, 4
        %v285 = vshll.u32 %v215, 16
        %v287 = vrot.slane %v285, 5
        %v288 = vor.u32 %v284, %v287
        %v289 = vrot.slane %v288, 4
        %v291 = vshll.u32 %v216, 16
        %v293 = vrot.slane %v291, 5
        %v294 = vsel %vm280, %v289, %v293
        %v295 = vshrl.u32 %v216, 16
        %v297 = vrot.slane %v295, 4
        %v298 = vor.u32 %v297, %v293
        %v299 = vrot.slane %v298, 4
        %v301 = vshll.u32 %v217, 16
        %v303 = vrot.slane %v301, 5
        %v304 = vsel %vm280, %v299, %v303
        %v306 = vshrl.u32 %v218, 16
        %v308 = vrot.slane %v306, 4
        %v309 = vshll.u32 %v218, 16
        %v311 = vrot.slane %v309, 5
        %v312 = vor.u32 %v308, %v311
        %v313 = vrot.slane %v312, 4
        %v315 = vshll.u32 %v219, 16
        %v317 = vrot.slane %v315, 5
        %v318 = vsel %vm280, %v313, %v317
        %v319 = vshrl.u32 %v219, 16
        %v321 = vrot.slane %v319, 4
        %v322 = vor.u32 %v321, %v317
        %v323 = vrot.slane %v322, 4
        %v325 = vshll.u32 %v220, 16
        %v327 = vrot.slane %v325, 5
        %v328 = vsel %vm280, %v323, %v327
        %v330 = vshrl.u32 %v221, 16
        %v332 = vrot.slane %v330, 4
        %v333 = vshll.u32 %v221, 16
        %v335 = vrot.slane %v333, 5
        %v336 = vor.u32 %v332, %v335
        %v337 = vrot.slane %v336, 4
        %v339 = vshll.u32 %v222, 16
        %v341 = vrot.slane %v339, 5
        %v342 = vsel %vm280, %v337, %v341
        %v343 = vshrl.u32 %v222, 16
        %v345 = vrot.slane %v343, 4
        %v346 = vor.u32 %v345, %v341
        %v347 = vrot.slane %v346, 4
        %v349 = vshll.u32 %v223, 16
        %v351 = vrot.slane %v349, 5
        %v352 = vsel %vm280, %v347, %v351
        %v354 = vshrl.u32 %v224, 16
        %v356 = vrot.slane %v354, 4
        %v357 = vshll.u32 %v224, 16
        %v359 = vrot.slane %v357, 5
        %v360 = vor.u32 %v356, %v359
        %v361 = vrot.slane %v360, 4
        %v363 = vshll.u32 %v225, 16
        %v365 = vrot.slane %v363, 5
        %v366 = vsel %vm280, %v361, %v365
        %v367 = vshrl.u32 %v225, 16
        %v369 = vrot.slane %v367, 4
        %v370 = vor.u32 %v369, %v365
        %v371 = vrot.slane %v370, 4
        %v373 = vshll.u32 %v226, 16
        %v375 = vrot.slane %v373, 5
        %v376 = vsel %vm280, %v371, %v375
        %v378 = vshrl.u32 %v227, 16
        %v380 = vrot.slane %v378, 4
        %v381 = vshll.u32 %v227, 16
        %v383 = vrot.slane %v381, 5
        %v384 = vor.u32 %v380, %v383
        %v385 = vrot.slane %v384, 4
        %v387 = vshll.u32 %v228, 16
        %v389 = vrot.slane %v387, 5
        %v390 = vsel %vm280, %v385, %v389
        %v391 = vshrl.u32 %v228, 16
        %v393 = vrot.slane %v391, 4
        %v394 = vor.u32 %v393, %v389
        %v395 = vrot.slane %v394, 4
        %v397 = vshll.u32 %v229, 16
        %v399 = vrot.slane %v397, 5
        %v400 = vsel %vm280, %v395, %v399
        %v402 = vshrl.u32 %v230, 16
        %v404 = vrot.slane %v402, 4
        %v405 = vshll.u32 %v230, 16
        %v407 = vrot.slane %v405, 5
        %v408 = vor.u32 %v404, %v407
        %v409 = vrot.slane %v408, 4
        %v411 = vshll.u32 %v231, 16
        %v413 = vrot.slane %v411, 5
        %v414 = vsel %vm280, %v409, %v413
        %v415 = vshrl.u32 %v231, 16
        %v417 = vrot.slane %v415, 4
        %v418 = vor.u32 %v417, %v413
        %v419 = vrot.slane %v418, 4
        %v421 = vshll.u32 %v232, 16
        %v423 = vrot.slane %v421, 5
        %v424 = vsel %vm280, %v419, %v423
        %v426 = vshrl.u32 %v233, 16
        %v428 = vrot.slane %v426, 4
        %v429 = vshll.u32 %v233, 16
        %v431 = vrot.slane %v429, 5
        %v432 = vor.u32 %v428, %v431
        %v433 = vrot.slane %v432, 4
        %v435 = vshll.u32 %v234, 16
        %v437 = vrot.slane %v435, 5
        %v438 = vsel %vm280, %v433, %v437
        %v439 = vshrl.u32 %v234, 16
        %v441 = vrot.slane %v439, 4
        %v442 = vor.u32 %v441, %v437
        %v443 = vrot.slane %v442, 4
        %v445 = vshll.u32 %v235, 16
        %v447 = vrot.slane %v445, 5
        %v448 = vsel %vm280, %v443, %v447
        %v450 = vshrl.u32 %v236, 16
        %v452 = vrot.slane %v450, 4
        %v453 = vshll.u32 %v236, 16
        %v455 = vrot.slane %v453, 5
        %v456 = vor.u32 %v452, %v455
        %v457 = vrot.slane %v456, 4
        %v459 = vshll.u32 %v237, 16
        %v461 = vrot.slane %v459, 5
        %v462 = vsel %vm280, %v457, %v461
        %v463 = vshrl.u32 %v237, 16
        %v465 = vrot.slane %v463, 4
        %v466 = vor.u32 %v465, %v461
        %v467 = vrot.slane %v466, 4
        %v469 = vshll.u32 %v238, 16
        %v471 = vrot.slane %v469, 5
        %v472 = vsel %vm280, %v467, %v471
        %v474 = vshrl.u32 %v239, 16
        %v476 = vrot.slane %v474, 4
        %v477 = vshll.u32 %v239, 16
        %v479 = vrot.slane %v477, 5
        %v480 = vor.u32 %v476, %v479
        %v481 = vrot.slane %v480, 4
        %v483 = vshll.u32 %v240, 16
        %v485 = vrot.slane %v483, 5
        %v486 = vsel %vm280, %v481, %v485
        %v487 = vshrl.u32 %v240, 16
        %v489 = vrot.slane %v487, 4
        %v490 = vor.u32 %v489, %v485
        %v491 = vrot.slane %v490, 4
        %v493 = vshll.u32 %v241, 16
        %v495 = vrot.slane %v493, 5
        %v496 = vsel %vm280, %v491, %v495
        %v498 = vshrl.u32 %v242, 16
        %v500 = vrot.slane %v498, 4
        %v501 = vshll.u32 %v242, 16
        %v503 = vrot.slane %v501, 5
        %v504 = vor.u32 %v500, %v503
        %v505 = vrot.slane %v504, 4
        %v507 = vshll.u32 %v243, 16
        %v509 = vrot.slane %v507, 5
        %v510 = vsel %vm280, %v505, %v509
        %v511 = vshrl.u32 %v243, 16
        %v513 = vrot.slane %v511, 4
        %v514 = vor.u32 %v513, %v509
        %v515 = vrot.slane %v514, 4
        %v517 = vshll.u32 %v244, 16
        %v519 = vrot.slane %v517, 5
        %v520 = vsel %vm280, %v515, %v519
        %v522 = vshrl.u32 %v245, 16
        %v524 = vrot.slane %v522, 4
        %v525 = vshll.u32 %v245, 16
        %v527 = vrot.slane %v525, 5
        %v528 = vor.u32 %v524, %v527
        %v529 = vrot.slane %v528, 4
        %v531 = vshll.u32 %v246, 16
        %v533 = vrot.slane %v531, 5
        %v534 = vsel %vm280, %v529, %v533
        %v535 = vshrl.u32 %v246, 16
        %v537 = vrot.slane %v535, 4
        %v538 = vor.u32 %v537, %v533
        %v539 = vrot.slane %v538, 4
        %v541 = vshll.u32 %v247, 16
        %v543 = vrot.slane %v541, 5
        %v544 = vsel %vm280, %v539, %v543
        %v546 = vshrl.u32 %v248, 16
        %v548 = vrot.slane %v546, 4
        %v549 = vshll.u32 %v248, 16
        %v551 = vrot.slane %v549, 5
        %v552 = vor.u32 %v548, %v551
        %v553 = vrot.slane %v552, 4
        %v555 = vshll.u32 %v249, 16
        %v557 = vrot.slane %v555, 5
        %v558 = vsel %vm280, %v553, %v557
        %v559 = vshrl.u32 %v249, 16
        %v561 = vrot.slane %v559, 4
        %v562 = vor.u32 %v561, %v557
        %v563 = vrot.slane %v562, 4
        %v565 = vshll.u32 %v250, 16
        %v567 = vrot.slane %v565, 5
        %v568 = vsel %vm280, %v563, %v567
        %v570 = vshrl.u32 %v251, 16
        %v572 = vrot.slane %v570, 4
        %v573 = vshll.u32 %v251, 16
        %v575 = vrot.slane %v573, 5
        %v576 = vor.u32 %v572, %v575
        %v577 = vrot.slane %v576, 4
        %v579 = vshll.u32 %v252, 16
        %v581 = vrot.slane %v579, 5
        %v582 = vsel %vm280, %v577, %v581
        %v583 = vshrl.u32 %v252, 16
        %v585 = vrot.slane %v583, 4
        %v586 = vor.u32 %v585, %v581
        %v587 = vrot.slane %v586, 4
        %v589 = vshll.u32 %v253, 16
        %v591 = vrot.slane %v589, 5
        %v592 = vsel %vm280, %v587, %v591
        %v594 = vshrl.u32 %v254, 16
        %v596 = vrot.slane %v594, 4
        %v597 = vshll.u32 %v254, 16
        %v599 = vrot.slane %v597, 5
        %v600 = vor.u32 %v596, %v599
        %v601 = vrot.slane %v600, 4
        %v603 = vshll.u32 %v255, 16
        %v605 = vrot.slane %v603, 5
        %v606 = vsel %vm280, %v601, %v605
        %v607 = vshrl.u32 %v255, 16
        %v609 = vrot.slane %v607, 4
        %v610 = vor.u32 %v609, %v605
        %v611 = vrot.slane %v610, 4
        %v613 = vshll.u32 %v256, 16
        %v615 = vrot.slane %v613, 5
        %v616 = vsel %vm280, %v611, %v615
        %v618 = vshrl.u32 %v257, 16
        %v620 = vrot.slane %v618, 4
        %v621 = vshll.u32 %v257, 16
        %v623 = vrot.slane %v621, 5
        %v624 = vor.u32 %v620, %v623
        %v625 = vrot.slane %v624, 4
        %v627 = vshll.u32 %v258, 16
        %v629 = vrot.slane %v627, 5
        %v630 = vsel %vm280, %v625, %v629
        %v631 = vshrl.u32 %v258, 16
        %v633 = vrot.slane %v631, 4
        %v634 = vor.u32 %v633, %v629
        %v635 = vrot.slane %v634, 4
        %v637 = vshll.u32 %v259, 16
        %v639 = vrot.slane %v637, 5
        %v640 = vsel %vm280, %v635, %v639
        %v642 = vshrl.u32 %v260, 16
        %v644 = vrot.slane %v642, 4
        %v645 = vshll.u32 %v260, 16
        %v647 = vrot.slane %v645, 5
        %v648 = vor.u32 %v644, %v647
        %v649 = vrot.slane %v648, 4
        %v651 = vshll.u32 %v261, 16
        %v653 = vrot.slane %v651, 5
        %v654 = vsel %vm280, %v649, %v653
        %v655 = vshrl.u32 %v261, 16
        %v657 = vrot.slane %v655, 4
        %v658 = vor.u32 %v657, %v653
        %v659 = vrot.slane %v658, 4
        %v661 = vshll.u32 %v262, 16
        %v663 = vrot.slane %v661, 5
        %v664 = vsel %vm280, %v659, %v663
        %v665 = vunpack.c.l.b16 %v294
        %v666 = vunpack.c.l.b16 %v304
        %v667 = vunpack.c.l.b16 %v318
        %v668 = vunpack.c.l.b16 %v328
        %v669 = vunpack.c.l.b16 %v342
        %v670 = vunpack.c.l.b16 %v352
        %v671 = vunpack.c.l.b16 %v366
        %v672 = vunpack.c.l.b16 %v376
        %v673 = vunpack.c.l.b16 %v390
        %v674 = vunpack.c.l.b16 %v400
        %v675 = vunpack.c.l.b16 %v414
        %v676 = vunpack.c.l.b16 %v424
        %v677 = vunpack.c.l.b16 %v438
        %v678 = vunpack.c.l.b16 %v448
        %v679 = vunpack.c.l.b16 %v462
        %v680 = vunpack.c.l.b16 %v472
        %v681 = vunpack.c.l.b16 %v486
        %v682 = vunpack.c.l.b16 %v496
        %v683 = vunpack.c.l.b16 %v510
        %v684 = vunpack.c.l.b16 %v520
        %v685 = vunpack.c.l.b16 %v534
        %v686 = vunpack.c.l.b16 %v544
        %v687 = vunpack.c.l.b16 %v558
        %v688 = vunpack.c.l.b16 %v568
        %v689 = vunpack.c.l.b16 %v582
        %v690 = vunpack.c.l.b16 %v592
        %v691 = vunpack.c.l.b16 %v606
        %v692 = vunpack.c.l.b16 %v616
        %v693 = vunpack.c.l.b16 %v630
        %v694 = vunpack.c.l.b16 %v640
        %v695 = vunpack.c.l.b16 %v654
        %v696 = vunpack.c.l.b16 %v664
        %v697 = vpack.c.b16 %v666, %v665
        %v698 = vpack.c.b16 %v668, %v667
        %v699 = vpack.c.b16 %v670, %v669
        %v700 = vpack.c.b16 %v672, %v671
        %v701 = vpack.c.b16 %v674, %v673
        %v702 = vpack.c.b16 %v676, %v675
        %v703 = vpack.c.b16 %v678, %v677
        %v704 = vpack.c.b16 %v680, %v679
        %v705 = vpack.c.b16 %v682, %v681
        %v706 = vpack.c.b16 %v684, %v683
        %v707 = vpack.c.b16 %v686, %v685
        %v708 = vpack.c.b16 %v688, %v687
        %v709 = vpack.c.b16 %v690, %v689
        %v710 = vpack.c.b16 %v692, %v691
        %v711 = vpack.c.b16 %v694, %v693
        %v712 = vpack.c.b16 %v696, %v695
        %vm713 = vcmask 31744
        %v715 = vsel %vm713, %v697, 0
        %v718 = vsel %vm713, %v698, 0
        %v721 = vsel %vm713, %v699, 0
        %v724 = vsel %vm713, %v700, 0
        %v727 = vsel %vm713, %v701, 0
        %v730 = vsel %vm713, %v702, 0
        %v733 = vsel %vm713, %v703, 0
        %v736 = vsel %vm713, %v704, 0
        %v739 = vsel %vm713, %v705, 0
        %v742 = vsel %vm713, %v706, 0
        %v745 = vsel %vm713, %v707, 0
        %v748 = vsel %vm713, %v708, 0
        %v751 = vsel %vm713, %v709, 0
        %v754 = vsel %vm713, %v710, 0
        %v757 = vsel %vm713, %v711, 0
        %v760 = vsel %vm713, %v712, 0
        %vm762 = vcmask 1041408
        %v764 = vsel %vm762, %v270, 0
        %766 = vmatprep.subr.bf16.mxu0 0
        %767 = vmatpush1.bf16.msra.mxu0 %v764
        %768 = vmatprep.subr.bf16.mxu0 0
        %769 = vmatpush1.bf16.msra.mxu0 0
        %770 = vmatprep.subr.bf16.mxu0 0
        %771 = vmatpush1.bf16.msra.mxu0 0
        %772 = vmatprep.subr.bf16.mxu0 0
        %773 = vmatpush1.bf16.msra.mxu0 0
        %774 = vmatprep.subr.bf16.mxu0 0
        %775 = vmatpush1.bf16.msra.mxu0 0
        %776 = vmatprep.subr.bf16.mxu0 0
        %777 = vmatpush1.bf16.msra.mxu0 0
        %778 = vmatprep.subr.bf16.mxu0 0
        %779 = vmatpush1.bf16.msra.mxu0 0
        %780 = vmatprep.subr.bf16.mxu0 0
        %781 = vmatpush1.bf16.msra.mxu0 0
        %782 = vmatprep.subr.bf16.mxu0 0
        %783 = vmatpush1.bf16.msra.mxu0 0
        %784 = vmatprep.subr.bf16.mxu0 0
        %785 = vmatpush1.bf16.msra.mxu0 0
        %786 = vmatprep.subr.bf16.mxu0 0
        %787 = vmatpush1.bf16.msra.mxu0 0
        %788 = vmatprep.subr.bf16.mxu0 0
        %789 = vmatpush1.bf16.msra.mxu0 0
        %790 = vmatprep.subr.bf16.mxu0 0
        %791 = vmatpush1.bf16.msra.mxu0 0
        %792 = vmatprep.subr.bf16.mxu0 0
        %793 = vmatpush1.bf16.msra.mxu0 0
        %794 = vmatprep.subr.bf16.mxu0 0
        %795 = vmatpush1.bf16.msra.mxu0 0
        %796 = vmatprep.subr.bf16.mxu0 0
        %797 = vmatpush1.bf16.msra.mxu0 0
        %798 = vmatprep.mubr.bf16.mxu0 0
        %799 = vmatmul.mubr.bf16.gmra.mrb[0].mxu0 %v715
        %v800 = vpop.f32.mrb[0].mxu0
        %v801 = vadd.f32 0.0, %v800
        %v802 = vpop.f32.mrb[0].mxu0
        %v803 = vpop.f32.mrb[0].mxu0
        %v804 = vadd.f32 0.0, %v803
        %v805 = vpop.f32.mrb[0].mxu0
        %806 = vmatprep.mubr.bf16.mxu0 0
        %807 = vmatmul.mubr.bf16.gmra.mrb[0].mxu0 %v718
        %v808 = vpop.f32.mrb[0].mxu0
        %v809 = vadd.f32 0.0, %v808
        %v810 = vpop.f32.mrb[0].mxu0
        %v811 = vpop.f32.mrb[0].mxu0
        %v812 = vadd.f32 0.0, %v811
        %v813 = vpop.f32.mrb[0].mxu0
        %814 = vmatprep.mubr.bf16.mxu0 0
        %815 = vmatmul.mubr.bf16.gmra.mrb[0].mxu0 %v721
        %v816 = vpop.f32.mrb[0].mxu0
        %v817 = vadd.f32 0.0, %v816
        %v818 = vpop.f32.mrb[0].mxu0
        %v819 = vpop.f32.mrb[0].mxu0
        %v820 = vadd.f32 0.0, %v819
        %v821 = vpop.f32.mrb[0].mxu0
        %822 = vmatprep.mubr.bf16.mxu0 0
        %823 = vmatmul.mubr.bf16.gmra.mrb[0].mxu0 %v724
        %v824 = vpop.f32.mrb[0].mxu0
        %v825 = vadd.f32 0.0, %v824
        %v826 = vpop.f32.mrb[0].mxu0
        %v827 = vpop.f32.mrb[0].mxu0
        %v828 = vadd.f32 0.0, %v827
        %v829 = vpop.f32.mrb[0].mxu0
        %830 = vmatprep.mubr.bf16.mxu0 0
        %831 = vmatmul.mubr.bf16.gmra.mrb[0].mxu0 %v727
        %v832 = vpop.f32.mrb[0].mxu0
        %v833 = vadd.f32 0.0, %v832
        %v834 = vpop.f32.mrb[0].mxu0
        %v835 = vpop.f32.mrb[0].mxu0
        %v836 = vadd.f32 0.0, %v835
        %v837 = vpop.f32.mrb[0].mxu0
        %838 = vmatprep.mubr.bf16.mxu0 0
        %839 = vmatmul.mubr.bf16.gmra.mrb[0].mxu0 %v730
        %v840 = vpop.f32.mrb[0].mxu0
        %v841 = vadd.f32 0.0, %v840
        %v842 = vpop.f32.mrb[0].mxu0
        %v843 = vpop.f32.mrb[0].mxu0
        %v844 = vadd.f32 0.0, %v843
        %v845 = vpop.f32.mrb[0].mxu0
        %846 = vmatprep.mubr.bf16.mxu0 0
        %847 = vmatmul.mubr.bf16.gmra.mrb[0].mxu0 %v733
        %v848 = vpop.f32.mrb[0].mxu0
        %v849 = vadd.f32 0.0, %v848
        %v850 = vpop.f32.mrb[0].mxu0
        %v851 = vpop.f32.mrb[0].mxu0
        %v852 = vadd.f32 0.0, %v851
        %v853 = vpop.f32.mrb[0].mxu0
        %854 = vmatprep.mubr.bf16.mxu0 0
        %855 = vmatmul.mubr.bf16.gmra.mrb[0].mxu0 %v736
        %v856 = vpop.f32.mrb[0].mxu0
        %v857 = vadd.f32 0.0, %v856
        %v858 = vpop.f32.mrb[0].mxu0
        %v859 = vpop.f32.mrb[0].mxu0
        %v860 = vadd.f32 0.0, %v859
        %v861 = vpop.f32.mrb[0].mxu0
        %862 = vmatprep.mubr.bf16.mxu0 0
        %863 = vmatmul.mubr.bf16.gmra.mrb[0].mxu0 %v739
        %v864 = vpop.f32.mrb[0].mxu0
        %v865 = vadd.f32 0.0, %v864
        %v866 = vpop.f32.mrb[0].mxu0
        %v867 = vpop.f32.mrb[0].mxu0
        %v868 = vadd.f32 0.0, %v867
        %v869 = vpop.f32.mrb[0].mxu0
        %870 = vmatprep.mubr.bf16.mxu0 0
        %871 = vmatmul.mubr.bf16.gmra.mrb[0].mxu0 %v742
        %v872 = vpop.f32.mrb[0].mxu0
        %v873 = vadd.f32 0.0, %v872
        %v874 = vpop.f32.mrb[0].mxu0
        %v875 = vpop.f32.mrb[0].mxu0
        %v876 = vadd.f32 0.0, %v875
        %v877 = vpop.f32.mrb[0].mxu0
        %878 = vmatprep.mubr.bf16.mxu0 0
        %879 = vmatmul.mubr.bf16.gmra.mrb[0].mxu0 %v745
        %v880 = vpop.f32.mrb[0].mxu0
        %v881 = vadd.f32 0.0, %v880
        %v882 = vpop.f32.mrb[0].mxu0
        %v883 = vpop.f32.mrb[0].mxu0
        %v884 = vadd.f32 0.0, %v883
        %v885 = vpop.f32.mrb[0].mxu0
        %886 = vmatprep.mubr.bf16.mxu0 0
        %887 = vmatmul.mubr.bf16.gmra.mrb[0].mxu0 %v748
        %v888 = vpop.f32.mrb[0].mxu0
        %v889 = vadd.f32 0.0, %v888
        %v890 = vpop.f32.mrb[0].mxu0
        %v891 = vpop.f32.mrb[0].mxu0
        %v892 = vadd.f32 0.0, %v891
        %v893 = vpop.f32.mrb[0].mxu0
        %894 = vmatprep.mubr.bf16.mxu0 0
        %895 = vmatmul.mubr.bf16.gmra.mrb[0].mxu0 %v751
        %v896 = vpop.f32.mrb[0].mxu0
        %v897 = vadd.f32 0.0, %v896
        %v898 = vpop.f32.mrb[0].mxu0
        %v899 = vpop.f32.mrb[0].mxu0
        %v900 = vadd.f32 0.0, %v899
        %v901 = vpop.f32.mrb[0].mxu0
        %902 = vmatprep.mubr.bf16.mxu0 0
        %903 = vmatmul.mubr.bf16.gmra.mrb[0].mxu0 %v754
        %v904 = vpop.f32.mrb[0].mxu0
        %v905 = vadd.f32 0.0, %v904
        %v906 = vpop.f32.mrb[0].mxu0
        %v907 = vpop.f32.mrb[0].mxu0
        %v908 = vadd.f32 0.0, %v907
        %v909 = vpop.f32.mrb[0].mxu0
        %910 = vmatprep.mubr.bf16.mxu0 0
        %911 = vmatmul.mubr.bf16.gmra.mrb[0].mxu0 %v757
        %v912 = vpop.f32.mrb[0].mxu0
        %v913 = vadd.f32 0.0, %v912
        %v914 = vpop.f32.mrb[0].mxu0
        %v915 = vpop.f32.mrb[0].mxu0
        %v916 = vadd.f32 0.0, %v915
        %v917 = vpop.f32.mrb[0].mxu0
        %918 = vmatprep.mubr.bf16.mxu0 0
        %919 = vmatmul.mubr.bf16.gmra.mrb[0].mxu0 %v760
        %v920 = vpop.f32.mrb[0].mxu0
        %v921 = vadd.f32 0.0, %v920
        %v922 = vpop.f32.mrb[0].mxu0
        %v923 = vpop.f32.mrb[0].mxu0
        %v924 = vadd.f32 0.0, %v923
        %v925 = vpop.f32.mrb[0].mxu0
        %926 = vdwg.mxu0
        %v959 = vunpack.c.l.b16 %v215
        %v960 = vunpack.c.l.b16 %v216
        %v961 = vunpack.c.l.b16 %v218
        %v962 = vunpack.c.l.b16 %v219
        %v963 = vunpack.c.l.b16 %v221
        %v964 = vunpack.c.l.b16 %v222
        %v965 = vunpack.c.l.b16 %v224
        %v966 = vunpack.c.l.b16 %v225
        %v967 = vunpack.c.l.b16 %v227
        %v968 = vunpack.c.l.b16 %v228
        %v969 = vunpack.c.l.b16 %v230
        %v970 = vunpack.c.l.b16 %v231
        %v971 = vunpack.c.l.b16 %v233
        %v972 = vunpack.c.l.b16 %v234
        %v973 = vunpack.c.l.b16 %v236
        %v974 = vunpack.c.l.b16 %v237
        %v975 = vunpack.c.l.b16 %v239
        %v976 = vunpack.c.l.b16 %v240
        %v977 = vunpack.c.l.b16 %v242
        %v978 = vunpack.c.l.b16 %v243
        %v979 = vunpack.c.l.b16 %v245
        %v980 = vunpack.c.l.b16 %v246
        %v981 = vunpack.c.l.b16 %v248
        %v982 = vunpack.c.l.b16 %v249
        %v983 = vunpack.c.l.b16 %v251
        %v984 = vunpack.c.l.b16 %v252
        %v985 = vunpack.c.l.b16 %v254
        %v986 = vunpack.c.l.b16 %v255
        %v987 = vunpack.c.l.b16 %v257
        %v988 = vunpack.c.l.b16 %v258
        %v989 = vunpack.c.l.b16 %v260
        %v990 = vunpack.c.l.b16 %v261
        %v991 = vpack.c.b16 %v960, %v959
        %v992 = vpack.c.b16 %v962, %v961
        %v993 = vpack.c.b16 %v964, %v963
        %v994 = vpack.c.b16 %v966, %v965
        %v995 = vpack.c.b16 %v968, %v967
        %v996 = vpack.c.b16 %v970, %v969
        %v997 = vpack.c.b16 %v972, %v971
        %v998 = vpack.c.b16 %v974, %v973
        %v999 = vpack.c.b16 %v976, %v975
        %v1000 = vpack.c.b16 %v978, %v977
        %v1001 = vpack.c.b16 %v980, %v979
        %v1002 = vpack.c.b16 %v982, %v981
        %v1003 = vpack.c.b16 %v984, %v983
        %v1004 = vpack.c.b16 %v986, %v985
        %v1005 = vpack.c.b16 %v988, %v987
        %v1006 = vpack.c.b16 %v990, %v989
        %v1008 = vsel %vm713, %v991, 0
        %v1011 = vsel %vm713, %v992, 0
        %v1014 = vsel %vm713, %v993, 0
        %v1017 = vsel %vm713, %v994, 0
        %v1020 = vsel %vm713, %v995, 0
        %v1023 = vsel %vm713, %v996, 0
        %v1026 = vsel %vm713, %v997, 0
        %v1029 = vsel %vm713, %v998, 0
        %v1032 = vsel %vm713, %v999, 0
        %v1035 = vsel %vm713, %v1000, 0
        %v1038 = vsel %vm713, %v1001, 0
        %v1041 = vsel %vm713, %v1002, 0
        %v1044 = vsel %vm713, %v1003, 0
        %v1047 = vsel %vm713, %v1004, 0
        %v1050 = vsel %vm713, %v1005, 0
        %v1053 = vsel %vm713, %v1006, 0
        %v1056 = vsel %vm762, %v269, 0
        %1058 = vmatprep.subr.bf16.mxu0 0
        %1059 = vmatpush1.bf16.msra.mxu0 %v1056
        %1060 = vmatprep.subr.bf16.mxu0 0
        %1061 = vmatpush1.bf16.msra.mxu0 0
        %1062 = vmatprep.subr.bf16.mxu0 0
        %1063 = vmatpush1.bf16.msra.mxu0 0
        %1064 = vmatprep.subr.bf16.mxu0 0
        %1065 = vmatpush1.bf16.msra.mxu0 0
        %1066 = vmatprep.subr.bf16.mxu0 0
        %1067 = vmatpush1.bf16.msra.mxu0 0
        %1068 = vmatprep.subr.bf16.mxu0 0
        %1069 = vmatpush1.bf16.msra.mxu0 0
        %1070 = vmatprep.subr.bf16.mxu0 0
        %1071 = vmatpush1.bf16.msra.mxu0 0
        %1072 = vmatprep.subr.bf16.mxu0 0
        %1073 = vmatpush1.bf16.msra.mxu0 0
        %1074 = vmatprep.subr.bf16.mxu0 0
        %1075 = vmatpush1.bf16.msra.mxu0 0
        %1076 = vmatprep.subr.bf16.mxu0 0
        %1077 = vmatpush1.bf16.msra.mxu0 0
        %1078 = vmatprep.subr.bf16.mxu0 0
        %1079 = vmatpush1.bf16.msra.mxu0 0
        %1080 = vmatprep.subr.bf16.mxu0 0
        %1081 = vmatpush1.bf16.msra.mxu0 0
        %1082 = vmatprep.subr.bf16.mxu0 0
        %1083 = vmatpush1.bf16.msra.mxu0 0
        %1084 = vmatprep.subr.bf16.mxu0 0
        %1085 = vmatpush1.bf16.msra.mxu0 0
        %1086 = vmatprep.subr.bf16.mxu0 0
        %1087 = vmatpush1.bf16.msra.mxu0 0
        %1088 = vmatprep.subr.bf16.mxu0 0
        %1089 = vmatpush1.bf16.msra.mxu0 0
        %1090 = vmatprep.mubr.bf16.mxu0 0
        %1091 = vmatmul.mubr.bf16.gmra.mrb[0].mxu0 %v1008
        %v1092 = vpop.f32.mrb[0].mxu0
        %v1093 = vadd.f32 %v801, %v1092
        %v1094 = vpop.f32.mrb[0].mxu0
        %v1095 = vpop.f32.mrb[0].mxu0
        %v1096 = vadd.f32 %v804, %v1095
        %v1097 = vpop.f32.mrb[0].mxu0
        %1098 = vmatprep.mubr.bf16.mxu0 0
        %1099 = vmatmul.mubr.bf16.gmra.mrb[0].mxu0 %v1011
        %v1100 = vpop.f32.mrb[0].mxu0
        %v1101 = vadd.f32 %v809, %v1100
        %v1102 = vpop.f32.mrb[0].mxu0
        %v1103 = vpop.f32.mrb[0].mxu0
        %v1104 = vadd.f32 %v812, %v1103
        %v1105 = vpop.f32.mrb[0].mxu0
        %1106 = vmatprep.mubr.bf16.mxu0 0
        %1107 = vmatmul.mubr.bf16.gmra.mrb[0].mxu0 %v1014
        %v1108 = vpop.f32.mrb[0].mxu0
        %v1109 = vadd.f32 %v817, %v1108
        %v1110 = vpop.f32.mrb[0].mxu0
        %v1111 = vpop.f32.mrb[0].mxu0
        %v1112 = vadd.f32 %v820, %v1111
        %v1113 = vpop.f32.mrb[0].mxu0
        %1114 = vmatprep.mubr.bf16.mxu0 0
        %1115 = vmatmul.mubr.bf16.gmra.mrb[0].mxu0 %v1017
        %v1116 = vpop.f32.mrb[0].mxu0
        %v1117 = vadd.f32 %v825, %v1116
        %v1118 = vpop.f32.mrb[0].mxu0
        %v1119 = vpop.f32.mrb[0].mxu0
        %v1120 = vadd.f32 %v828, %v1119
        %v1121 = vpop.f32.mrb[0].mxu0
        %1122 = vmatprep.mubr.bf16.mxu0 0
        %1123 = vmatmul.mubr.bf16.gmra.mrb[0].mxu0 %v1020
        %v1124 = vpop.f32.mrb[0].mxu0
        %v1125 = vadd.f32 %v833, %v1124
        %v1126 = vpop.f32.mrb[0].mxu0
        %v1127 = vpop.f32.mrb[0].mxu0
        %v1128 = vadd.f32 %v836, %v1127
        %v1129 = vpop.f32.mrb[0].mxu0
        %1130 = vmatprep.mubr.bf16.mxu0 0
        %1131 = vmatmul.mubr.bf16.gmra.mrb[0].mxu0 %v1023
        %v1132 = vpop.f32.mrb[0].mxu0
        %v1133 = vadd.f32 %v841, %v1132
        %v1134 = vpop.f32.mrb[0].mxu0
        %v1135 = vpop.f32.mrb[0].mxu0
        %v1136 = vadd.f32 %v844, %v1135
        %v1137 = vpop.f32.mrb[0].mxu0
        %1138 = vmatprep.mubr.bf16.mxu0 0
        %1139 = vmatmul.mubr.bf16.gmra.mrb[0].mxu0 %v1026
        %v1140 = vpop.f32.mrb[0].mxu0
        %v1141 = vadd.f32 %v849, %v1140
        %v1142 = vpop.f32.mrb[0].mxu0
        %v1143 = vpop.f32.mrb[0].mxu0
        %v1144 = vadd.f32 %v852, %v1143
        %v1145 = vpop.f32.mrb[0].mxu0
        %1146 = vmatprep.mubr.bf16.mxu0 0
        %1147 = vmatmul.mubr.bf16.gmra.mrb[0].mxu0 %v1029
        %v1148 = vpop.f32.mrb[0].mxu0
        %v1149 = vadd.f32 %v857, %v1148
        %v1150 = vpop.f32.mrb[0].mxu0
        %v1151 = vpop.f32.mrb[0].mxu0
        %v1152 = vadd.f32 %v860, %v1151
        %v1153 = vpop.f32.mrb[0].mxu0
        %1154 = vmatprep.mubr.bf16.mxu0 0
        %1155 = vmatmul.mubr.bf16.gmra.mrb[0].mxu0 %v1032
        %v1156 = vpop.f32.mrb[0].mxu0
        %v1157 = vadd.f32 %v865, %v1156
        %v1158 = vpop.f32.mrb[0].mxu0
        %v1159 = vpop.f32.mrb[0].mxu0
        %v1160 = vadd.f32 %v868, %v1159
        %v1161 = vpop.f32.mrb[0].mxu0
        %1162 = vmatprep.mubr.bf16.mxu0 0
        %1163 = vmatmul.mubr.bf16.gmra.mrb[0].mxu0 %v1035
        %v1164 = vpop.f32.mrb[0].mxu0
        %v1165 = vadd.f32 %v873, %v1164
        %v1166 = vpop.f32.mrb[0].mxu0
        %v1167 = vpop.f32.mrb[0].mxu0
        %v1168 = vadd.f32 %v876, %v1167
        %v1169 = vpop.f32.mrb[0].mxu0
        %1170 = vmatprep.mubr.bf16.mxu0 0
        %1171 = vmatmul.mubr.bf16.gmra.mrb[0].mxu0 %v1038
        %v1172 = vpop.f32.mrb[0].mxu0
        %v1173 = vadd.f32 %v881, %v1172
        %v1174 = vpop.f32.mrb[0].mxu0
        %v1175 = vpop.f32.mrb[0].mxu0
        %v1176 = vadd.f32 %v884, %v1175
        %v1177 = vpop.f32.mrb[0].mxu0
        %1178 = vmatprep.mubr.bf16.mxu0 0
        %1179 = vmatmul.mubr.bf16.gmra.mrb[0].mxu0 %v1041
        %v1180 = vpop.f32.mrb[0].mxu0
        %v1181 = vadd.f32 %v889, %v1180
        %v1182 = vpop.f32.mrb[0].mxu0
        %v1183 = vpop.f32.mrb[0].mxu0
        %v1184 = vadd.f32 %v892, %v1183
        %v1185 = vpop.f32.mrb[0].mxu0
        %1186 = vmatprep.mubr.bf16.mxu0 0
        %1187 = vmatmul.mubr.bf16.gmra.mrb[0].mxu0 %v1044
        %v1188 = vpop.f32.mrb[0].mxu0
        %v1189 = vadd.f32 %v897, %v1188
        %v1190 = vpop.f32.mrb[0].mxu0
        %v1191 = vpop.f32.mrb[0].mxu0
        %v1192 = vadd.f32 %v900, %v1191
        %v1193 = vpop.f32.mrb[0].mxu0
        %1194 = vmatprep.mubr.bf16.mxu0 0
        %1195 = vmatmul.mubr.bf16.gmra.mrb[0].mxu0 %v1047
        %v1196 = vpop.f32.mrb[0].mxu0
        %v1197 = vadd.f32 %v905, %v1196
        %v1198 = vpop.f32.mrb[0].mxu0
        %v1199 = vpop.f32.mrb[0].mxu0
        %v1200 = vadd.f32 %v908, %v1199
        %v1201 = vpop.f32.mrb[0].mxu0
        %1202 = vmatprep.mubr.bf16.mxu0 0
        %1203 = vmatmul.mubr.bf16.gmra.mrb[0].mxu0 %v1050
        %v1204 = vpop.f32.mrb[0].mxu0
        %v1205 = vadd.f32 %v913, %v1204
        %v1206 = vpop.f32.mrb[0].mxu0
        %v1207 = vpop.f32.mrb[0].mxu0
        %v1208 = vadd.f32 %v916, %v1207
        %v1209 = vpop.f32.mrb[0].mxu0
        %1210 = vmatprep.mubr.bf16.mxu0 0
        %1211 = vmatmul.mubr.bf16.gmra.mrb[0].mxu0 %v1053
        %v1212 = vpop.f32.mrb[0].mxu0
        %v1213 = vadd.f32 %v921, %v1212
        %v1214 = vpop.f32.mrb[0].mxu0
        %v1215 = vpop.f32.mrb[0].mxu0
        %v1216 = vadd.f32 %v924, %v1215
        %v1217 = vpop.f32.mrb[0].mxu0
        %1218 = vdwg.mxu0
        %vm1235 = vcmask 1042432
        %vm1236 = vcmask 1046532
        %vm1237 = vmor %vm1235, %vm1236
        %v1238 = vrot.slane %v215, 5
        %v1239 = vrot.slane %v1238, 4
        %v1240 = vrot.slane %v216, 5
        %v1241 = vsel %vm1237, %v1239, %v1240
        %v1242 = vrot.slane %v1240, 4
        %v1243 = vrot.slane %v217, 5
        %v1244 = vsel %vm1237, %v1242, %v1243
        %v1245 = vrot.slane %v218, 5
        %v1246 = vrot.slane %v1245, 4
        %v1247 = vrot.slane %v219, 5
        %v1248 = vsel %vm1237, %v1246, %v1247
        %v1249 = vrot.slane %v1247, 4
        %v1250 = vrot.slane %v220, 5
        %v1251 = vsel %vm1237, %v1249, %v1250
        %v1252 = vrot.slane %v221, 5
        %v1253 = vrot.slane %v1252, 4
        %v1254 = vrot.slane %v222, 5
        %v1255 = vsel %vm1237, %v1253, %v1254
        %v1256 = vrot.slane %v1254, 4
        %v1257 = vrot.slane %v223, 5
        %v1258 = vsel %vm1237, %v1256, %v1257
        %v1259 = vrot.slane %v224, 5
        %v1260 = vrot.slane %v1259, 4
        %v1261 = vrot.slane %v225, 5
        %v1262 = vsel %vm1237, %v1260, %v1261
        %v1263 = vrot.slane %v1261, 4
        %v1264 = vrot.slane %v226, 5
        %v1265 = vsel %vm1237, %v1263, %v1264
        %v1266 = vrot.slane %v227, 5
        %v1267 = vrot.slane %v1266, 4
        %v1268 = vrot.slane %v228, 5
        %v1269 = vsel %vm1237, %v1267, %v1268
        %v1270 = vrot.slane %v1268, 4
        %v1271 = vrot.slane %v229, 5
        %v1272 = vsel %vm1237, %v1270, %v1271
        %v1273 = vrot.slane %v230, 5
        %v1274 = vrot.slane %v1273, 4
        %v1275 = vrot.slane %v231, 5
        %v1276 = vsel %vm1237, %v1274, %v1275
        %v1277 = vrot.slane %v1275, 4
        %v1278 = vrot.slane %v232, 5
        %v1279 = vsel %vm1237, %v1277, %v1278
        %v1280 = vrot.slane %v233, 5
        %v1281 = vrot.slane %v1280, 4
        %v1282 = vrot.slane %v234, 5
        %v1283 = vsel %vm1237, %v1281, %v1282
        %v1284 = vrot.slane %v1282, 4
        %v1285 = vrot.slane %v235, 5
        %v1286 = vsel %vm1237, %v1284, %v1285
        %v1287 = vrot.slane %v236, 5
        %v1288 = vrot.slane %v1287, 4
        %v1289 = vrot.slane %v237, 5
        %v1290 = vsel %vm1237, %v1288, %v1289
        %v1291 = vrot.slane %v1289, 4
        %v1292 = vrot.slane %v238, 5
        %v1293 = vsel %vm1237, %v1291, %v1292
        %v1294 = vrot.slane %v239, 5
        %v1295 = vrot.slane %v1294, 4
        %v1296 = vrot.slane %v240, 5
        %v1297 = vsel %vm1237, %v1295, %v1296
        %v1298 = vrot.slane %v1296, 4
        %v1299 = vrot.slane %v241, 5
        %v1300 = vsel %vm1237, %v1298, %v1299
        %v1301 = vrot.slane %v242, 5
        %v1302 = vrot.slane %v1301, 4
        %v1303 = vrot.slane %v243, 5
        %v1304 = vsel %vm1237, %v1302, %v1303
        %v1305 = vrot.slane %v1303, 4
        %v1306 = vrot.slane %v244, 5
        %v1307 = vsel %vm1237, %v1305, %v1306
        %v1308 = vrot.slane %v245, 5
        %v1309 = vrot.slane %v1308, 4
        %v1310 = vrot.slane %v246, 5
        %v1311 = vsel %vm1237, %v1309, %v1310
        %v1312 = vrot.slane %v1310, 4
        %v1313 = vrot.slane %v247, 5
        %v1314 = vsel %vm1237, %v1312, %v1313
        %v1315 = vrot.slane %v248, 5
        %v1316 = vrot.slane %v1315, 4
        %v1317 = vrot.slane %v249, 5
        %v1318 = vsel %vm1237, %v1316, %v1317
        %v1319 = vrot.slane %v1317, 4
        %v1320 = vrot.slane %v250, 5
        %v1321 = vsel %vm1237, %v1319, %v1320
        %v1322 = vrot.slane %v251, 5
        %v1323 = vrot.slane %v1322, 4
        %v1324 = vrot.slane %v252, 5
        %v1325 = vsel %vm1237, %v1323, %v1324
        %v1326 = vrot.slane %v1324, 4
        %v1327 = vrot.slane %v253, 5
        %v1328 = vsel %vm1237, %v1326, %v1327
        %v1329 = vrot.slane %v254, 5
        %v1330 = vrot.slane %v1329, 4
        %v1331 = vrot.slane %v255, 5
        %v1332 = vsel %vm1237, %v1330, %v1331
        %v1333 = vrot.slane %v1331, 4
        %v1334 = vrot.slane %v256, 5
        %v1335 = vsel %vm1237, %v1333, %v1334
        %v1336 = vrot.slane %v257, 5
        %v1337 = vrot.slane %v1336, 4
        %v1338 = vrot.slane %v258, 5
        %v1339 = vsel %vm1237, %v1337, %v1338
        %v1340 = vrot.slane %v1338, 4
        %v1341 = vrot.slane %v259, 5
        %v1342 = vsel %vm1237, %v1340, %v1341
        %v1343 = vrot.slane %v260, 5
        %v1344 = vrot.slane %v1343, 4
        %v1345 = vrot.slane %v261, 5
        %v1346 = vsel %vm1237, %v1344, %v1345
        %v1347 = vrot.slane %v1345, 4
        %v1348 = vrot.slane %v262, 5
        %v1349 = vsel %vm1237, %v1347, %v1348
        %v1350 = vunpack.c.l.b16 %v1241
        %v1351 = vunpack.c.l.b16 %v1244
        %v1352 = vunpack.c.l.b16 %v1248
        %v1353 = vunpack.c.l.b16 %v1251
        %v1354 = vunpack.c.l.b16 %v1255
        %v1355 = vunpack.c.l.b16 %v1258
        %v1356 = vunpack.c.l.b16 %v1262
        %v1357 = vunpack.c.l.b16 %v1265
        %v1358 = vunpack.c.l.b16 %v1269
        %v1359 = vunpack.c.l.b16 %v1272
        %v1360 = vunpack.c.l.b16 %v1276
        %v1361 = vunpack.c.l.b16 %v1279
        %v1362 = vunpack.c.l.b16 %v1283
        %v1363 = vunpack.c.l.b16 %v1286
        %v1364 = vunpack.c.l.b16 %v1290
        %v1365 = vunpack.c.l.b16 %v1293
        %v1366 = vunpack.c.l.b16 %v1297
        %v1367 = vunpack.c.l.b16 %v1300
        %v1368 = vunpack.c.l.b16 %v1304
        %v1369 = vunpack.c.l.b16 %v1307
        %v1370 = vunpack.c.l.b16 %v1311
        %v1371 = vunpack.c.l.b16 %v1314
        %v1372 = vunpack.c.l.b16 %v1318
        %v1373 = vunpack.c.l.b16 %v1321
        %v1374 = vunpack.c.l.b16 %v1325
        %v1375 = vunpack.c.l.b16 %v1328
        %v1376 = vunpack.c.l.b16 %v1332
        %v1377 = vunpack.c.l.b16 %v1335
        %v1378 = vunpack.c.l.b16 %v1339
        %v1379 = vunpack.c.l.b16 %v1342
        %v1380 = vunpack.c.l.b16 %v1346
        %v1381 = vunpack.c.l.b16 %v1349
        %v1382 = vpack.c.b16 %v1351, %v1350
        %v1383 = vpack.c.b16 %v1353, %v1352
        %v1384 = vpack.c.b16 %v1355, %v1354
        %v1385 = vpack.c.b16 %v1357, %v1356
        %v1386 = vpack.c.b16 %v1359, %v1358
        %v1387 = vpack.c.b16 %v1361, %v1360
        %v1388 = vpack.c.b16 %v1363, %v1362
        %v1389 = vpack.c.b16 %v1365, %v1364
        %v1390 = vpack.c.b16 %v1367, %v1366
        %v1391 = vpack.c.b16 %v1369, %v1368
        %v1392 = vpack.c.b16 %v1371, %v1370
        %v1393 = vpack.c.b16 %v1373, %v1372
        %v1394 = vpack.c.b16 %v1375, %v1374
        %v1395 = vpack.c.b16 %v1377, %v1376
        %v1396 = vpack.c.b16 %v1379, %v1378
        %v1397 = vpack.c.b16 %v1381, %v1380
        %v1399 = vsel %vm713, %v1382, 0
        %v1402 = vsel %vm713, %v1383, 0
        %v1405 = vsel %vm713, %v1384, 0
        %v1408 = vsel %vm713, %v1385, 0
        %v1411 = vsel %vm713, %v1386, 0
        %v1414 = vsel %vm713, %v1387, 0
        %v1417 = vsel %vm713, %v1388, 0
        %v1420 = vsel %vm713, %v1389, 0
        %v1423 = vsel %vm713, %v1390, 0
        %v1426 = vsel %vm713, %v1391, 0
        %v1429 = vsel %vm713, %v1392, 0
        %v1432 = vsel %vm713, %v1393, 0
        %v1435 = vsel %vm713, %v1394, 0
        %v1438 = vsel %vm713, %v1395, 0
        %v1441 = vsel %vm713, %v1396, 0
        %v1444 = vsel %vm713, %v1397, 0
        %v1447 = vsel %vm762, %v271, 0
        %1449 = vmatprep.subr.bf16.mxu0 0
        %1450 = vmatpush1.bf16.msra.mxu0 %v1447
        %1451 = vmatprep.subr.bf16.mxu0 0
        %1452 = vmatpush1.bf16.msra.mxu0 0
        %1453 = vmatprep.subr.bf16.mxu0 0
        %1454 = vmatpush1.bf16.msra.mxu0 0
        %1455 = vmatprep.subr.bf16.mxu0 0
        %1456 = vmatpush1.bf16.msra.mxu0 0
        %1457 = vmatprep.subr.bf16.mxu0 0
        %1458 = vmatpush1.bf16.msra.mxu0 0
        %1459 = vmatprep.subr.bf16.mxu0 0
        %1460 = vmatpush1.bf16.msra.mxu0 0
        %1461 = vmatprep.subr.bf16.mxu0 0
        %1462 = vmatpush1.bf16.msra.mxu0 0
        %1463 = vmatprep.subr.bf16.mxu0 0
        %1464 = vmatpush1.bf16.msra.mxu0 0
        %1465 = vmatprep.subr.bf16.mxu0 0
        %1466 = vmatpush1.bf16.msra.mxu0 0
        %1467 = vmatprep.subr.bf16.mxu0 0
        %1468 = vmatpush1.bf16.msra.mxu0 0
        %1469 = vmatprep.subr.bf16.mxu0 0
        %1470 = vmatpush1.bf16.msra.mxu0 0
        %1471 = vmatprep.subr.bf16.mxu0 0
        %1472 = vmatpush1.bf16.msra.mxu0 0
        %1473 = vmatprep.subr.bf16.mxu0 0
        %1474 = vmatpush1.bf16.msra.mxu0 0
        %1475 = vmatprep.subr.bf16.mxu0 0
        %1476 = vmatpush1.bf16.msra.mxu0 0
        %1477 = vmatprep.subr.bf16.mxu0 0
        %1478 = vmatpush1.bf16.msra.mxu0 0
        %1479 = vmatprep.subr.bf16.mxu0 0
        %1480 = vmatpush1.bf16.msra.mxu0 0
        %1481 = vmatprep.mubr.bf16.mxu0 0
        %1482 = vmatmul.mubr.bf16.gmra.mrb[0].mxu0 %v1399
        %v1483 = vpop.f32.mrb[0].mxu0
        %v1484 = vadd.f32 0.0, %v1483
        %v1485 = vpop.f32.mrb[0].mxu0
        %v1486 = vpop.f32.mrb[0].mxu0
        %v1487 = vadd.f32 0.0, %v1486
        %v1488 = vpop.f32.mrb[0].mxu0
        %1489 = vmatprep.mubr.bf16.mxu0 0
        %1490 = vmatmul.mubr.bf16.gmra.mrb[0].mxu0 %v1402
        %v1491 = vpop.f32.mrb[0].mxu0
        %v1492 = vadd.f32 0.0, %v1491
        %v1493 = vpop.f32.mrb[0].mxu0
        %v1494 = vpop.f32.mrb[0].mxu0
        %v1495 = vadd.f32 0.0, %v1494
        %v1496 = vpop.f32.mrb[0].mxu0
        %1497 = vmatprep.mubr.bf16.mxu0 0
        %1498 = vmatmul.mubr.bf16.gmra.mrb[0].mxu0 %v1405
        %v1499 = vpop.f32.mrb[0].mxu0
        %v1500 = vadd.f32 0.0, %v1499
        %v1501 = vpop.f32.mrb[0].mxu0
        %v1502 = vpop.f32.mrb[0].mxu0
        %v1503 = vadd.f32 0.0, %v1502
        %v1504 = vpop.f32.mrb[0].mxu0
        %1505 = vmatprep.mubr.bf16.mxu0 0
        %1506 = vmatmul.mubr.bf16.gmra.mrb[0].mxu0 %v1408
        %v1507 = vpop.f32.mrb[0].mxu0
        %v1508 = vadd.f32 0.0, %v1507
        %v1509 = vpop.f32.mrb[0].mxu0
        %v1510 = vpop.f32.mrb[0].mxu0
        %v1511 = vadd.f32 0.0, %v1510
        %v1512 = vpop.f32.mrb[0].mxu0
        %1513 = vmatprep.mubr.bf16.mxu0 0
        %1514 = vmatmul.mubr.bf16.gmra.mrb[0].mxu0 %v1411
        %v1515 = vpop.f32.mrb[0].mxu0
        %v1516 = vadd.f32 0.0, %v1515
        %v1517 = vpop.f32.mrb[0].mxu0
        %v1518 = vpop.f32.mrb[0].mxu0
        %v1519 = vadd.f32 0.0, %v1518
        %v1520 = vpop.f32.mrb[0].mxu0
        %1521 = vmatprep.mubr.bf16.mxu0 0
        %1522 = vmatmul.mubr.bf16.gmra.mrb[0].mxu0 %v1414
        %v1523 = vpop.f32.mrb[0].mxu0
        %v1524 = vadd.f32 0.0, %v1523
        %v1525 = vpop.f32.mrb[0].mxu0
        %v1526 = vpop.f32.mrb[0].mxu0
        %v1527 = vadd.f32 0.0, %v1526
        %v1528 = vpop.f32.mrb[0].mxu0
        %1529 = vmatprep.mubr.bf16.mxu0 0
        %1530 = vmatmul.mubr.bf16.gmra.mrb[0].mxu0 %v1417
        %v1531 = vpop.f32.mrb[0].mxu0
        %v1532 = vadd.f32 0.0, %v1531
        %v1533 = vpop.f32.mrb[0].mxu0
        %v1534 = vpop.f32.mrb[0].mxu0
        %v1535 = vadd.f32 0.0, %v1534
        %v1536 = vpop.f32.mrb[0].mxu0
        %1537 = vmatprep.mubr.bf16.mxu0 0
        %1538 = vmatmul.mubr.bf16.gmra.mrb[0].mxu0 %v1420
        %v1539 = vpop.f32.mrb[0].mxu0
        %v1540 = vadd.f32 0.0, %v1539
        %v1541 = vpop.f32.mrb[0].mxu0
        %v1542 = vpop.f32.mrb[0].mxu0
        %v1543 = vadd.f32 0.0, %v1542
        %v1544 = vpop.f32.mrb[0].mxu0
        %1545 = vmatprep.mubr.bf16.mxu0 0
        %1546 = vmatmul.mubr.bf16.gmra.mrb[0].mxu0 %v1423
        %v1547 = vpop.f32.mrb[0].mxu0
        %v1548 = vadd.f32 0.0, %v1547
        %v1549 = vpop.f32.mrb[0].mxu0
        %v1550 = vpop.f32.mrb[0].mxu0
        %v1551 = vadd.f32 0.0, %v1550
        %v1552 = vpop.f32.mrb[0].mxu0
        %1553 = vmatprep.mubr.bf16.mxu0 0
        %1554 = vmatmul.mubr.bf16.gmra.mrb[0].mxu0 %v1426
        %v1555 = vpop.f32.mrb[0].mxu0
        %v1556 = vadd.f32 0.0, %v1555
        %v1557 = vpop.f32.mrb[0].mxu0
        %v1558 = vpop.f32.mrb[0].mxu0
        %v1559 = vadd.f32 0.0, %v1558
        %v1560 = vpop.f32.mrb[0].mxu0
        %1561 = vmatprep.mubr.bf16.mxu0 0
        %1562 = vmatmul.mubr.bf16.gmra.mrb[0].mxu0 %v1429
        %v1563 = vpop.f32.mrb[0].mxu0
        %v1564 = vadd.f32 0.0, %v1563
        %v1565 = vpop.f32.mrb[0].mxu0
        %v1566 = vpop.f32.mrb[0].mxu0
        %v1567 = vadd.f32 0.0, %v1566
        %v1568 = vpop.f32.mrb[0].mxu0
        %1569 = vmatprep.mubr.bf16.mxu0 0
        %1570 = vmatmul.mubr.bf16.gmra.mrb[0].mxu0 %v1432
        %v1571 = vpop.f32.mrb[0].mxu0
        %v1572 = vadd.f32 0.0, %v1571
        %v1573 = vpop.f32.mrb[0].mxu0
        %v1574 = vpop.f32.mrb[0].mxu0
        %v1575 = vadd.f32 0.0, %v1574
        %v1576 = vpop.f32.mrb[0].mxu0
        %1577 = vmatprep.mubr.bf16.mxu0 0
        %1578 = vmatmul.mubr.bf16.gmra.mrb[0].mxu0 %v1435
        %v1579 = vpop.f32.mrb[0].mxu0
        %v1580 = vadd.f32 0.0, %v1579
        %v1581 = vpop.f32.mrb[0].mxu0
        %v1582 = vpop.f32.mrb[0].mxu0
        %v1583 = vadd.f32 0.0, %v1582
        %v1584 = vpop.f32.mrb[0].mxu0
        %1585 = vmatprep.mubr.bf16.mxu0 0
        %1586 = vmatmul.mubr.bf16.gmra.mrb[0].mxu0 %v1438
        %v1587 = vpop.f32.mrb[0].mxu0
        %v1588 = vadd.f32 0.0, %v1587
        %v1589 = vpop.f32.mrb[0].mxu0
        %v1590 = vpop.f32.mrb[0].mxu0
        %v1591 = vadd.f32 0.0, %v1590
        %v1592 = vpop.f32.mrb[0].mxu0
        %1593 = vmatprep.mubr.bf16.mxu0 0
        %1594 = vmatmul.mubr.bf16.gmra.mrb[0].mxu0 %v1441
        %v1595 = vpop.f32.mrb[0].mxu0
        %v1596 = vadd.f32 0.0, %v1595
        %v1597 = vpop.f32.mrb[0].mxu0
        %v1598 = vpop.f32.mrb[0].mxu0
        %v1599 = vadd.f32 0.0, %v1598
        %v1600 = vpop.f32.mrb[0].mxu0
        %1601 = vmatprep.mubr.bf16.mxu0 0
        %1602 = vmatmul.mubr.bf16.gmra.mrb[0].mxu0 %v1444
        %v1603 = vpop.f32.mrb[0].mxu0
        %v1604 = vadd.f32 0.0, %v1603
        %v1605 = vpop.f32.mrb[0].mxu0
        %v1606 = vpop.f32.mrb[0].mxu0
        %v1607 = vadd.f32 0.0, %v1606
        %v1608 = vpop.f32.mrb[0].mxu0
        %1609 = vdwg.mxu0
        %v1610 = vadd.f32 %v1093, %v1484
        %v1611 = vadd.f32 %v1096, %v1487
        %v1612 = vadd.f32 %v1101, %v1492
        %v1613 = vadd.f32 %v1104, %v1495
        %v1614 = vadd.f32 %v1109, %v1500
        %v1615 = vadd.f32 %v1112, %v1503
        %v1616 = vadd.f32 %v1117, %v1508
        %v1617 = vadd.f32 %v1120, %v1511
        %v1618 = vadd.f32 %v1125, %v1516
        %v1619 = vadd.f32 %v1128, %v1519
        %v1620 = vadd.f32 %v1133, %v1524
        %v1621 = vadd.f32 %v1136, %v1527
        %v1622 = vadd.f32 %v1141, %v1532
        %v1623 = vadd.f32 %v1144, %v1535
        %v1624 = vadd.f32 %v1149, %v1540
        %v1625 = vadd.f32 %v1152, %v1543
        %v1626 = vadd.f32 %v1157, %v1548
        %v1627 = vadd.f32 %v1160, %v1551
        %v1628 = vadd.f32 %v1165, %v1556
        %v1629 = vadd.f32 %v1168, %v1559
        %v1630 = vadd.f32 %v1173, %v1564
        %v1631 = vadd.f32 %v1176, %v1567
        %v1632 = vadd.f32 %v1181, %v1572
        %v1633 = vadd.f32 %v1184, %v1575
        %v1634 = vadd.f32 %v1189, %v1580
        %v1635 = vadd.f32 %v1192, %v1583
        %v1636 = vadd.f32 %v1197, %v1588
        %v1637 = vadd.f32 %v1200, %v1591
        %v1638 = vadd.f32 %v1205, %v1596
        %v1639 = vadd.f32 %v1208, %v1599
        %v1640 = vadd.f32 %v1213, %v1604
        %v1641 = vadd.f32 %v1216, %v1607
        %v1644 = vunpack.c.l.b16 %v263
        %v1645 = vunpack.c.l.b16 %v264
        %v1646 = vpack.c.b16 %v1645, %v1644
        %v1648 = vsel %vm713, %v1646, 0
        %v1651 = vsel %vm762, %v272, 0
        %1653 = vmatprep.subr.bf16.mxu0 0
        %1654 = vmatpush1.bf16.msra.mxu0 %v1651
        %1655 = vmatprep.subr.bf16.mxu0 0
        %1656 = vmatpush1.bf16.msra.mxu0 0
        %1657 = vmatprep.subr.bf16.mxu0 0
        %1658 = vmatpush1.bf16.msra.mxu0 0
        %1659 = vmatprep.subr.bf16.mxu0 0
        %1660 = vmatpush1.bf16.msra.mxu0 0
        %1661 = vmatprep.subr.bf16.mxu0 0
        %1662 = vmatpush1.bf16.msra.mxu0 0
        %1663 = vmatprep.subr.bf16.mxu0 0
        %1664 = vmatpush1.bf16.msra.mxu0 0
        %1665 = vmatprep.subr.bf16.mxu0 0
        %1666 = vmatpush1.bf16.msra.mxu0 0
        %1667 = vmatprep.subr.bf16.mxu0 0
        %1668 = vmatpush1.bf16.msra.mxu0 0
        %1669 = vmatprep.subr.bf16.mxu0 0
        %1670 = vmatpush1.bf16.msra.mxu0 0
        %1671 = vmatprep.subr.bf16.mxu0 0
        %1672 = vmatpush1.bf16.msra.mxu0 0
        %1673 = vmatprep.subr.bf16.mxu0 0
        %1674 = vmatpush1.bf16.msra.mxu0 0
        %1675 = vmatprep.subr.bf16.mxu0 0
        %1676 = vmatpush1.bf16.msra.mxu0 0
        %1677 = vmatprep.subr.bf16.mxu0 0
        %1678 = vmatpush1.bf16.msra.mxu0 0
        %1679 = vmatprep.subr.bf16.mxu0 0
        %1680 = vmatpush1.bf16.msra.mxu0 0
        %1681 = vmatprep.subr.bf16.mxu0 0
        %1682 = vmatpush1.bf16.msra.mxu0 0
        %1683 = vmatprep.subr.bf16.mxu0 0
        %1684 = vmatpush1.bf16.msra.mxu0 0
        %1685 = vmatprep.mubr.bf16.mxu0 0
        %1686 = vmatmul.mubr.bf16.gmra.mrb[0].mxu0 %v1011
        %v1687 = vpop.f32.mrb[0].mxu0
        %v1688 = vadd.f32 0.0, %v1687
        %v1689 = vpop.f32.mrb[0].mxu0
        %v1690 = vpop.f32.mrb[0].mxu0
        %v1691 = vadd.f32 0.0, %v1690
        %v1692 = vpop.f32.mrb[0].mxu0
        %1693 = vmatprep.mubr.bf16.mxu0 0
        %1694 = vmatmul.mubr.bf16.gmra.mrb[0].mxu0 %v1014
        %v1695 = vpop.f32.mrb[0].mxu0
        %v1696 = vadd.f32 0.0, %v1695
        %v1697 = vpop.f32.mrb[0].mxu0
        %v1698 = vpop.f32.mrb[0].mxu0
        %v1699 = vadd.f32 0.0, %v1698
        %v1700 = vpop.f32.mrb[0].mxu0
        %1701 = vmatprep.mubr.bf16.mxu0 0
        %1702 = vmatmul.mubr.bf16.gmra.mrb[0].mxu0 %v1017
        %v1703 = vpop.f32.mrb[0].mxu0
        %v1704 = vadd.f32 0.0, %v1703
        %v1705 = vpop.f32.mrb[0].mxu0
        %v1706 = vpop.f32.mrb[0].mxu0
        %v1707 = vadd.f32 0.0, %v1706
        %v1708 = vpop.f32.mrb[0].mxu0
        %1709 = vmatprep.mubr.bf16.mxu0 0
        %1710 = vmatmul.mubr.bf16.gmra.mrb[0].mxu0 %v1020
        %v1711 = vpop.f32.mrb[0].mxu0
        %v1712 = vadd.f32 0.0, %v1711
        %v1713 = vpop.f32.mrb[0].mxu0
        %v1714 = vpop.f32.mrb[0].mxu0
        %v1715 = vadd.f32 0.0, %v1714
        %v1716 = vpop.f32.mrb[0].mxu0
        %1717 = vmatprep.mubr.bf16.mxu0 0
        %1718 = vmatmul.mubr.bf16.gmra.mrb[0].mxu0 %v1023
        %v1719 = vpop.f32.mrb[0].mxu0
        %v1720 = vadd.f32 0.0, %v1719
        %v1721 = vpop.f32.mrb[0].mxu0
        %v1722 = vpop.f32.mrb[0].mxu0
        %v1723 = vadd.f32 0.0, %v1722
        %v1724 = vpop.f32.mrb[0].mxu0
        %1725 = vmatprep.mubr.bf16.mxu0 0
        %1726 = vmatmul.mubr.bf16.gmra.mrb[0].mxu0 %v1026
        %v1727 = vpop.f32.mrb[0].mxu0
        %v1728 = vadd.f32 0.0, %v1727
        %v1729 = vpop.f32.mrb[0].mxu0
        %v1730 = vpop.f32.mrb[0].mxu0
        %v1731 = vadd.f32 0.0, %v1730
        %v1732 = vpop.f32.mrb[0].mxu0
        %1733 = vmatprep.mubr.bf16.mxu0 0
        %1734 = vmatmul.mubr.bf16.gmra.mrb[0].mxu0 %v1029
        %v1735 = vpop.f32.mrb[0].mxu0
        %v1736 = vadd.f32 0.0, %v1735
        %v1737 = vpop.f32.mrb[0].mxu0
        %v1738 = vpop.f32.mrb[0].mxu0
        %v1739 = vadd.f32 0.0, %v1738
        %v1740 = vpop.f32.mrb[0].mxu0
        %1741 = vmatprep.mubr.bf16.mxu0 0
        %1742 = vmatmul.mubr.bf16.gmra.mrb[0].mxu0 %v1032
        %v1743 = vpop.f32.mrb[0].mxu0
        %v1744 = vadd.f32 0.0, %v1743
        %v1745 = vpop.f32.mrb[0].mxu0
        %v1746 = vpop.f32.mrb[0].mxu0
        %v1747 = vadd.f32 0.0, %v1746
        %v1748 = vpop.f32.mrb[0].mxu0
        %1749 = vmatprep.mubr.bf16.mxu0 0
        %1750 = vmatmul.mubr.bf16.gmra.mrb[0].mxu0 %v1035
        %v1751 = vpop.f32.mrb[0].mxu0
        %v1752 = vadd.f32 0.0, %v1751
        %v1753 = vpop.f32.mrb[0].mxu0
        %v1754 = vpop.f32.mrb[0].mxu0
        %v1755 = vadd.f32 0.0, %v1754
        %v1756 = vpop.f32.mrb[0].mxu0
        %1757 = vmatprep.mubr.bf16.mxu0 0
        %1758 = vmatmul.mubr.bf16.gmra.mrb[0].mxu0 %v1038
        %v1759 = vpop.f32.mrb[0].mxu0
        %v1760 = vadd.f32 0.0, %v1759
        %v1761 = vpop.f32.mrb[0].mxu0
        %v1762 = vpop.f32.mrb[0].mxu0
        %v1763 = vadd.f32 0.0, %v1762
        %v1764 = vpop.f32.mrb[0].mxu0
        %1765 = vmatprep.mubr.bf16.mxu0 0
        %1766 = vmatmul.mubr.bf16.gmra.mrb[0].mxu0 %v1041
        %v1767 = vpop.f32.mrb[0].mxu0
        %v1768 = vadd.f32 0.0, %v1767
        %v1769 = vpop.f32.mrb[0].mxu0
        %v1770 = vpop.f32.mrb[0].mxu0
        %v1771 = vadd.f32 0.0, %v1770
        %v1772 = vpop.f32.mrb[0].mxu0
        %1773 = vmatprep.mubr.bf16.mxu0 0
        %1774 = vmatmul.mubr.bf16.gmra.mrb[0].mxu0 %v1044
        %v1775 = vpop.f32.mrb[0].mxu0
        %v1776 = vadd.f32 0.0, %v1775
        %v1777 = vpop.f32.mrb[0].mxu0
        %v1778 = vpop.f32.mrb[0].mxu0
        %v1779 = vadd.f32 0.0, %v1778
        %v1780 = vpop.f32.mrb[0].mxu0
        %1781 = vmatprep.mubr.bf16.mxu0 0
        %1782 = vmatmul.mubr.bf16.gmra.mrb[0].mxu0 %v1047
        %v1783 = vpop.f32.mrb[0].mxu0
        %v1784 = vadd.f32 0.0, %v1783
        %v1785 = vpop.f32.mrb[0].mxu0
        %v1786 = vpop.f32.mrb[0].mxu0
        %v1787 = vadd.f32 0.0, %v1786
        %v1788 = vpop.f32.mrb[0].mxu0
        %1789 = vmatprep.mubr.bf16.mxu0 0
        %1790 = vmatmul.mubr.bf16.gmra.mrb[0].mxu0 %v1050
        %v1791 = vpop.f32.mrb[0].mxu0
        %v1792 = vadd.f32 0.0, %v1791
        %v1793 = vpop.f32.mrb[0].mxu0
        %v1794 = vpop.f32.mrb[0].mxu0
        %v1795 = vadd.f32 0.0, %v1794
        %v1796 = vpop.f32.mrb[0].mxu0
        %1797 = vmatprep.mubr.bf16.mxu0 0
        %1798 = vmatmul.mubr.bf16.gmra.mrb[0].mxu0 %v1053
        %v1799 = vpop.f32.mrb[0].mxu0
        %v1800 = vadd.f32 0.0, %v1799
        %v1801 = vpop.f32.mrb[0].mxu0
        %v1802 = vpop.f32.mrb[0].mxu0
        %v1803 = vadd.f32 0.0, %v1802
        %v1804 = vpop.f32.mrb[0].mxu0
        %1805 = vmatprep.mubr.bf16.mxu0 0
        %1806 = vmatmul.mubr.bf16.gmra.mrb[0].mxu0 %v1648
        %v1807 = vpop.f32.mrb[0].mxu0
        %v1808 = vadd.f32 0.0, %v1807
        %v1809 = vpop.f32.mrb[0].mxu0
        %v1810 = vpop.f32.mrb[0].mxu0
        %v1811 = vadd.f32 0.0, %v1810
        %v1812 = vpop.f32.mrb[0].mxu0
        %1813 = vdwg.mxu0
        %v1814 = vadd.f32 %v1610, %v1688
        %v1815 = vadd.f32 %v1611, %v1691
        %v1816 = vadd.f32 %v1612, %v1696
        %v1817 = vadd.f32 %v1613, %v1699
        %v1818 = vadd.f32 %v1614, %v1704
        %v1819 = vadd.f32 %v1615, %v1707
        %v1820 = vadd.f32 %v1616, %v1712
        %v1821 = vadd.f32 %v1617, %v1715
        %v1822 = vadd.f32 %v1618, %v1720
        %v1823 = vadd.f32 %v1619, %v1723
        %v1824 = vadd.f32 %v1620, %v1728
        %v1825 = vadd.f32 %v1621, %v1731
        %v1826 = vadd.f32 %v1622, %v1736
        %v1827 = vadd.f32 %v1623, %v1739
        %v1828 = vadd.f32 %v1624, %v1744
        %v1829 = vadd.f32 %v1625, %v1747
        %v1830 = vadd.f32 %v1626, %v1752
        %v1831 = vadd.f32 %v1627, %v1755
        %v1832 = vadd.f32 %v1628, %v1760
        %v1833 = vadd.f32 %v1629, %v1763
        %v1834 = vadd.f32 %v1630, %v1768
        %v1835 = vadd.f32 %v1631, %v1771
        %v1836 = vadd.f32 %v1632, %v1776
        %v1837 = vadd.f32 %v1633, %v1779
        %v1838 = vadd.f32 %v1634, %v1784
        %v1839 = vadd.f32 %v1635, %v1787
        %v1840 = vadd.f32 %v1636, %v1792
        %v1841 = vadd.f32 %v1637, %v1795
        %v1842 = vadd.f32 %v1638, %v1800
        %v1843 = vadd.f32 %v1639, %v1803
        %v1844 = vadd.f32 %v1640, %v1808
        %v1845 = vadd.f32 %v1641, %v1811
        %v1847 = vshrl.u32 %v263, 16
        %v1849 = vrot.slane %v1847, 4
        %v1850 = vshll.u32 %v263, 16
        %v1852 = vrot.slane %v1850, 5
        %v1853 = vor.u32 %v1849, %v1852
        %v1854 = vrot.slane %v1853, 4
        %v1856 = vshll.u32 %v264, 16
        %v1858 = vrot.slane %v1856, 5
        %v1859 = vsel %vm280, %v1854, %v1858
        %v1860 = vshrl.u32 %v264, 16
        %v1862 = vrot.slane %v1860, 4
        %v1863 = vor.u32 %v1862, %v1858
        %v1864 = vrot.slane %v1863, 4
        %v1866 = vshll.u32 %v265, 16
        %v1868 = vrot.slane %v1866, 5
        %v1869 = vsel %vm280, %v1864, %v1868
        %v1870 = vunpack.c.l.b16 %v1859
        %v1871 = vunpack.c.l.b16 %v1869
        %v1872 = vpack.c.b16 %v1871, %v1870
        %v1874 = vsel %vm713, %v1872, 0
        %v1877 = vsel %vm762, %v273, 0
        %1879 = vmatprep.subr.bf16.mxu0 0
        %1880 = vmatpush1.bf16.msra.mxu0 %v1877
        %1881 = vmatprep.subr.bf16.mxu0 0
        %1882 = vmatpush1.bf16.msra.mxu0 0
        %1883 = vmatprep.subr.bf16.mxu0 0
        %1884 = vmatpush1.bf16.msra.mxu0 0
        %1885 = vmatprep.subr.bf16.mxu0 0
        %1886 = vmatpush1.bf16.msra.mxu0 0
        %1887 = vmatprep.subr.bf16.mxu0 0
        %1888 = vmatpush1.bf16.msra.mxu0 0
        %1889 = vmatprep.subr.bf16.mxu0 0
        %1890 = vmatpush1.bf16.msra.mxu0 0
        %1891 = vmatprep.subr.bf16.mxu0 0
        %1892 = vmatpush1.bf16.msra.mxu0 0
        %1893 = vmatprep.subr.bf16.mxu0 0
        %1894 = vmatpush1.bf16.msra.mxu0 0
        %1895 = vmatprep.subr.bf16.mxu0 0
        %1896 = vmatpush1.bf16.msra.mxu0 0
        %1897 = vmatprep.subr.bf16.mxu0 0
        %1898 = vmatpush1.bf16.msra.mxu0 0
        %1899 = vmatprep.subr.bf16.mxu0 0
        %1900 = vmatpush1.bf16.msra.mxu0 0
        %1901 = vmatprep.subr.bf16.mxu0 0
        %1902 = vmatpush1.bf16.msra.mxu0 0
        %1903 = vmatprep.subr.bf16.mxu0 0
        %1904 = vmatpush1.bf16.msra.mxu0 0
        %1905 = vmatprep.subr.bf16.mxu0 0
        %1906 = vmatpush1.bf16.msra.mxu0 0
        %1907 = vmatprep.subr.bf16.mxu0 0
        %1908 = vmatpush1.bf16.msra.mxu0 0
        %1909 = vmatprep.subr.bf16.mxu0 0
        %1910 = vmatpush1.bf16.msra.mxu0 0
        %1911 = vmatprep.mubr.bf16.mxu0 0
        %1912 = vmatmul.mubr.bf16.gmra.mrb[0].mxu0 %v718
        %v1913 = vpop.f32.mrb[0].mxu0
        %v1914 = vadd.f32 0.0, %v1913
        %v1915 = vpop.f32.mrb[0].mxu0
        %v1916 = vpop.f32.mrb[0].mxu0
        %v1917 = vadd.f32 0.0, %v1916
        %v1918 = vpop.f32.mrb[0].mxu0
        %1919 = vmatprep.mubr.bf16.mxu0 0
        %1920 = vmatmul.mubr.bf16.gmra.mrb[0].mxu0 %v721
        %v1921 = vpop.f32.mrb[0].mxu0
        %v1922 = vadd.f32 0.0, %v1921
        %v1923 = vpop.f32.mrb[0].mxu0
        %v1924 = vpop.f32.mrb[0].mxu0
        %v1925 = vadd.f32 0.0, %v1924
        %v1926 = vpop.f32.mrb[0].mxu0
        %1927 = vmatprep.mubr.bf16.mxu0 0
        %1928 = vmatmul.mubr.bf16.gmra.mrb[0].mxu0 %v724
        %v1929 = vpop.f32.mrb[0].mxu0
        %v1930 = vadd.f32 0.0, %v1929
        %v1931 = vpop.f32.mrb[0].mxu0
        %v1932 = vpop.f32.mrb[0].mxu0
        %v1933 = vadd.f32 0.0, %v1932
        %v1934 = vpop.f32.mrb[0].mxu0
        %1935 = vmatprep.mubr.bf16.mxu0 0
        %1936 = vmatmul.mubr.bf16.gmra.mrb[0].mxu0 %v727
        %v1937 = vpop.f32.mrb[0].mxu0
        %v1938 = vadd.f32 0.0, %v1937
        %v1939 = vpop.f32.mrb[0].mxu0
        %v1940 = vpop.f32.mrb[0].mxu0
        %v1941 = vadd.f32 0.0, %v1940
        %v1942 = vpop.f32.mrb[0].mxu0
        %1943 = vmatprep.mubr.bf16.mxu0 0
        %1944 = vmatmul.mubr.bf16.gmra.mrb[0].mxu0 %v730
        %v1945 = vpop.f32.mrb[0].mxu0
        %v1946 = vadd.f32 0.0, %v1945
        %v1947 = vpop.f32.mrb[0].mxu0
        %v1948 = vpop.f32.mrb[0].mxu0
        %v1949 = vadd.f32 0.0, %v1948
        %v1950 = vpop.f32.mrb[0].mxu0
        %1951 = vmatprep.mubr.bf16.mxu0 0
        %1952 = vmatmul.mubr.bf16.gmra.mrb[0].mxu0 %v733
        %v1953 = vpop.f32.mrb[0].mxu0
        %v1954 = vadd.f32 0.0, %v1953
        %v1955 = vpop.f32.mrb[0].mxu0
        %v1956 = vpop.f32.mrb[0].mxu0
        %v1957 = vadd.f32 0.0, %v1956
        %v1958 = vpop.f32.mrb[0].mxu0
        %1959 = vmatprep.mubr.bf16.mxu0 0
        %1960 = vmatmul.mubr.bf16.gmra.mrb[0].mxu0 %v736
        %v1961 = vpop.f32.mrb[0].mxu0
        %v1962 = vadd.f32 0.0, %v1961
        %v1963 = vpop.f32.mrb[0].mxu0
        %v1964 = vpop.f32.mrb[0].mxu0
        %v1965 = vadd.f32 0.0, %v1964
        %v1966 = vpop.f32.mrb[0].mxu0
        %1967 = vmatprep.mubr.bf16.mxu0 0
        %1968 = vmatmul.mubr.bf16.gmra.mrb[0].mxu0 %v739
        %v1969 = vpop.f32.mrb[0].mxu0
        %v1970 = vadd.f32 0.0, %v1969
        %v1971 = vpop.f32.mrb[0].mxu0
        %v1972 = vpop.f32.mrb[0].mxu0
        %v1973 = vadd.f32 0.0, %v1972
        %v1974 = vpop.f32.mrb[0].mxu0
        %1975 = vmatprep.mubr.bf16.mxu0 0
        %1976 = vmatmul.mubr.bf16.gmra.mrb[0].mxu0 %v742
        %v1977 = vpop.f32.mrb[0].mxu0
        %v1978 = vadd.f32 0.0, %v1977
        %v1979 = vpop.f32.mrb[0].mxu0
        %v1980 = vpop.f32.mrb[0].mxu0
        %v1981 = vadd.f32 0.0, %v1980
        %v1982 = vpop.f32.mrb[0].mxu0
        %1983 = vmatprep.mubr.bf16.mxu0 0
        %1984 = vmatmul.mubr.bf16.gmra.mrb[0].mxu0 %v745
        %v1985 = vpop.f32.mrb[0].mxu0
        %v1986 = vadd.f32 0.0, %v1985
        %v1987 = vpop.f32.mrb[0].mxu0
        %v1988 = vpop.f32.mrb[0].mxu0
        %v1989 = vadd.f32 0.0, %v1988
        %v1990 = vpop.f32.mrb[0].mxu0
        %1991 = vmatprep.mubr.bf16.mxu0 0
        %1992 = vmatmul.mubr.bf16.gmra.mrb[0].mxu0 %v748
        %v1993 = vpop.f32.mrb[0].mxu0
        %v1994 = vadd.f32 0.0, %v1993
        %v1995 = vpop.f32.mrb[0].mxu0
        %v1996 = vpop.f32.mrb[0].mxu0
        %v1997 = vadd.f32 0.0, %v1996
        %v1998 = vpop.f32.mrb[0].mxu0
        %1999 = vmatprep.mubr.bf16.mxu0 0
        %2000 = vmatmul.mubr.bf16.gmra.mrb[0].mxu0 %v751
        %v2001 = vpop.f32.mrb[0].mxu0
        %v2002 = vadd.f32 0.0, %v2001
        %v2003 = vpop.f32.mrb[0].mxu0
        %v2004 = vpop.f32.mrb[0].mxu0
        %v2005 = vadd.f32 0.0, %v2004
        %v2006 = vpop.f32.mrb[0].mxu0
        %2007 = vmatprep.mubr.bf16.mxu0 0
        %2008 = vmatmul.mubr.bf16.gmra.mrb[0].mxu0 %v754
        %v2009 = vpop.f32.mrb[0].mxu0
        %v2010 = vadd.f32 0.0, %v2009
        %v2011 = vpop.f32.mrb[0].mxu0
        %v2012 = vpop.f32.mrb[0].mxu0
        %v2013 = vadd.f32 0.0, %v2012
        %v2014 = vpop.f32.mrb[0].mxu0
        %2015 = vmatprep.mubr.bf16.mxu0 0
        %2016 = vmatmul.mubr.bf16.gmra.mrb[0].mxu0 %v757
        %v2017 = vpop.f32.mrb[0].mxu0
        %v2018 = vadd.f32 0.0, %v2017
        %v2019 = vpop.f32.mrb[0].mxu0
        %v2020 = vpop.f32.mrb[0].mxu0
        %v2021 = vadd.f32 0.0, %v2020
        %v2022 = vpop.f32.mrb[0].mxu0
        %2023 = vmatprep.mubr.bf16.mxu0 0
        %2024 = vmatmul.mubr.bf16.gmra.mrb[0].mxu0 %v760
        %v2025 = vpop.f32.mrb[0].mxu0
        %v2026 = vadd.f32 0.0, %v2025
        %v2027 = vpop.f32.mrb[0].mxu0
        %v2028 = vpop.f32.mrb[0].mxu0
        %v2029 = vadd.f32 0.0, %v2028
        %v2030 = vpop.f32.mrb[0].mxu0
        %2031 = vmatprep.mubr.bf16.mxu0 0
        %2032 = vmatmul.mubr.bf16.gmra.mrb[0].mxu0 %v1874
        %v2033 = vpop.f32.mrb[0].mxu0
        %v2034 = vadd.f32 0.0, %v2033
        %v2035 = vpop.f32.mrb[0].mxu0
        %v2036 = vpop.f32.mrb[0].mxu0
        %v2037 = vadd.f32 0.0, %v2036
        %v2038 = vpop.f32.mrb[0].mxu0
        %2039 = vdwg.mxu0
        %v2040 = vadd.f32 %v1814, %v1914
        %v2041 = vadd.f32 %v1815, %v1917
        %v2042 = vadd.f32 %v1816, %v1922
        %v2043 = vadd.f32 %v1817, %v1925
        %v2044 = vadd.f32 %v1818, %v1930
        %v2045 = vadd.f32 %v1819, %v1933
        %v2046 = vadd.f32 %v1820, %v1938
        %v2047 = vadd.f32 %v1821, %v1941
        %v2048 = vadd.f32 %v1822, %v1946
        %v2049 = vadd.f32 %v1823, %v1949
        %v2050 = vadd.f32 %v1824, %v1954
        %v2051 = vadd.f32 %v1825, %v1957
        %v2052 = vadd.f32 %v1826, %v1962
        %v2053 = vadd.f32 %v1827, %v1965
        %v2054 = vadd.f32 %v1828, %v1970
        %v2055 = vadd.f32 %v1829, %v1973
        %v2056 = vadd.f32 %v1830, %v1978
        %v2057 = vadd.f32 %v1831, %v1981
        %v2058 = vadd.f32 %v1832, %v1986
        %v2059 = vadd.f32 %v1833, %v1989
        %v2060 = vadd.f32 %v1834, %v1994
        %v2061 = vadd.f32 %v1835, %v1997
        %v2062 = vadd.f32 %v1836, %v2002
        %v2063 = vadd.f32 %v1837, %v2005
        %v2064 = vadd.f32 %v1838, %v2010
        %v2065 = vadd.f32 %v1839, %v2013
        %v2066 = vadd.f32 %v1840, %v2018
        %v2067 = vadd.f32 %v1841, %v2021
        %v2068 = vadd.f32 %v1842, %v2026
        %v2069 = vadd.f32 %v1843, %v2029
        %v2070 = vadd.f32 %v1844, %v2034
        %v2071 = vadd.f32 %v1845, %v2037
        %v2073 = vrot.slane %v263, 5
        %v2074 = vrot.slane %v2073, 4
        %v2075 = vrot.slane %v264, 5
        %v2076 = vsel %vm1237, %v2074, %v2075
        %v2077 = vrot.slane %v2075, 4
        %v2078 = vrot.slane %v265, 5
        %v2079 = vsel %vm1237, %v2077, %v2078
        %v2080 = vunpack.c.l.b16 %v2076
        %v2081 = vunpack.c.l.b16 %v2079
        %v2082 = vpack.c.b16 %v2081, %v2080
        %v2084 = vsel %vm713, %v2082, 0
        %v2087 = vsel %vm762, %v274, 0
        %2089 = vmatprep.subr.bf16.mxu0 0
        %2090 = vmatpush1.bf16.msra.mxu0 %v2087
        %2091 = vmatprep.subr.bf16.mxu0 0
        %2092 = vmatpush1.bf16.msra.mxu0 0
        %2093 = vmatprep.subr.bf16.mxu0 0
        %2094 = vmatpush1.bf16.msra.mxu0 0
        %2095 = vmatprep.subr.bf16.mxu0 0
        %2096 = vmatpush1.bf16.msra.mxu0 0
        %2097 = vmatprep.subr.bf16.mxu0 0
        %2098 = vmatpush1.bf16.msra.mxu0 0
        %2099 = vmatprep.subr.bf16.mxu0 0
        %2100 = vmatpush1.bf16.msra.mxu0 0
        %2101 = vmatprep.subr.bf16.mxu0 0
        %2102 = vmatpush1.bf16.msra.mxu0 0
        %2103 = vmatprep.subr.bf16.mxu0 0
        %2104 = vmatpush1.bf16.msra.mxu0 0
        %2105 = vmatprep.subr.bf16.mxu0 0
        %2106 = vmatpush1.bf16.msra.mxu0 0
        %2107 = vmatprep.subr.bf16.mxu0 0
        %2108 = vmatpush1.bf16.msra.mxu0 0
        %2109 = vmatprep.subr.bf16.mxu0 0
        %2110 = vmatpush1.bf16.msra.mxu0 0
        %2111 = vmatprep.subr.bf16.mxu0 0
        %2112 = vmatpush1.bf16.msra.mxu0 0
        %2113 = vmatprep.subr.bf16.mxu0 0
        %2114 = vmatpush1.bf16.msra.mxu0 0
        %2115 = vmatprep.subr.bf16.mxu0 0
        %2116 = vmatpush1.bf16.msra.mxu0 0
        %2117 = vmatprep.subr.bf16.mxu0 0
        %2118 = vmatpush1.bf16.msra.mxu0 0
        %2119 = vmatprep.subr.bf16.mxu0 0
        %2120 = vmatpush1.bf16.msra.mxu0 0
        %2121 = vmatprep.mubr.bf16.mxu0 0
        %2122 = vmatmul.mubr.bf16.gmra.mrb[0].mxu0 %v1402
        %v2123 = vpop.f32.mrb[0].mxu0
        %v2124 = vadd.f32 0.0, %v2123
        %v2125 = vpop.f32.mrb[0].mxu0
        %v2126 = vpop.f32.mrb[0].mxu0
        %v2127 = vadd.f32 0.0, %v2126
        %v2128 = vpop.f32.mrb[0].mxu0
        %2129 = vmatprep.mubr.bf16.mxu0 0
        %2130 = vmatmul.mubr.bf16.gmra.mrb[0].mxu0 %v1405
        %v2131 = vpop.f32.mrb[0].mxu0
        %v2132 = vadd.f32 0.0, %v2131
        %v2133 = vpop.f32.mrb[0].mxu0
        %v2134 = vpop.f32.mrb[0].mxu0
        %v2135 = vadd.f32 0.0, %v2134
        %v2136 = vpop.f32.mrb[0].mxu0
        %2137 = vmatprep.mubr.bf16.mxu0 0
        %2138 = vmatmul.mubr.bf16.gmra.mrb[0].mxu0 %v1408
        %v2139 = vpop.f32.mrb[0].mxu0
        %v2140 = vadd.f32 0.0, %v2139
        %v2141 = vpop.f32.mrb[0].mxu0
        %v2142 = vpop.f32.mrb[0].mxu0
        %v2143 = vadd.f32 0.0, %v2142
        %v2144 = vpop.f32.mrb[0].mxu0
        %2145 = vmatprep.mubr.bf16.mxu0 0
        %2146 = vmatmul.mubr.bf16.gmra.mrb[0].mxu0 %v1411
        %v2147 = vpop.f32.mrb[0].mxu0
        %v2148 = vadd.f32 0.0, %v2147
        %v2149 = vpop.f32.mrb[0].mxu0
        %v2150 = vpop.f32.mrb[0].mxu0
        %v2151 = vadd.f32 0.0, %v2150
        %v2152 = vpop.f32.mrb[0].mxu0
        %2153 = vmatprep.mubr.bf16.mxu0 0
        %2154 = vmatmul.mubr.bf16.gmra.mrb[0].mxu0 %v1414
        %v2155 = vpop.f32.mrb[0].mxu0
        %v2156 = vadd.f32 0.0, %v2155
        %v2157 = vpop.f32.mrb[0].mxu0
        %v2158 = vpop.f32.mrb[0].mxu0
        %v2159 = vadd.f32 0.0, %v2158
        %v2160 = vpop.f32.mrb[0].mxu0
        %2161 = vmatprep.mubr.bf16.mxu0 0
        %2162 = vmatmul.mubr.bf16.gmra.mrb[0].mxu0 %v1417
        %v2163 = vpop.f32.mrb[0].mxu0
        %v2164 = vadd.f32 0.0, %v2163
        %v2165 = vpop.f32.mrb[0].mxu0
        %v2166 = vpop.f32.mrb[0].mxu0
        %v2167 = vadd.f32 0.0, %v2166
        %v2168 = vpop.f32.mrb[0].mxu0
        %2169 = vmatprep.mubr.bf16.mxu0 0
        %2170 = vmatmul.mubr.bf16.gmra.mrb[0].mxu0 %v1420
        %v2171 = vpop.f32.mrb[0].mxu0
        %v2172 = vadd.f32 0.0, %v2171
        %v2173 = vpop.f32.mrb[0].mxu0
        %v2174 = vpop.f32.mrb[0].mxu0
        %v2175 = vadd.f32 0.0, %v2174
        %v2176 = vpop.f32.mrb[0].mxu0
        %2177 = vmatprep.mubr.bf16.mxu0 0
        %2178 = vmatmul.mubr.bf16.gmra.mrb[0].mxu0 %v1423
        %v2179 = vpop.f32.mrb[0].mxu0
        %v2180 = vadd.f32 0.0, %v2179
        %v2181 = vpop.f32.mrb[0].mxu0
        %v2182 = vpop.f32.mrb[0].mxu0
        %v2183 = vadd.f32 0.0, %v2182
        %v2184 = vpop.f32.mrb[0].mxu0
        %2185 = vmatprep.mubr.bf16.mxu0 0
        %2186 = vmatmul.mubr.bf16.gmra.mrb[0].mxu0 %v1426
        %v2187 = vpop.f32.mrb[0].mxu0
        %v2188 = vadd.f32 0.0, %v2187
        %v2189 = vpop.f32.mrb[0].mxu0
        %v2190 = vpop.f32.mrb[0].mxu0
        %v2191 = vadd.f32 0.0, %v2190
        %v2192 = vpop.f32.mrb[0].mxu0
        %2193 = vmatprep.mubr.bf16.mxu0 0
        %2194 = vmatmul.mubr.bf16.gmra.mrb[0].mxu0 %v1429
        %v2195 = vpop.f32.mrb[0].mxu0
        %v2196 = vadd.f32 0.0, %v2195
        %v2197 = vpop.f32.mrb[0].mxu0
        %v2198 = vpop.f32.mrb[0].mxu0
        %v2199 = vadd.f32 0.0, %v2198
        %v2200 = vpop.f32.mrb[0].mxu0
        %2201 = vmatprep.mubr.bf16.mxu0 0
        %2202 = vmatmul.mubr.bf16.gmra.mrb[0].mxu0 %v1432
        %v2203 = vpop.f32.mrb[0].mxu0
        %v2204 = vadd.f32 0.0, %v2203
        %v2205 = vpop.f32.mrb[0].mxu0
        %v2206 = vpop.f32.mrb[0].mxu0
        %v2207 = vadd.f32 0.0, %v2206
        %v2208 = vpop.f32.mrb[0].mxu0
        %2209 = vmatprep.mubr.bf16.mxu0 0
        %2210 = vmatmul.mubr.bf16.gmra.mrb[0].mxu0 %v1435
        %v2211 = vpop.f32.mrb[0].mxu0
        %v2212 = vadd.f32 0.0, %v2211
        %v2213 = vpop.f32.mrb[0].mxu0
        %v2214 = vpop.f32.mrb[0].mxu0
        %v2215 = vadd.f32 0.0, %v2214
        %v2216 = vpop.f32.mrb[0].mxu0
        %2217 = vmatprep.mubr.bf16.mxu0 0
        %2218 = vmatmul.mubr.bf16.gmra.mrb[0].mxu0 %v1438
        %v2219 = vpop.f32.mrb[0].mxu0
        %v2220 = vadd.f32 0.0, %v2219
        %v2221 = vpop.f32.mrb[0].mxu0
        %v2222 = vpop.f32.mrb[0].mxu0
        %v2223 = vadd.f32 0.0, %v2222
        %v2224 = vpop.f32.mrb[0].mxu0
        %2225 = vmatprep.mubr.bf16.mxu0 0
        %2226 = vmatmul.mubr.bf16.gmra.mrb[0].mxu0 %v1441
        %v2227 = vpop.f32.mrb[0].mxu0
        %v2228 = vadd.f32 0.0, %v2227
        %v2229 = vpop.f32.mrb[0].mxu0
        %v2230 = vpop.f32.mrb[0].mxu0
        %v2231 = vadd.f32 0.0, %v2230
        %v2232 = vpop.f32.mrb[0].mxu0
        %2233 = vmatprep.mubr.bf16.mxu0 0
        %2234 = vmatmul.mubr.bf16.gmra.mrb[0].mxu0 %v1444
        %v2235 = vpop.f32.mrb[0].mxu0
        %v2236 = vadd.f32 0.0, %v2235
        %v2237 = vpop.f32.mrb[0].mxu0
        %v2238 = vpop.f32.mrb[0].mxu0
        %v2239 = vadd.f32 0.0, %v2238
        %v2240 = vpop.f32.mrb[0].mxu0
        %2241 = vmatprep.mubr.bf16.mxu0 0
        %2242 = vmatmul.mubr.bf16.gmra.mrb[0].mxu0 %v2084
        %v2243 = vpop.f32.mrb[0].mxu0
        %v2244 = vadd.f32 0.0, %v2243
        %v2245 = vpop.f32.mrb[0].mxu0
        %v2246 = vpop.f32.mrb[0].mxu0
        %v2247 = vadd.f32 0.0, %v2246
        %v2248 = vpop.f32.mrb[0].mxu0
        %2249 = vdwg.mxu0
        %v2250 = vadd.f32 %v2040, %v2124
        %v2251 = vadd.f32 %v2041, %v2127
        %v2252 = vadd.f32 %v2042, %v2132
        %v2253 = vadd.f32 %v2043, %v2135
        %v2254 = vadd.f32 %v2044, %v2140
        %v2255 = vadd.f32 %v2045, %v2143
        %v2256 = vadd.f32 %v2046, %v2148
        %v2257 = vadd.f32 %v2047, %v2151
        %v2258 = vadd.f32 %v2048, %v2156
        %v2259 = vadd.f32 %v2049, %v2159
        %v2260 = vadd.f32 %v2050, %v2164
        %v2261 = vadd.f32 %v2051, %v2167
        %v2262 = vadd.f32 %v2052, %v2172
        %v2263 = vadd.f32 %v2053, %v2175
        %v2264 = vadd.f32 %v2054, %v2180
        %v2265 = vadd.f32 %v2055, %v2183
        %v2266 = vadd.f32 %v2056, %v2188
        %v2267 = vadd.f32 %v2057, %v2191
        %v2268 = vadd.f32 %v2058, %v2196
        %v2269 = vadd.f32 %v2059, %v2199
        %v2270 = vadd.f32 %v2060, %v2204
        %v2271 = vadd.f32 %v2061, %v2207
        %v2272 = vadd.f32 %v2062, %v2212
        %v2273 = vadd.f32 %v2063, %v2215
        %v2274 = vadd.f32 %v2064, %v2220
        %v2275 = vadd.f32 %v2065, %v2223
        %v2276 = vadd.f32 %v2066, %v2228
        %v2277 = vadd.f32 %v2067, %v2231
        %v2278 = vadd.f32 %v2068, %v2236
        %v2279 = vadd.f32 %v2069, %v2239
        %v2280 = vadd.f32 %v2070, %v2244
        %v2281 = vadd.f32 %v2071, %v2247
        %v2284 = vunpack.c.l.b16 %v266
        %v2285 = vunpack.c.l.b16 %v267
        %v2286 = vpack.c.b16 %v2285, %v2284
        %v2288 = vsel %vm713, %v2286, 0
        %v2291 = vsel %vm762, %v275, 0
        %2293 = vmatprep.subr.bf16.mxu0 0
        %2294 = vmatpush1.bf16.msra.mxu0 %v2291
        %2295 = vmatprep.subr.bf16.mxu0 0
        %2296 = vmatpush1.bf16.msra.mxu0 0
        %2297 = vmatprep.subr.bf16.mxu0 0
        %2298 = vmatpush1.bf16.msra.mxu0 0
        %2299 = vmatprep.subr.bf16.mxu0 0
        %2300 = vmatpush1.bf16.msra.mxu0 0
        %2301 = vmatprep.subr.bf16.mxu0 0
        %2302 = vmatpush1.bf16.msra.mxu0 0
        %2303 = vmatprep.subr.bf16.mxu0 0
        %2304 = vmatpush1.bf16.msra.mxu0 0
        %2305 = vmatprep.subr.bf16.mxu0 0
        %2306 = vmatpush1.bf16.msra.mxu0 0
        %2307 = vmatprep.subr.bf16.mxu0 0
        %2308 = vmatpush1.bf16.msra.mxu0 0
        %2309 = vmatprep.subr.bf16.mxu0 0
        %2310 = vmatpush1.bf16.msra.mxu0 0
        %2311 = vmatprep.subr.bf16.mxu0 0
        %2312 = vmatpush1.bf16.msra.mxu0 0
        %2313 = vmatprep.subr.bf16.mxu0 0
        %2314 = vmatpush1.bf16.msra.mxu0 0
        %2315 = vmatprep.subr.bf16.mxu0 0
        %2316 = vmatpush1.bf16.msra.mxu0 0
        %2317 = vmatprep.subr.bf16.mxu0 0
        %2318 = vmatpush1.bf16.msra.mxu0 0
        %2319 = vmatprep.subr.bf16.mxu0 0
        %2320 = vmatpush1.bf16.msra.mxu0 0
        %2321 = vmatprep.subr.bf16.mxu0 0
        %2322 = vmatpush1.bf16.msra.mxu0 0
        %2323 = vmatprep.subr.bf16.mxu0 0
        %2324 = vmatpush1.bf16.msra.mxu0 0
        %2325 = vmatprep.mubr.bf16.mxu0 0
        %2326 = vmatmul.mubr.bf16.gmra.mrb[0].mxu0 %v1014
        %v2327 = vpop.f32.mrb[0].mxu0
        %v2328 = vadd.f32 0.0, %v2327
        %v2329 = vpop.f32.mrb[0].mxu0
        %v2330 = vpop.f32.mrb[0].mxu0
        %v2331 = vadd.f32 0.0, %v2330
        %v2332 = vpop.f32.mrb[0].mxu0
        %2333 = vmatprep.mubr.bf16.mxu0 0
        %2334 = vmatmul.mubr.bf16.gmra.mrb[0].mxu0 %v1017
        %v2335 = vpop.f32.mrb[0].mxu0
        %v2336 = vadd.f32 0.0, %v2335
        %v2337 = vpop.f32.mrb[0].mxu0
        %v2338 = vpop.f32.mrb[0].mxu0
        %v2339 = vadd.f32 0.0, %v2338
        %v2340 = vpop.f32.mrb[0].mxu0
        %2341 = vmatprep.mubr.bf16.mxu0 0
        %2342 = vmatmul.mubr.bf16.gmra.mrb[0].mxu0 %v1020
        %v2343 = vpop.f32.mrb[0].mxu0
        %v2344 = vadd.f32 0.0, %v2343
        %v2345 = vpop.f32.mrb[0].mxu0
        %v2346 = vpop.f32.mrb[0].mxu0
        %v2347 = vadd.f32 0.0, %v2346
        %v2348 = vpop.f32.mrb[0].mxu0
        %2349 = vmatprep.mubr.bf16.mxu0 0
        %2350 = vmatmul.mubr.bf16.gmra.mrb[0].mxu0 %v1023
        %v2351 = vpop.f32.mrb[0].mxu0
        %v2352 = vadd.f32 0.0, %v2351
        %v2353 = vpop.f32.mrb[0].mxu0
        %v2354 = vpop.f32.mrb[0].mxu0
        %v2355 = vadd.f32 0.0, %v2354
        %v2356 = vpop.f32.mrb[0].mxu0
        %2357 = vmatprep.mubr.bf16.mxu0 0
        %2358 = vmatmul.mubr.bf16.gmra.mrb[0].mxu0 %v1026
        %v2359 = vpop.f32.mrb[0].mxu0
        %v2360 = vadd.f32 0.0, %v2359
        %v2361 = vpop.f32.mrb[0].mxu0
        %v2362 = vpop.f32.mrb[0].mxu0
        %v2363 = vadd.f32 0.0, %v2362
        %v2364 = vpop.f32.mrb[0].mxu0
        %2365 = vmatprep.mubr.bf16.mxu0 0
        %2366 = vmatmul.mubr.bf16.gmra.mrb[0].mxu0 %v1029
        %v2367 = vpop.f32.mrb[0].mxu0
        %v2368 = vadd.f32 0.0, %v2367
        %v2369 = vpop.f32.mrb[0].mxu0
        %v2370 = vpop.f32.mrb[0].mxu0
        %v2371 = vadd.f32 0.0, %v2370
        %v2372 = vpop.f32.mrb[0].mxu0
        %2373 = vmatprep.mubr.bf16.mxu0 0
        %2374 = vmatmul.mubr.bf16.gmra.mrb[0].mxu0 %v1032
        %v2375 = vpop.f32.mrb[0].mxu0
        %v2376 = vadd.f32 0.0, %v2375
        %v2377 = vpop.f32.mrb[0].mxu0
        %v2378 = vpop.f32.mrb[0].mxu0
        %v2379 = vadd.f32 0.0, %v2378
        %v2380 = vpop.f32.mrb[0].mxu0
        %2381 = vmatprep.mubr.bf16.mxu0 0
        %2382 = vmatmul.mubr.bf16.gmra.mrb[0].mxu0 %v1035
        %v2383 = vpop.f32.mrb[0].mxu0
        %v2384 = vadd.f32 0.0, %v2383
        %v2385 = vpop.f32.mrb[0].mxu0
        %v2386 = vpop.f32.mrb[0].mxu0
        %v2387 = vadd.f32 0.0, %v2386
        %v2388 = vpop.f32.mrb[0].mxu0
        %2389 = vmatprep.mubr.bf16.mxu0 0
        %2390 = vmatmul.mubr.bf16.gmra.mrb[0].mxu0 %v1038
        %v2391 = vpop.f32.mrb[0].mxu0
        %v2392 = vadd.f32 0.0, %v2391
        %v2393 = vpop.f32.mrb[0].mxu0
        %v2394 = vpop.f32.mrb[0].mxu0
        %v2395 = vadd.f32 0.0, %v2394
        %v2396 = vpop.f32.mrb[0].mxu0
        %2397 = vmatprep.mubr.bf16.mxu0 0
        %2398 = vmatmul.mubr.bf16.gmra.mrb[0].mxu0 %v1041
        %v2399 = vpop.f32.mrb[0].mxu0
        %v2400 = vadd.f32 0.0, %v2399
        %v2401 = vpop.f32.mrb[0].mxu0
        %v2402 = vpop.f32.mrb[0].mxu0
        %v2403 = vadd.f32 0.0, %v2402
        %v2404 = vpop.f32.mrb[0].mxu0
        %2405 = vmatprep.mubr.bf16.mxu0 0
        %2406 = vmatmul.mubr.bf16.gmra.mrb[0].mxu0 %v1044
        %v2407 = vpop.f32.mrb[0].mxu0
        %v2408 = vadd.f32 0.0, %v2407
        %v2409 = vpop.f32.mrb[0].mxu0
        %v2410 = vpop.f32.mrb[0].mxu0
        %v2411 = vadd.f32 0.0, %v2410
        %v2412 = vpop.f32.mrb[0].mxu0
        %2413 = vmatprep.mubr.bf16.mxu0 0
        %2414 = vmatmul.mubr.bf16.gmra.mrb[0].mxu0 %v1047
        %v2415 = vpop.f32.mrb[0].mxu0
        %v2416 = vadd.f32 0.0, %v2415
        %v2417 = vpop.f32.mrb[0].mxu0
        %v2418 = vpop.f32.mrb[0].mxu0
        %v2419 = vadd.f32 0.0, %v2418
        %v2420 = vpop.f32.mrb[0].mxu0
        %2421 = vmatprep.mubr.bf16.mxu0 0
        %2422 = vmatmul.mubr.bf16.gmra.mrb[0].mxu0 %v1050
        %v2423 = vpop.f32.mrb[0].mxu0
        %v2424 = vadd.f32 0.0, %v2423
        %v2425 = vpop.f32.mrb[0].mxu0
        %v2426 = vpop.f32.mrb[0].mxu0
        %v2427 = vadd.f32 0.0, %v2426
        %v2428 = vpop.f32.mrb[0].mxu0
        %2429 = vmatprep.mubr.bf16.mxu0 0
        %2430 = vmatmul.mubr.bf16.gmra.mrb[0].mxu0 %v1053
        %v2431 = vpop.f32.mrb[0].mxu0
        %v2432 = vadd.f32 0.0, %v2431
        %v2433 = vpop.f32.mrb[0].mxu0
        %v2434 = vpop.f32.mrb[0].mxu0
        %v2435 = vadd.f32 0.0, %v2434
        %v2436 = vpop.f32.mrb[0].mxu0
        %2437 = vmatprep.mubr.bf16.mxu0 0
        %2438 = vmatmul.mubr.bf16.gmra.mrb[0].mxu0 %v1648
        %v2439 = vpop.f32.mrb[0].mxu0
        %v2440 = vadd.f32 0.0, %v2439
        %v2441 = vpop.f32.mrb[0].mxu0
        %v2442 = vpop.f32.mrb[0].mxu0
        %v2443 = vadd.f32 0.0, %v2442
        %v2444 = vpop.f32.mrb[0].mxu0
        %2445 = vmatprep.mubr.bf16.mxu0 0
        %2446 = vmatmul.mubr.bf16.gmra.mrb[0].mxu0 %v2288
        %v2447 = vpop.f32.mrb[0].mxu0
        %v2448 = vadd.f32 0.0, %v2447
        %v2449 = vpop.f32.mrb[0].mxu0
        %v2450 = vpop.f32.mrb[0].mxu0
        %v2451 = vadd.f32 0.0, %v2450
        %v2452 = vpop.f32.mrb[0].mxu0
        %2453 = vdwg.mxu0
        %v2454 = vadd.f32 %v2250, %v2328
        %v2455 = vadd.f32 %v2251, %v2331
        %v2456 = vadd.f32 %v2252, %v2336
        %v2457 = vadd.f32 %v2253, %v2339
        %v2458 = vadd.f32 %v2254, %v2344
        %v2459 = vadd.f32 %v2255, %v2347
        %v2460 = vadd.f32 %v2256, %v2352
        %v2461 = vadd.f32 %v2257, %v2355
        %v2462 = vadd.f32 %v2258, %v2360
        %v2463 = vadd.f32 %v2259, %v2363
        %v2464 = vadd.f32 %v2260, %v2368
        %v2465 = vadd.f32 %v2261, %v2371
        %v2466 = vadd.f32 %v2262, %v2376
        %v2467 = vadd.f32 %v2263, %v2379
        %v2468 = vadd.f32 %v2264, %v2384
        %v2469 = vadd.f32 %v2265, %v2387
        %v2470 = vadd.f32 %v2266, %v2392
        %v2471 = vadd.f32 %v2267, %v2395
        %v2472 = vadd.f32 %v2268, %v2400
        %v2473 = vadd.f32 %v2269, %v2403
        %v2474 = vadd.f32 %v2270, %v2408
        %v2475 = vadd.f32 %v2271, %v2411
        %v2476 = vadd.f32 %v2272, %v2416
        %v2477 = vadd.f32 %v2273, %v2419
        %v2478 = vadd.f32 %v2274, %v2424
        %v2479 = vadd.f32 %v2275, %v2427
        %v2480 = vadd.f32 %v2276, %v2432
        %v2481 = vadd.f32 %v2277, %v2435
        %v2482 = vadd.f32 %v2278, %v2440
        %v2483 = vadd.f32 %v2279, %v2443
        %v2484 = vadd.f32 %v2280, %v2448
        %v2485 = vadd.f32 %v2281, %v2451
        %v2487 = vshrl.u32 %v266, 16
        %v2489 = vrot.slane %v2487, 4
        %v2490 = vshll.u32 %v266, 16
        %v2492 = vrot.slane %v2490, 5
        %v2493 = vor.u32 %v2489, %v2492
        %v2494 = vrot.slane %v2493, 4
        %v2496 = vshll.u32 %v267, 16
        %v2498 = vrot.slane %v2496, 5
        %v2499 = vsel %vm280, %v2494, %v2498
        %v2500 = vshrl.u32 %v267, 16
        %v2502 = vrot.slane %v2500, 4
        %v2503 = vor.u32 %v2502, %v2498
        %v2504 = vrot.slane %v2503, 4
        %v2506 = vshll.u32 %v268, 16
        %v2508 = vrot.slane %v2506, 5
        %v2509 = vsel %vm280, %v2504, %v2508
        %v2510 = vunpack.c.l.b16 %v2499
        %v2511 = vunpack.c.l.b16 %v2509
        %v2512 = vpack.c.b16 %v2511, %v2510
        %v2514 = vsel %vm713, %v2512, 0
        %v2517 = vsel %vm762, %v276, 0
        %2519 = vmatprep.subr.bf16.mxu0 0
        %2520 = vmatpush1.bf16.msra.mxu0 %v2517
        %2521 = vmatprep.subr.bf16.mxu0 0
        %2522 = vmatpush1.bf16.msra.mxu0 0
        %2523 = vmatprep.subr.bf16.mxu0 0
        %2524 = vmatpush1.bf16.msra.mxu0 0
        %2525 = vmatprep.subr.bf16.mxu0 0
        %2526 = vmatpush1.bf16.msra.mxu0 0
        %2527 = vmatprep.subr.bf16.mxu0 0
        %2528 = vmatpush1.bf16.msra.mxu0 0
        %2529 = vmatprep.subr.bf16.mxu0 0
        %2530 = vmatpush1.bf16.msra.mxu0 0
        %2531 = vmatprep.subr.bf16.mxu0 0
        %2532 = vmatpush1.bf16.msra.mxu0 0
        %2533 = vmatprep.subr.bf16.mxu0 0
        %2534 = vmatpush1.bf16.msra.mxu0 0
        %2535 = vmatprep.subr.bf16.mxu0 0
        %2536 = vmatpush1.bf16.msra.mxu0 0
        %2537 = vmatprep.subr.bf16.mxu0 0
        %2538 = vmatpush1.bf16.msra.mxu0 0
        %2539 = vmatprep.subr.bf16.mxu0 0
        %2540 = vmatpush1.bf16.msra.mxu0 0
        %2541 = vmatprep.subr.bf16.mxu0 0
        %2542 = vmatpush1.bf16.msra.mxu0 0
        %2543 = vmatprep.subr.bf16.mxu0 0
        %2544 = vmatpush1.bf16.msra.mxu0 0
        %2545 = vmatprep.subr.bf16.mxu0 0
        %2546 = vmatpush1.bf16.msra.mxu0 0
        %2547 = vmatprep.subr.bf16.mxu0 0
        %2548 = vmatpush1.bf16.msra.mxu0 0
        %2549 = vmatprep.subr.bf16.mxu0 0
        %2550 = vmatpush1.bf16.msra.mxu0 0
        %2551 = vmatprep.mubr.bf16.mxu0 0
        %2552 = vmatmul.mubr.bf16.gmra.mrb[0].mxu0 %v721
        %v2553 = vpop.f32.mrb[0].mxu0
        %v2554 = vadd.f32 0.0, %v2553
        %v2555 = vpop.f32.mrb[0].mxu0
        %v2556 = vpop.f32.mrb[0].mxu0
        %v2557 = vadd.f32 0.0, %v2556
        %v2558 = vpop.f32.mrb[0].mxu0
        %2559 = vmatprep.mubr.bf16.mxu0 0
        %2560 = vmatmul.mubr.bf16.gmra.mrb[0].mxu0 %v724
        %v2561 = vpop.f32.mrb[0].mxu0
        %v2562 = vadd.f32 0.0, %v2561
        %v2563 = vpop.f32.mrb[0].mxu0
        %v2564 = vpop.f32.mrb[0].mxu0
        %v2565 = vadd.f32 0.0, %v2564
        %v2566 = vpop.f32.mrb[0].mxu0
        %2567 = vmatprep.mubr.bf16.mxu0 0
        %2568 = vmatmul.mubr.bf16.gmra.mrb[0].mxu0 %v727
        %v2569 = vpop.f32.mrb[0].mxu0
        %v2570 = vadd.f32 0.0, %v2569
        %v2571 = vpop.f32.mrb[0].mxu0
        %v2572 = vpop.f32.mrb[0].mxu0
        %v2573 = vadd.f32 0.0, %v2572
        %v2574 = vpop.f32.mrb[0].mxu0
        %2575 = vmatprep.mubr.bf16.mxu0 0
        %2576 = vmatmul.mubr.bf16.gmra.mrb[0].mxu0 %v730
        %v2577 = vpop.f32.mrb[0].mxu0
        %v2578 = vadd.f32 0.0, %v2577
        %v2579 = vpop.f32.mrb[0].mxu0
        %v2580 = vpop.f32.mrb[0].mxu0
        %v2581 = vadd.f32 0.0, %v2580
        %v2582 = vpop.f32.mrb[0].mxu0
        %2583 = vmatprep.mubr.bf16.mxu0 0
        %2584 = vmatmul.mubr.bf16.gmra.mrb[0].mxu0 %v733
        %v2585 = vpop.f32.mrb[0].mxu0
        %v2586 = vadd.f32 0.0, %v2585
        %v2587 = vpop.f32.mrb[0].mxu0
        %v2588 = vpop.f32.mrb[0].mxu0
        %v2589 = vadd.f32 0.0, %v2588
        %v2590 = vpop.f32.mrb[0].mxu0
        %2591 = vmatprep.mubr.bf16.mxu0 0
        %2592 = vmatmul.mubr.bf16.gmra.mrb[0].mxu0 %v736
        %v2593 = vpop.f32.mrb[0].mxu0
        %v2594 = vadd.f32 0.0, %v2593
        %v2595 = vpop.f32.mrb[0].mxu0
        %v2596 = vpop.f32.mrb[0].mxu0
        %v2597 = vadd.f32 0.0, %v2596
        %v2598 = vpop.f32.mrb[0].mxu0
        %2599 = vmatprep.mubr.bf16.mxu0 0
        %2600 = vmatmul.mubr.bf16.gmra.mrb[0].mxu0 %v739
        %v2601 = vpop.f32.mrb[0].mxu0
        %v2602 = vadd.f32 0.0, %v2601
        %v2603 = vpop.f32.mrb[0].mxu0
        %v2604 = vpop.f32.mrb[0].mxu0
        %v2605 = vadd.f32 0.0, %v2604
        %v2606 = vpop.f32.mrb[0].mxu0
        %2607 = vmatprep.mubr.bf16.mxu0 0
        %2608 = vmatmul.mubr.bf16.gmra.mrb[0].mxu0 %v742
        %v2609 = vpop.f32.mrb[0].mxu0
        %v2610 = vadd.f32 0.0, %v2609
        %v2611 = vpop.f32.mrb[0].mxu0
        %v2612 = vpop.f32.mrb[0].mxu0
        %v2613 = vadd.f32 0.0, %v2612
        %v2614 = vpop.f32.mrb[0].mxu0
        %2615 = vmatprep.mubr.bf16.mxu0 0
        %2616 = vmatmul.mubr.bf16.gmra.mrb[0].mxu0 %v745
        %v2617 = vpop.f32.mrb[0].mxu0
        %v2618 = vadd.f32 0.0, %v2617
        %v2619 = vpop.f32.mrb[0].mxu0
        %v2620 = vpop.f32.mrb[0].mxu0
        %v2621 = vadd.f32 0.0, %v2620
        %v2622 = vpop.f32.mrb[0].mxu0
        %2623 = vmatprep.mubr.bf16.mxu0 0
        %2624 = vmatmul.mubr.bf16.gmra.mrb[0].mxu0 %v748
        %v2625 = vpop.f32.mrb[0].mxu0
        %v2626 = vadd.f32 0.0, %v2625
        %v2627 = vpop.f32.mrb[0].mxu0
        %v2628 = vpop.f32.mrb[0].mxu0
        %v2629 = vadd.f32 0.0, %v2628
        %v2630 = vpop.f32.mrb[0].mxu0
        %2631 = vmatprep.mubr.bf16.mxu0 0
        %2632 = vmatmul.mubr.bf16.gmra.mrb[0].mxu0 %v751
        %v2633 = vpop.f32.mrb[0].mxu0
        %v2634 = vadd.f32 0.0, %v2633
        %v2635 = vpop.f32.mrb[0].mxu0
        %v2636 = vpop.f32.mrb[0].mxu0
        %v2637 = vadd.f32 0.0, %v2636
        %v2638 = vpop.f32.mrb[0].mxu0
        %2639 = vmatprep.mubr.bf16.mxu0 0
        %2640 = vmatmul.mubr.bf16.gmra.mrb[0].mxu0 %v754
        %v2641 = vpop.f32.mrb[0].mxu0
        %v2642 = vadd.f32 0.0, %v2641
        %v2643 = vpop.f32.mrb[0].mxu0
        %v2644 = vpop.f32.mrb[0].mxu0
        %v2645 = vadd.f32 0.0, %v2644
        %v2646 = vpop.f32.mrb[0].mxu0
        %2647 = vmatprep.mubr.bf16.mxu0 0
        %2648 = vmatmul.mubr.bf16.gmra.mrb[0].mxu0 %v757
        %v2649 = vpop.f32.mrb[0].mxu0
        %v2650 = vadd.f32 0.0, %v2649
        %v2651 = vpop.f32.mrb[0].mxu0
        %v2652 = vpop.f32.mrb[0].mxu0
        %v2653 = vadd.f32 0.0, %v2652
        %v2654 = vpop.f32.mrb[0].mxu0
        %2655 = vmatprep.mubr.bf16.mxu0 0
        %2656 = vmatmul.mubr.bf16.gmra.mrb[0].mxu0 %v760
        %v2657 = vpop.f32.mrb[0].mxu0
        %v2658 = vadd.f32 0.0, %v2657
        %v2659 = vpop.f32.mrb[0].mxu0
        %v2660 = vpop.f32.mrb[0].mxu0
        %v2661 = vadd.f32 0.0, %v2660
        %v2662 = vpop.f32.mrb[0].mxu0
        %2663 = vmatprep.mubr.bf16.mxu0 0
        %2664 = vmatmul.mubr.bf16.gmra.mrb[0].mxu0 %v1874
        %v2665 = vpop.f32.mrb[0].mxu0
        %v2666 = vadd.f32 0.0, %v2665
        %v2667 = vpop.f32.mrb[0].mxu0
        %v2668 = vpop.f32.mrb[0].mxu0
        %v2669 = vadd.f32 0.0, %v2668
        %v2670 = vpop.f32.mrb[0].mxu0
        %2671 = vmatprep.mubr.bf16.mxu0 0
        %2672 = vmatmul.mubr.bf16.gmra.mrb[0].mxu0 %v2514
        %v2673 = vpop.f32.mrb[0].mxu0
        %v2674 = vadd.f32 0.0, %v2673
        %v2675 = vpop.f32.mrb[0].mxu0
        %v2676 = vpop.f32.mrb[0].mxu0
        %v2677 = vadd.f32 0.0, %v2676
        %v2678 = vpop.f32.mrb[0].mxu0
        %2679 = vdwg.mxu0
        %v2680 = vadd.f32 %v2454, %v2554
        %v2681 = vadd.f32 %v2455, %v2557
        %v2682 = vadd.f32 %v2456, %v2562
        %v2683 = vadd.f32 %v2457, %v2565
        %v2684 = vadd.f32 %v2458, %v2570
        %v2685 = vadd.f32 %v2459, %v2573
        %v2686 = vadd.f32 %v2460, %v2578
        %v2687 = vadd.f32 %v2461, %v2581
        %v2688 = vadd.f32 %v2462, %v2586
        %v2689 = vadd.f32 %v2463, %v2589
        %v2690 = vadd.f32 %v2464, %v2594
        %v2691 = vadd.f32 %v2465, %v2597
        %v2692 = vadd.f32 %v2466, %v2602
        %v2693 = vadd.f32 %v2467, %v2605
        %v2694 = vadd.f32 %v2468, %v2610
        %v2695 = vadd.f32 %v2469, %v2613
        %v2696 = vadd.f32 %v2470, %v2618
        %v2697 = vadd.f32 %v2471, %v2621
        %v2698 = vadd.f32 %v2472, %v2626
        %v2699 = vadd.f32 %v2473, %v2629
        %v2700 = vadd.f32 %v2474, %v2634
        %v2701 = vadd.f32 %v2475, %v2637
        %v2702 = vadd.f32 %v2476, %v2642
        %v2703 = vadd.f32 %v2477, %v2645
        %v2704 = vadd.f32 %v2478, %v2650
        %v2705 = vadd.f32 %v2479, %v2653
        %v2706 = vadd.f32 %v2480, %v2658
        %v2707 = vadd.f32 %v2481, %v2661
        %v2708 = vadd.f32 %v2482, %v2666
        %v2709 = vadd.f32 %v2483, %v2669
        %v2710 = vadd.f32 %v2484, %v2674
        %v2711 = vadd.f32 %v2485, %v2677
        %v2713 = vrot.slane %v266, 5
        %v2714 = vrot.slane %v2713, 4
        %v2715 = vrot.slane %v267, 5
        %v2716 = vsel %vm1237, %v2714, %v2715
        %v2717 = vrot.slane %v2715, 4
        %v2718 = vrot.slane %v268, 5
        %v2719 = vsel %vm1237, %v2717, %v2718
        %v2720 = vunpack.c.l.b16 %v2716
        %v2721 = vunpack.c.l.b16 %v2719
        %v2722 = vpack.c.b16 %v2721, %v2720
        %v2724 = vsel %vm713, %v2722, 0
        %v2727 = vsel %vm762, %v277, 0
        %2729 = vmatprep.subr.bf16.mxu0 0
        %2730 = vmatpush1.bf16.msra.mxu0 %v2727
        %2731 = vmatprep.subr.bf16.mxu0 0
        %2732 = vmatpush1.bf16.msra.mxu0 0
        %2733 = vmatprep.subr.bf16.mxu0 0
        %2734 = vmatpush1.bf16.msra.mxu0 0
        %2735 = vmatprep.subr.bf16.mxu0 0
        %2736 = vmatpush1.bf16.msra.mxu0 0
        %2737 = vmatprep.subr.bf16.mxu0 0
        %2738 = vmatpush1.bf16.msra.mxu0 0
        %2739 = vmatprep.subr.bf16.mxu0 0
        %2740 = vmatpush1.bf16.msra.mxu0 0
        %2741 = vmatprep.subr.bf16.mxu0 0
        %2742 = vmatpush1.bf16.msra.mxu0 0
        %2743 = vmatprep.subr.bf16.mxu0 0
        %2744 = vmatpush1.bf16.msra.mxu0 0
        %2745 = vmatprep.subr.bf16.mxu0 0
        %2746 = vmatpush1.bf16.msra.mxu0 0
        %2747 = vmatprep.subr.bf16.mxu0 0
        %2748 = vmatpush1.bf16.msra.mxu0 0
        %2749 = vmatprep.subr.bf16.mxu0 0
        %2750 = vmatpush1.bf16.msra.mxu0 0
        %2751 = vmatprep.subr.bf16.mxu0 0
        %2752 = vmatpush1.bf16.msra.mxu0 0
        %2753 = vmatprep.subr.bf16.mxu0 0
        %2754 = vmatpush1.bf16.msra.mxu0 0
        %2755 = vmatprep.subr.bf16.mxu0 0
        %2756 = vmatpush1.bf16.msra.mxu0 0
        %2757 = vmatprep.subr.bf16.mxu0 0
        %2758 = vmatpush1.bf16.msra.mxu0 0
        %2759 = vmatprep.subr.bf16.mxu0 0
        %2760 = vmatpush1.bf16.msra.mxu0 0
        %2761 = vmatprep.mubr.bf16.mxu0 0
        %2762 = vmatmul.mubr.bf16.gmra.mrb[0].mxu0 %v1405
        %v2763 = vpop.f32.mrb[0].mxu0
        %v2764 = vadd.f32 0.0, %v2763
        %v2765 = vpop.f32.mrb[0].mxu0
        %v2766 = vpop.f32.mrb[0].mxu0
        %v2767 = vadd.f32 0.0, %v2766
        %v2768 = vpop.f32.mrb[0].mxu0
        %2769 = vmatprep.mubr.bf16.mxu0 0
        %2770 = vmatmul.mubr.bf16.gmra.mrb[0].mxu0 %v1408
        %v2771 = vpop.f32.mrb[0].mxu0
        %v2772 = vadd.f32 0.0, %v2771
        %v2773 = vpop.f32.mrb[0].mxu0
        %v2774 = vpop.f32.mrb[0].mxu0
        %v2775 = vadd.f32 0.0, %v2774
        %v2776 = vpop.f32.mrb[0].mxu0
        %2777 = vmatprep.mubr.bf16.mxu0 0
        %2778 = vmatmul.mubr.bf16.gmra.mrb[0].mxu0 %v1411
        %v2779 = vpop.f32.mrb[0].mxu0
        %v2780 = vadd.f32 0.0, %v2779
        %v2781 = vpop.f32.mrb[0].mxu0
        %v2782 = vpop.f32.mrb[0].mxu0
        %v2783 = vadd.f32 0.0, %v2782
        %v2784 = vpop.f32.mrb[0].mxu0
        %2785 = vmatprep.mubr.bf16.mxu0 0
        %2786 = vmatmul.mubr.bf16.gmra.mrb[0].mxu0 %v1414
        %v2787 = vpop.f32.mrb[0].mxu0
        %v2788 = vadd.f32 0.0, %v2787
        %v2789 = vpop.f32.mrb[0].mxu0
        %v2790 = vpop.f32.mrb[0].mxu0
        %v2791 = vadd.f32 0.0, %v2790
        %v2792 = vpop.f32.mrb[0].mxu0
        %2793 = vmatprep.mubr.bf16.mxu0 0
        %2794 = vmatmul.mubr.bf16.gmra.mrb[0].mxu0 %v1417
        %v2795 = vpop.f32.mrb[0].mxu0
        %v2796 = vadd.f32 0.0, %v2795
        %v2797 = vpop.f32.mrb[0].mxu0
        %v2798 = vpop.f32.mrb[0].mxu0
        %v2799 = vadd.f32 0.0, %v2798
        %v2800 = vpop.f32.mrb[0].mxu0
        %2801 = vmatprep.mubr.bf16.mxu0 0
        %2802 = vmatmul.mubr.bf16.gmra.mrb[0].mxu0 %v1420
        %v2803 = vpop.f32.mrb[0].mxu0
        %v2804 = vadd.f32 0.0, %v2803
        %v2805 = vpop.f32.mrb[0].mxu0
        %v2806 = vpop.f32.mrb[0].mxu0
        %v2807 = vadd.f32 0.0, %v2806
        %v2808 = vpop.f32.mrb[0].mxu0
        %2809 = vmatprep.mubr.bf16.mxu0 0
        %2810 = vmatmul.mubr.bf16.gmra.mrb[0].mxu0 %v1423
        %v2811 = vpop.f32.mrb[0].mxu0
        %v2812 = vadd.f32 0.0, %v2811
        %v2813 = vpop.f32.mrb[0].mxu0
        %v2814 = vpop.f32.mrb[0].mxu0
        %v2815 = vadd.f32 0.0, %v2814
        %v2816 = vpop.f32.mrb[0].mxu0
        %2817 = vmatprep.mubr.bf16.mxu0 0
        %2818 = vmatmul.mubr.bf16.gmra.mrb[0].mxu0 %v1426
        %v2819 = vpop.f32.mrb[0].mxu0
        %v2820 = vadd.f32 0.0, %v2819
        %v2821 = vpop.f32.mrb[0].mxu0
        %v2822 = vpop.f32.mrb[0].mxu0
        %v2823 = vadd.f32 0.0, %v2822
        %v2824 = vpop.f32.mrb[0].mxu0
        %2825 = vmatprep.mubr.bf16.mxu0 0
        %2826 = vmatmul.mubr.bf16.gmra.mrb[0].mxu0 %v1429
        %v2827 = vpop.f32.mrb[0].mxu0
        %v2828 = vadd.f32 0.0, %v2827
        %v2829 = vpop.f32.mrb[0].mxu0
        %v2830 = vpop.f32.mrb[0].mxu0
        %v2831 = vadd.f32 0.0, %v2830
        %v2832 = vpop.f32.mrb[0].mxu0
        %2833 = vmatprep.mubr.bf16.mxu0 0
        %2834 = vmatmul.mubr.bf16.gmra.mrb[0].mxu0 %v1432
        %v2835 = vpop.f32.mrb[0].mxu0
        %v2836 = vadd.f32 0.0, %v2835
        %v2837 = vpop.f32.mrb[0].mxu0
        %v2838 = vpop.f32.mrb[0].mxu0
        %v2839 = vadd.f32 0.0, %v2838
        %v2840 = vpop.f32.mrb[0].mxu0
        %2841 = vmatprep.mubr.bf16.mxu0 0
        %2842 = vmatmul.mubr.bf16.gmra.mrb[0].mxu0 %v1435
        %v2843 = vpop.f32.mrb[0].mxu0
        %v2844 = vadd.f32 0.0, %v2843
        %v2845 = vpop.f32.mrb[0].mxu0
        %v2846 = vpop.f32.mrb[0].mxu0
        %v2847 = vadd.f32 0.0, %v2846
        %v2848 = vpop.f32.mrb[0].mxu0
        %2849 = vmatprep.mubr.bf16.mxu0 0
        %2850 = vmatmul.mubr.bf16.gmra.mrb[0].mxu0 %v1438
        %v2851 = vpop.f32.mrb[0].mxu0
        %v2852 = vadd.f32 0.0, %v2851
        %v2853 = vpop.f32.mrb[0].mxu0
        %v2854 = vpop.f32.mrb[0].mxu0
        %v2855 = vadd.f32 0.0, %v2854
        %v2856 = vpop.f32.mrb[0].mxu0
        %2857 = vmatprep.mubr.bf16.mxu0 0
        %2858 = vmatmul.mubr.bf16.gmra.mrb[0].mxu0 %v1441
        %v2859 = vpop.f32.mrb[0].mxu0
        %v2860 = vadd.f32 0.0, %v2859
        %v2861 = vpop.f32.mrb[0].mxu0
        %v2862 = vpop.f32.mrb[0].mxu0
        %v2863 = vadd.f32 0.0, %v2862
        %v2864 = vpop.f32.mrb[0].mxu0
        %2865 = vmatprep.mubr.bf16.mxu0 0
        %2866 = vmatmul.mubr.bf16.gmra.mrb[0].mxu0 %v1444
        %v2867 = vpop.f32.mrb[0].mxu0
        %v2868 = vadd.f32 0.0, %v2867
        %v2869 = vpop.f32.mrb[0].mxu0
        %v2870 = vpop.f32.mrb[0].mxu0
        %v2871 = vadd.f32 0.0, %v2870
        %v2872 = vpop.f32.mrb[0].mxu0
        %2873 = vmatprep.mubr.bf16.mxu0 0
        %2874 = vmatmul.mubr.bf16.gmra.mrb[0].mxu0 %v2084
        %v2875 = vpop.f32.mrb[0].mxu0
        %v2876 = vadd.f32 0.0, %v2875
        %v2877 = vpop.f32.mrb[0].mxu0
        %v2878 = vpop.f32.mrb[0].mxu0
        %v2879 = vadd.f32 0.0, %v2878
        %v2880 = vpop.f32.mrb[0].mxu0
        %2881 = vmatprep.mubr.bf16.mxu0 0
        %2882 = vmatmul.mubr.bf16.gmra.mrb[0].mxu0 %v2724
        %v2883 = vpop.f32.mrb[0].mxu0
        %v2884 = vadd.f32 0.0, %v2883
        %v2885 = vpop.f32.mrb[0].mxu0
        %v2886 = vpop.f32.mrb[0].mxu0
        %v2887 = vadd.f32 0.0, %v2886
        %v2888 = vpop.f32.mrb[0].mxu0
        %2889 = vdwg.mxu0
        %v2890 = vadd.f32 %v2680, %v2764
        %v2891 = vadd.f32 %v2681, %v2767
        %v2892 = vadd.f32 %v2682, %v2772
        %v2893 = vadd.f32 %v2683, %v2775
        %v2894 = vadd.f32 %v2684, %v2780
        %v2895 = vadd.f32 %v2685, %v2783
        %v2896 = vadd.f32 %v2686, %v2788
        %v2897 = vadd.f32 %v2687, %v2791
        %v2898 = vadd.f32 %v2688, %v2796
        %v2899 = vadd.f32 %v2689, %v2799
        %v2900 = vadd.f32 %v2690, %v2804
        %v2901 = vadd.f32 %v2691, %v2807
        %v2902 = vadd.f32 %v2692, %v2812
        %v2903 = vadd.f32 %v2693, %v2815
        %v2904 = vadd.f32 %v2694, %v2820
        %v2905 = vadd.f32 %v2695, %v2823
        %v2906 = vadd.f32 %v2696, %v2828
        %v2907 = vadd.f32 %v2697, %v2831
        %v2908 = vadd.f32 %v2698, %v2836
        %v2909 = vadd.f32 %v2699, %v2839
        %v2910 = vadd.f32 %v2700, %v2844
        %v2911 = vadd.f32 %v2701, %v2847
        %v2912 = vadd.f32 %v2702, %v2852
        %v2913 = vadd.f32 %v2703, %v2855
        %v2914 = vadd.f32 %v2704, %v2860
        %v2915 = vadd.f32 %v2705, %v2863
        %v2916 = vadd.f32 %v2706, %v2868
        %v2917 = vadd.f32 %v2707, %v2871
        %v2918 = vadd.f32 %v2708, %v2876
        %v2919 = vadd.f32 %v2709, %v2879
        %v2920 = vadd.f32 %v2710, %v2884
        %v2921 = vadd.f32 %v2711, %v2887
        %v2922 = vadd.f32 %v2890, %v2891
        %v2923 = vadd.f32 %v2922, %v2892
        %v2924 = vadd.f32 %v2923, %v2893
        %v2925 = vadd.f32 %v2924, %v2894
        %v2926 = vadd.f32 %v2925, %v2895
        %v2927 = vadd.f32 %v2926, %v2896
        %v2928 = vadd.f32 %v2927, %v2897
        %v2929 = vadd.f32 %v2928, %v2898
        %v2930 = vadd.f32 %v2929, %v2899
        %v2931 = vadd.f32 %v2930, %v2900
        %v2932 = vadd.f32 %v2931, %v2901
        %v2933 = vadd.f32 %v2932, %v2902
        %v2934 = vadd.f32 %v2933, %v2903
        %v2935 = vadd.f32 %v2934, %v2904
        %v2936 = vadd.f32 %v2935, %v2905
        %v2937 = vadd.f32 %v2936, %v2906
        %v2938 = vadd.f32 %v2937, %v2907
        %v2939 = vadd.f32 %v2938, %v2908
        %v2940 = vadd.f32 %v2939, %v2909
        %v2941 = vadd.f32 %v2940, %v2910
        %v2942 = vadd.f32 %v2941, %v2911
        %v2943 = vadd.f32 %v2942, %v2912
        %v2944 = vadd.f32 %v2943, %v2913
        %v2945 = vadd.f32 %v2944, %v2914
        %v2946 = vadd.f32 %v2945, %v2915
        %v2947 = vadd.f32 %v2946, %v2916
        %v2948 = vadd.f32 %v2947, %v2917
        %v2949 = vadd.f32 %v2948, %v2918
        %v2950 = vadd.f32 %v2949, %v2919
        %v2951 = vadd.f32 %v2950, %v2920
        %v2952 = vadd.f32 %v2951, %v2921
        %v2953 = vrot.slane %v2952, 4
        %v2954 = vadd.f32 %v2952, %v2953
        %v2955 = vrot.slane %v2954, 2
        %v2956 = vadd.f32 %v2954, %v2955
        %v2957 = vrot.slane %v2956, 1
        %v2958 = vadd.f32 %v2956, %v2957
        %v2959 = vmul.f32 %v2890, %v2890
        %v2960 = vmul.f32 %v2891, %v2891
        %v2961 = vmul.f32 %v2892, %v2892
        %v2962 = vmul.f32 %v2893, %v2893
        %v2963 = vmul.f32 %v2894, %v2894
        %v2964 = vmul.f32 %v2895, %v2895
        %v2965 = vmul.f32 %v2896, %v2896
        %v2966 = vmul.f32 %v2897, %v2897
        %v2967 = vmul.f32 %v2898, %v2898
        %v2968 = vmul.f32 %v2899, %v2899
        %v2969 = vmul.f32 %v2900, %v2900
        %v2970 = vmul.f32 %v2901, %v2901
        %v2971 = vmul.f32 %v2902, %v2902
        %v2972 = vmul.f32 %v2903, %v2903
        %v2973 = vmul.f32 %v2904, %v2904
        %v2974 = vmul.f32 %v2905, %v2905
        %v2975 = vmul.f32 %v2906, %v2906
        %v2976 = vmul.f32 %v2907, %v2907
        %v2977 = vmul.f32 %v2908, %v2908
        %v2978 = vmul.f32 %v2909, %v2909
        %v2979 = vmul.f32 %v2910, %v2910
        %v2980 = vmul.f32 %v2911, %v2911
        %v2981 = vmul.f32 %v2912, %v2912
        %v2982 = vmul.f32 %v2913, %v2913
        %v2983 = vmul.f32 %v2914, %v2914
        %v2984 = vmul.f32 %v2915, %v2915
        %v2985 = vmul.f32 %v2916, %v2916
        %v2986 = vmul.f32 %v2917, %v2917
        %v2987 = vmul.f32 %v2918, %v2918
        %v2988 = vmul.f32 %v2919, %v2919
        %v2989 = vmul.f32 %v2920, %v2920
        %v2990 = vmul.f32 %v2921, %v2921
        %v2991 = vadd.f32 %v2959, %v2960
        %v2992 = vadd.f32 %v2991, %v2961
        %v2993 = vadd.f32 %v2992, %v2962
        %v2994 = vadd.f32 %v2993, %v2963
        %v2995 = vadd.f32 %v2994, %v2964
        %v2996 = vadd.f32 %v2995, %v2965
        %v2997 = vadd.f32 %v2996, %v2966
        %v2998 = vadd.f32 %v2997, %v2967
        %v2999 = vadd.f32 %v2998, %v2968
        %v3000 = vadd.f32 %v2999, %v2969
        %v3001 = vadd.f32 %v3000, %v2970
        %v3002 = vadd.f32 %v3001, %v2971
        %v3003 = vadd.f32 %v3002, %v2972
        %v3004 = vadd.f32 %v3003, %v2973
        %v3005 = vadd.f32 %v3004, %v2974
        %v3006 = vadd.f32 %v3005, %v2975
        %v3007 = vadd.f32 %v3006, %v2976
        %v3008 = vadd.f32 %v3007, %v2977
        %v3009 = vadd.f32 %v3008, %v2978
        %v3010 = vadd.f32 %v3009, %v2979
        %v3011 = vadd.f32 %v3010, %v2980
        %v3012 = vadd.f32 %v3011, %v2981
        %v3013 = vadd.f32 %v3012, %v2982
        %v3014 = vadd.f32 %v3013, %v2983
        %v3015 = vadd.f32 %v3014, %v2984
        %v3016 = vadd.f32 %v3015, %v2985
        %v3017 = vadd.f32 %v3016, %v2986
        %v3018 = vadd.f32 %v3017, %v2987
        %v3019 = vadd.f32 %v3018, %v2988
        %v3020 = vadd.f32 %v3019, %v2989
        %v3021 = vadd.f32 %v3020, %v2990
        %v3022 = vrot.slane %v3021, 4
        %v3023 = vadd.f32 %v3021, %v3022
        %v3024 = vrot.slane %v3023, 2
        %v3025 = vadd.f32 %v3023, %v3024
        %v3026 = vrot.slane %v3025, 1
        %v3027 = vadd.f32 %v3025, %v3026
        %vm3028 = vcmask 1040384
        %v3029 = vsel %vm3028, %v2958, %v3027
        %3030 = vst [vmem:[%s208] sm:$0x3] %v3029
        %v3063 = vcombine.high %v2890, %v2890
        %v3065 = vunpack.c.l.s4 1983009808
        %v3066 = vunpack.c.0.s8 %v3065
        %v3067 = vlaneseq
        %v3068 = vshrl.u32 %v3067, 7
        %v3069 = vsub.s32 %v3066, %v3068
        %v3070 = vrot.slane %v2890, %v3069
        %v3072 = vunpack.c.l.s4 1983009808
        %v3073 = vunpack.c.0.s8 %v3072
        %v3074 = vlaneseq
        %v3075 = vshrl.u32 %v3074, 7
        %v3076 = vsub.s32 %v3073, %v3075
        %v3077 = vrot.slane %v3063, %v3076
        %v3078 = vcombine.high %v3070, %v3070
        %v3079 = vcombine.high %v3077, %v3077
        %v3080 = vcombine.high %v2891, %v2891
        %v3082 = vunpack.c.l.s4 1983009808
        %v3083 = vunpack.c.0.s8 %v3082
        %v3084 = vlaneseq
        %v3085 = vshrl.u32 %v3084, 7
        %v3086 = vsub.s32 %v3083, %v3085
        %v3087 = vrot.slane %v2891, %v3086
        %v3089 = vunpack.c.l.s4 1983009808
        %v3090 = vunpack.c.0.s8 %v3089
        %v3091 = vlaneseq
        %v3092 = vshrl.u32 %v3091, 7
        %v3093 = vsub.s32 %v3090, %v3092
        %v3094 = vrot.slane %v3080, %v3093
        %v3095 = vcombine.high %v3087, %v3087
        %v3096 = vcombine.high %v3094, %v3094
        %v3097 = vcombine.high %v2892, %v2892
        %v3099 = vunpack.c.l.s4 1983009808
        %v3100 = vunpack.c.0.s8 %v3099
        %v3101 = vlaneseq
        %v3102 = vshrl.u32 %v3101, 7
        %v3103 = vsub.s32 %v3100, %v3102
        %v3104 = vrot.slane %v2892, %v3103
        %v3106 = vunpack.c.l.s4 1983009808
        %v3107 = vunpack.c.0.s8 %v3106
        %v3108 = vlaneseq
        %v3109 = vshrl.u32 %v3108, 7
        %v3110 = vsub.s32 %v3107, %v3109
        %v3111 = vrot.slane %v3097, %v3110
        %v3112 = vcombine.high %v3104, %v3104
        %v3113 = vcombine.high %v3111, %v3111
        %v3114 = vcombine.high %v2893, %v2893
        %v3116 = vunpack.c.l.s4 1983009808
        %v3117 = vunpack.c.0.s8 %v3116
        %v3118 = vlaneseq
        %v3119 = vshrl.u32 %v3118, 7
        %v3120 = vsub.s32 %v3117, %v3119
        %v3121 = vrot.slane %v2893, %v3120
        %v3123 = vunpack.c.l.s4 1983009808
        %v3124 = vunpack.c.0.s8 %v3123
        %v3125 = vlaneseq
        %v3126 = vshrl.u32 %v3125, 7
        %v3127 = vsub.s32 %v3124, %v3126
        %v3128 = vrot.slane %v3114, %v3127
        %v3129 = vcombine.high %v3121, %v3121
        %v3130 = vcombine.high %v3128, %v3128
        %v3131 = vcombine.high %v2894, %v2894
        %v3133 = vunpack.c.l.s4 1983009808
        %v3134 = vunpack.c.0.s8 %v3133
        %v3135 = vlaneseq
        %v3136 = vshrl.u32 %v3135, 7
        %v3137 = vsub.s32 %v3134, %v3136
        %v3138 = vrot.slane %v2894, %v3137
        %v3140 = vunpack.c.l.s4 1983009808
        %v3141 = vunpack.c.0.s8 %v3140
        %v3142 = vlaneseq
        %v3143 = vshrl.u32 %v3142, 7
        %v3144 = vsub.s32 %v3141, %v3143
        %v3145 = vrot.slane %v3131, %v3144
        %v3146 = vcombine.high %v3138, %v3138
        %v3147 = vcombine.high %v3145, %v3145
        %v3148 = vcombine.high %v2895, %v2895
        %v3150 = vunpack.c.l.s4 1983009808
        %v3151 = vunpack.c.0.s8 %v3150
        %v3152 = vlaneseq
        %v3153 = vshrl.u32 %v3152, 7
        %v3154 = vsub.s32 %v3151, %v3153
        %v3155 = vrot.slane %v2895, %v3154
        %v3157 = vunpack.c.l.s4 1983009808
        %v3158 = vunpack.c.0.s8 %v3157
        %v3159 = vlaneseq
        %v3160 = vshrl.u32 %v3159, 7
        %v3161 = vsub.s32 %v3158, %v3160
        %v3162 = vrot.slane %v3148, %v3161
        %v3163 = vcombine.high %v3155, %v3155
        %v3164 = vcombine.high %v3162, %v3162
        %v3165 = vcombine.high %v2896, %v2896
        %v3167 = vunpack.c.l.s4 1983009808
        %v3168 = vunpack.c.0.s8 %v3167
        %v3169 = vlaneseq
        %v3170 = vshrl.u32 %v3169, 7
        %v3171 = vsub.s32 %v3168, %v3170
        %v3172 = vrot.slane %v2896, %v3171
        %v3174 = vunpack.c.l.s4 1983009808
        %v3175 = vunpack.c.0.s8 %v3174
        %v3176 = vlaneseq
        %v3177 = vshrl.u32 %v3176, 7
        %v3178 = vsub.s32 %v3175, %v3177
        %v3179 = vrot.slane %v3165, %v3178
        %v3180 = vcombine.high %v3172, %v3172
        %v3181 = vcombine.high %v3179, %v3179
        %v3182 = vcombine.high %v2897, %v2897
        %v3184 = vunpack.c.l.s4 1983009808
        %v3185 = vunpack.c.0.s8 %v3184
        %v3186 = vlaneseq
        %v3187 = vshrl.u32 %v3186, 7
        %v3188 = vsub.s32 %v3185, %v3187
        %v3189 = vrot.slane %v2897, %v3188
        %v3191 = vunpack.c.l.s4 1983009808
        %v3192 = vunpack.c.0.s8 %v3191
        %v3193 = vlaneseq
        %v3194 = vshrl.u32 %v3193, 7
        %v3195 = vsub.s32 %v3192, %v3194
        %v3196 = vrot.slane %v3182, %v3195
        %v3197 = vcombine.high %v3189, %v3189
        %v3198 = vcombine.high %v3196, %v3196
        %v3199 = vcombine.high %v2898, %v2898
        %v3201 = vunpack.c.l.s4 1983009808
        %v3202 = vunpack.c.0.s8 %v3201
        %v3203 = vlaneseq
        %v3204 = vshrl.u32 %v3203, 7
        %v3205 = vsub.s32 %v3202, %v3204
        %v3206 = vrot.slane %v2898, %v3205
        %v3208 = vunpack.c.l.s4 1983009808
        %v3209 = vunpack.c.0.s8 %v3208
        %v3210 = vlaneseq
        %v3211 = vshrl.u32 %v3210, 7
        %v3212 = vsub.s32 %v3209, %v3211
        %v3213 = vrot.slane %v3199, %v3212
        %v3214 = vcombine.high %v3206, %v3206
        %v3215 = vcombine.high %v3213, %v3213
        %v3216 = vcombine.high %v2899, %v2899
        %v3218 = vunpack.c.l.s4 1983009808
        %v3219 = vunpack.c.0.s8 %v3218
        %v3220 = vlaneseq
        %v3221 = vshrl.u32 %v3220, 7
        %v3222 = vsub.s32 %v3219, %v3221
        %v3223 = vrot.slane %v2899, %v3222
        %v3225 = vunpack.c.l.s4 1983009808
        %v3226 = vunpack.c.0.s8 %v3225
        %v3227 = vlaneseq
        %v3228 = vshrl.u32 %v3227, 7
        %v3229 = vsub.s32 %v3226, %v3228
        %v3230 = vrot.slane %v3216, %v3229
        %v3231 = vcombine.high %v3223, %v3223
        %v3232 = vcombine.high %v3230, %v3230
        %v3233 = vcombine.high %v2900, %v2900
        %v3235 = vunpack.c.l.s4 1983009808
        %v3236 = vunpack.c.0.s8 %v3235
        %v3237 = vlaneseq
        %v3238 = vshrl.u32 %v3237, 7
        %v3239 = vsub.s32 %v3236, %v3238
        %v3240 = vrot.slane %v2900, %v3239
        %v3242 = vunpack.c.l.s4 1983009808
        %v3243 = vunpack.c.0.s8 %v3242
        %v3244 = vlaneseq
        %v3245 = vshrl.u32 %v3244, 7
        %v3246 = vsub.s32 %v3243, %v3245
        %v3247 = vrot.slane %v3233, %v3246
        %v3248 = vcombine.high %v3240, %v3240
        %v3249 = vcombine.high %v3247, %v3247
        %v3250 = vcombine.high %v2901, %v2901
        %v3252 = vunpack.c.l.s4 1983009808
        %v3253 = vunpack.c.0.s8 %v3252
        %v3254 = vlaneseq
        %v3255 = vshrl.u32 %v3254, 7
        %v3256 = vsub.s32 %v3253, %v3255
        %v3257 = vrot.slane %v2901, %v3256
        %v3259 = vunpack.c.l.s4 1983009808
        %v3260 = vunpack.c.0.s8 %v3259
        %v3261 = vlaneseq
        %v3262 = vshrl.u32 %v3261, 7
        %v3263 = vsub.s32 %v3260, %v3262
        %v3264 = vrot.slane %v3250, %v3263
        %v3265 = vcombine.high %v3257, %v3257
        %v3266 = vcombine.high %v3264, %v3264
        %v3267 = vcombine.high %v2902, %v2902
        %v3269 = vunpack.c.l.s4 1983009808
        %v3270 = vunpack.c.0.s8 %v3269
        %v3271 = vlaneseq
        %v3272 = vshrl.u32 %v3271, 7
        %v3273 = vsub.s32 %v3270, %v3272
        %v3274 = vrot.slane %v2902, %v3273
        %v3276 = vunpack.c.l.s4 1983009808
        %v3277 = vunpack.c.0.s8 %v3276
        %v3278 = vlaneseq
        %v3279 = vshrl.u32 %v3278, 7
        %v3280 = vsub.s32 %v3277, %v3279
        %v3281 = vrot.slane %v3267, %v3280
        %v3282 = vcombine.high %v3274, %v3274
        %v3283 = vcombine.high %v3281, %v3281
        %v3284 = vcombine.high %v2903, %v2903
        %v3286 = vunpack.c.l.s4 1983009808
        %v3287 = vunpack.c.0.s8 %v3286
        %v3288 = vlaneseq
        %v3289 = vshrl.u32 %v3288, 7
        %v3290 = vsub.s32 %v3287, %v3289
        %v3291 = vrot.slane %v2903, %v3290
        %v3293 = vunpack.c.l.s4 1983009808
        %v3294 = vunpack.c.0.s8 %v3293
        %v3295 = vlaneseq
        %v3296 = vshrl.u32 %v3295, 7
        %v3297 = vsub.s32 %v3294, %v3296
        %v3298 = vrot.slane %v3284, %v3297
        %v3299 = vcombine.high %v3291, %v3291
        %v3300 = vcombine.high %v3298, %v3298
        %v3301 = vcombine.high %v2904, %v2904
        %v3303 = vunpack.c.l.s4 1983009808
        %v3304 = vunpack.c.0.s8 %v3303
        %v3305 = vlaneseq
        %v3306 = vshrl.u32 %v3305, 7
        %v3307 = vsub.s32 %v3304, %v3306
        %v3308 = vrot.slane %v2904, %v3307
        %v3310 = vunpack.c.l.s4 1983009808
        %v3311 = vunpack.c.0.s8 %v3310
        %v3312 = vlaneseq
        %v3313 = vshrl.u32 %v3312, 7
        %v3314 = vsub.s32 %v3311, %v3313
        %v3315 = vrot.slane %v3301, %v3314
        %v3316 = vcombine.high %v3308, %v3308
        %v3317 = vcombine.high %v3315, %v3315
        %v3318 = vcombine.high %v2905, %v2905
        %v3320 = vunpack.c.l.s4 1983009808
        %v3321 = vunpack.c.0.s8 %v3320
        %v3322 = vlaneseq
        %v3323 = vshrl.u32 %v3322, 7
        %v3324 = vsub.s32 %v3321, %v3323
        %v3325 = vrot.slane %v2905, %v3324
        %v3327 = vunpack.c.l.s4 1983009808
        %v3328 = vunpack.c.0.s8 %v3327
        %v3329 = vlaneseq
        %v3330 = vshrl.u32 %v3329, 7
        %v3331 = vsub.s32 %v3328, %v3330
        %v3332 = vrot.slane %v3318, %v3331
        %v3333 = vcombine.high %v3325, %v3325
        %v3334 = vcombine.high %v3332, %v3332
        %v3335 = vcombine.high %v2906, %v2906
        %v3337 = vunpack.c.l.s4 1983009808
        %v3338 = vunpack.c.0.s8 %v3337
        %v3339 = vlaneseq
        %v3340 = vshrl.u32 %v3339, 7
        %v3341 = vsub.s32 %v3338, %v3340
        %v3342 = vrot.slane %v2906, %v3341
        %v3344 = vunpack.c.l.s4 1983009808
        %v3345 = vunpack.c.0.s8 %v3344
        %v3346 = vlaneseq
        %v3347 = vshrl.u32 %v3346, 7
        %v3348 = vsub.s32 %v3345, %v3347
        %v3349 = vrot.slane %v3335, %v3348
        %v3350 = vcombine.high %v3342, %v3342
        %v3351 = vcombine.high %v3349, %v3349
        %v3352 = vcombine.high %v2907, %v2907
        %v3354 = vunpack.c.l.s4 1983009808
        %v3355 = vunpack.c.0.s8 %v3354
        %v3356 = vlaneseq
        %v3357 = vshrl.u32 %v3356, 7
        %v3358 = vsub.s32 %v3355, %v3357
        %v3359 = vrot.slane %v2907, %v3358
        %v3361 = vunpack.c.l.s4 1983009808
        %v3362 = vunpack.c.0.s8 %v3361
        %v3363 = vlaneseq
        %v3364 = vshrl.u32 %v3363, 7
        %v3365 = vsub.s32 %v3362, %v3364
        %v3366 = vrot.slane %v3352, %v3365
        %v3367 = vcombine.high %v3359, %v3359
        %v3368 = vcombine.high %v3366, %v3366
        %v3369 = vcombine.high %v2908, %v2908
        %v3371 = vunpack.c.l.s4 1983009808
        %v3372 = vunpack.c.0.s8 %v3371
        %v3373 = vlaneseq
        %v3374 = vshrl.u32 %v3373, 7
        %v3375 = vsub.s32 %v3372, %v3374
        %v3376 = vrot.slane %v2908, %v3375
        %v3378 = vunpack.c.l.s4 1983009808
        %v3379 = vunpack.c.0.s8 %v3378
        %v3380 = vlaneseq
        %v3381 = vshrl.u32 %v3380, 7
        %v3382 = vsub.s32 %v3379, %v3381
        %v3383 = vrot.slane %v3369, %v3382
        %v3384 = vcombine.high %v3376, %v3376
        %v3385 = vcombine.high %v3383, %v3383
        %v3386 = vcombine.high %v2909, %v2909
        %v3388 = vunpack.c.l.s4 1983009808
        %v3389 = vunpack.c.0.s8 %v3388
        %v3390 = vlaneseq
        %v3391 = vshrl.u32 %v3390, 7
        %v3392 = vsub.s32 %v3389, %v3391
        %v3393 = vrot.slane %v2909, %v3392
        %v3395 = vunpack.c.l.s4 1983009808
        %v3396 = vunpack.c.0.s8 %v3395
        %v3397 = vlaneseq
        %v3398 = vshrl.u32 %v3397, 7
        %v3399 = vsub.s32 %v3396, %v3398
        %v3400 = vrot.slane %v3386, %v3399
        %v3401 = vcombine.high %v3393, %v3393
        %v3402 = vcombine.high %v3400, %v3400
        %v3403 = vcombine.high %v2910, %v2910
        %v3405 = vunpack.c.l.s4 1983009808
        %v3406 = vunpack.c.0.s8 %v3405
        %v3407 = vlaneseq
        %v3408 = vshrl.u32 %v3407, 7
        %v3409 = vsub.s32 %v3406, %v3408
        %v3410 = vrot.slane %v2910, %v3409
        %v3412 = vunpack.c.l.s4 1983009808
        %v3413 = vunpack.c.0.s8 %v3412
        %v3414 = vlaneseq
        %v3415 = vshrl.u32 %v3414, 7
        %v3416 = vsub.s32 %v3413, %v3415
        %v3417 = vrot.slane %v3403, %v3416
        %v3418 = vcombine.high %v3410, %v3410
        %v3419 = vcombine.high %v3417, %v3417
        %v3420 = vcombine.high %v2911, %v2911
        %v3422 = vunpack.c.l.s4 1983009808
        %v3423 = vunpack.c.0.s8 %v3422
        %v3424 = vlaneseq
        %v3425 = vshrl.u32 %v3424, 7
        %v3426 = vsub.s32 %v3423, %v3425
        %v3427 = vrot.slane %v2911, %v3426
        %v3429 = vunpack.c.l.s4 1983009808
        %v3430 = vunpack.c.0.s8 %v3429
        %v3431 = vlaneseq
        %v3432 = vshrl.u32 %v3431, 7
        %v3433 = vsub.s32 %v3430, %v3432
        %v3434 = vrot.slane %v3420, %v3433
        %v3435 = vcombine.high %v3427, %v3427
        %v3436 = vcombine.high %v3434, %v3434
        %v3437 = vcombine.high %v2912, %v2912
        %v3439 = vunpack.c.l.s4 1983009808
        %v3440 = vunpack.c.0.s8 %v3439
        %v3441 = vlaneseq
        %v3442 = vshrl.u32 %v3441, 7
        %v3443 = vsub.s32 %v3440, %v3442
        %v3444 = vrot.slane %v2912, %v3443
        %v3446 = vunpack.c.l.s4 1983009808
        %v3447 = vunpack.c.0.s8 %v3446
        %v3448 = vlaneseq
        %v3449 = vshrl.u32 %v3448, 7
        %v3450 = vsub.s32 %v3447, %v3449
        %v3451 = vrot.slane %v3437, %v3450
        %v3452 = vcombine.high %v3444, %v3444
        %v3453 = vcombine.high %v3451, %v3451
        %v3454 = vcombine.high %v2913, %v2913
        %v3456 = vunpack.c.l.s4 1983009808
        %v3457 = vunpack.c.0.s8 %v3456
        %v3458 = vlaneseq
        %v3459 = vshrl.u32 %v3458, 7
        %v3460 = vsub.s32 %v3457, %v3459
        %v3461 = vrot.slane %v2913, %v3460
        %v3463 = vunpack.c.l.s4 1983009808
        %v3464 = vunpack.c.0.s8 %v3463
        %v3465 = vlaneseq
        %v3466 = vshrl.u32 %v3465, 7
        %v3467 = vsub.s32 %v3464, %v3466
        %v3468 = vrot.slane %v3454, %v3467
        %v3469 = vcombine.high %v3461, %v3461
        %v3470 = vcombine.high %v3468, %v3468
        %v3471 = vcombine.high %v2914, %v2914
        %v3473 = vunpack.c.l.s4 1983009808
        %v3474 = vunpack.c.0.s8 %v3473
        %v3475 = vlaneseq
        %v3476 = vshrl.u32 %v3475, 7
        %v3477 = vsub.s32 %v3474, %v3476
        %v3478 = vrot.slane %v2914, %v3477
        %v3480 = vunpack.c.l.s4 1983009808
        %v3481 = vunpack.c.0.s8 %v3480
        %v3482 = vlaneseq
        %v3483 = vshrl.u32 %v3482, 7
        %v3484 = vsub.s32 %v3481, %v3483
        %v3485 = vrot.slane %v3471, %v3484
        %v3486 = vcombine.high %v3478, %v3478
        %v3487 = vcombine.high %v3485, %v3485
        %v3488 = vcombine.high %v2915, %v2915
        %v3490 = vunpack.c.l.s4 1983009808
        %v3491 = vunpack.c.0.s8 %v3490
        %v3492 = vlaneseq
        %v3493 = vshrl.u32 %v3492, 7
        %v3494 = vsub.s32 %v3491, %v3493
        %v3495 = vrot.slane %v2915, %v3494
        %v3497 = vunpack.c.l.s4 1983009808
        %v3498 = vunpack.c.0.s8 %v3497
        %v3499 = vlaneseq
        %v3500 = vshrl.u32 %v3499, 7
        %v3501 = vsub.s32 %v3498, %v3500
        %v3502 = vrot.slane %v3488, %v3501
        %v3503 = vcombine.high %v3495, %v3495
        %v3504 = vcombine.high %v3502, %v3502
        %v3505 = vcombine.high %v2916, %v2916
        %v3507 = vunpack.c.l.s4 1983009808
        %v3508 = vunpack.c.0.s8 %v3507
        %v3509 = vlaneseq
        %v3510 = vshrl.u32 %v3509, 7
        %v3511 = vsub.s32 %v3508, %v3510
        %v3512 = vrot.slane %v2916, %v3511
        %v3514 = vunpack.c.l.s4 1983009808
        %v3515 = vunpack.c.0.s8 %v3514
        %v3516 = vlaneseq
        %v3517 = vshrl.u32 %v3516, 7
        %v3518 = vsub.s32 %v3515, %v3517
        %v3519 = vrot.slane %v3505, %v3518
        %v3520 = vcombine.high %v3512, %v3512
        %v3521 = vcombine.high %v3519, %v3519
        %v3522 = vcombine.high %v2917, %v2917
        %v3524 = vunpack.c.l.s4 1983009808
        %v3525 = vunpack.c.0.s8 %v3524
        %v3526 = vlaneseq
        %v3527 = vshrl.u32 %v3526, 7
        %v3528 = vsub.s32 %v3525, %v3527
        %v3529 = vrot.slane %v2917, %v3528
        %v3531 = vunpack.c.l.s4 1983009808
        %v3532 = vunpack.c.0.s8 %v3531
        %v3533 = vlaneseq
        %v3534 = vshrl.u32 %v3533, 7
        %v3535 = vsub.s32 %v3532, %v3534
        %v3536 = vrot.slane %v3522, %v3535
        %v3537 = vcombine.high %v3529, %v3529
        %v3538 = vcombine.high %v3536, %v3536
        %v3539 = vcombine.high %v2918, %v2918
        %v3541 = vunpack.c.l.s4 1983009808
        %v3542 = vunpack.c.0.s8 %v3541
        %v3543 = vlaneseq
        %v3544 = vshrl.u32 %v3543, 7
        %v3545 = vsub.s32 %v3542, %v3544
        %v3546 = vrot.slane %v2918, %v3545
        %v3548 = vunpack.c.l.s4 1983009808
        %v3549 = vunpack.c.0.s8 %v3548
        %v3550 = vlaneseq
        %v3551 = vshrl.u32 %v3550, 7
        %v3552 = vsub.s32 %v3549, %v3551
        %v3553 = vrot.slane %v3539, %v3552
        %v3554 = vcombine.high %v3546, %v3546
        %v3555 = vcombine.high %v3553, %v3553
        %v3556 = vcombine.high %v2919, %v2919
        %v3558 = vunpack.c.l.s4 1983009808
        %v3559 = vunpack.c.0.s8 %v3558
        %v3560 = vlaneseq
        %v3561 = vshrl.u32 %v3560, 7
        %v3562 = vsub.s32 %v3559, %v3561
        %v3563 = vrot.slane %v2919, %v3562
        %v3565 = vunpack.c.l.s4 1983009808
        %v3566 = vunpack.c.0.s8 %v3565
        %v3567 = vlaneseq
        %v3568 = vshrl.u32 %v3567, 7
        %v3569 = vsub.s32 %v3566, %v3568
        %v3570 = vrot.slane %v3556, %v3569
        %v3571 = vcombine.high %v3563, %v3563
        %v3572 = vcombine.high %v3570, %v3570
        %v3573 = vcombine.high %v2920, %v2920
        %v3575 = vunpack.c.l.s4 1983009808
        %v3576 = vunpack.c.0.s8 %v3575
        %v3577 = vlaneseq
        %v3578 = vshrl.u32 %v3577, 7
        %v3579 = vsub.s32 %v3576, %v3578
        %v3580 = vrot.slane %v2920, %v3579
        %v3582 = vunpack.c.l.s4 1983009808
        %v3583 = vunpack.c.0.s8 %v3582
        %v3584 = vlaneseq
        %v3585 = vshrl.u32 %v3584, 7
        %v3586 = vsub.s32 %v3583, %v3585
        %v3587 = vrot.slane %v3573, %v3586
        %v3588 = vcombine.high %v3580, %v3580
        %v3589 = vcombine.high %v3587, %v3587
        %v3590 = vcombine.high %v2921, %v2921
        %v3592 = vunpack.c.l.s4 1983009808
        %v3593 = vunpack.c.0.s8 %v3592
        %v3594 = vlaneseq
        %v3595 = vshrl.u32 %v3594, 7
        %v3596 = vsub.s32 %v3593, %v3595
        %v3597 = vrot.slane %v2921, %v3596
        %v3599 = vunpack.c.l.s4 1983009808
        %v3600 = vunpack.c.0.s8 %v3599
        %v3601 = vlaneseq
        %v3602 = vshrl.u32 %v3601, 7
        %v3603 = vsub.s32 %v3600, %v3602
        %v3604 = vrot.slane %v3590, %v3603
        %v3605 = vcombine.high %v3597, %v3597
        %v3606 = vcombine.high %v3604, %v3604
        %v3735 = vsel %vm762, %v3070, -inf
        %v3736 = vrot.slane %v3735, 4
        %v3737 = vmax.f32 %v3735, %v3736
        %v3738 = vrot.slane %v3737, 2
        %v3739 = vmax.f32 %v3737, %v3738
        %v3740 = vrot.slane %v3739, 1
        %v3741 = vmax.f32 %v3739, %v3740
        %v3742 = vsel %vm762, %v3078, -inf
        %v3743 = vrot.slane %v3742, 4
        %v3744 = vmax.f32 %v3742, %v3743
        %v3745 = vrot.slane %v3744, 2
        %v3746 = vmax.f32 %v3744, %v3745
        %v3747 = vrot.slane %v3746, 1
        %v3748 = vmax.f32 %v3746, %v3747
        %v3749 = vsel %vm762, %v3077, -inf
        %v3750 = vrot.slane %v3749, 4
        %v3751 = vmax.f32 %v3749, %v3750
        %v3752 = vrot.slane %v3751, 2
        %v3753 = vmax.f32 %v3751, %v3752
        %v3754 = vrot.slane %v3753, 1
        %v3755 = vmax.f32 %v3753, %v3754
        %v3756 = vsel %vm762, %v3079, -inf
        %v3757 = vrot.slane %v3756, 4
        %v3758 = vmax.f32 %v3756, %v3757
        %v3759 = vrot.slane %v3758, 2
        %v3760 = vmax.f32 %v3758, %v3759
        %v3761 = vrot.slane %v3760, 1
        %v3762 = vmax.f32 %v3760, %v3761
        %v3763 = vsel %vm762, %v3087, -inf
        %v3764 = vrot.slane %v3763, 4
        %v3765 = vmax.f32 %v3763, %v3764
        %v3766 = vrot.slane %v3765, 2
        %v3767 = vmax.f32 %v3765, %v3766
        %v3768 = vrot.slane %v3767, 1
        %v3769 = vmax.f32 %v3767, %v3768
        %v3770 = vsel %vm762, %v3095, -inf
        %v3771 = vrot.slane %v3770, 4
        %v3772 = vmax.f32 %v3770, %v3771
        %v3773 = vrot.slane %v3772, 2
        %v3774 = vmax.f32 %v3772, %v3773
        %v3775 = vrot.slane %v3774, 1
        %v3776 = vmax.f32 %v3774, %v3775
        %v3777 = vsel %vm762, %v3094, -inf
        %v3778 = vrot.slane %v3777, 4
        %v3779 = vmax.f32 %v3777, %v3778
        %v3780 = vrot.slane %v3779, 2
        %v3781 = vmax.f32 %v3779, %v3780
        %v3782 = vrot.slane %v3781, 1
        %v3783 = vmax.f32 %v3781, %v3782
        %v3784 = vsel %vm762, %v3096, -inf
        %v3785 = vrot.slane %v3784, 4
        %v3786 = vmax.f32 %v3784, %v3785
        %v3787 = vrot.slane %v3786, 2
        %v3788 = vmax.f32 %v3786, %v3787
        %v3789 = vrot.slane %v3788, 1
        %v3790 = vmax.f32 %v3788, %v3789
        %v3791 = vsel %vm762, %v3104, -inf
        %v3792 = vrot.slane %v3791, 4
        %v3793 = vmax.f32 %v3791, %v3792
        %v3794 = vrot.slane %v3793, 2
        %v3795 = vmax.f32 %v3793, %v3794
        %v3796 = vrot.slane %v3795, 1
        %v3797 = vmax.f32 %v3795, %v3796
        %v3798 = vsel %vm762, %v3112, -inf
        %v3799 = vrot.slane %v3798, 4
        %v3800 = vmax.f32 %v3798, %v3799
        %v3801 = vrot.slane %v3800, 2
        %v3802 = vmax.f32 %v3800, %v3801
        %v3803 = vrot.slane %v3802, 1
        %v3804 = vmax.f32 %v3802, %v3803
        %v3805 = vsel %vm762, %v3111, -inf
        %v3806 = vrot.slane %v3805, 4
        %v3807 = vmax.f32 %v3805, %v3806
        %v3808 = vrot.slane %v3807, 2
        %v3809 = vmax.f32 %v3807, %v3808
        %v3810 = vrot.slane %v3809, 1
        %v3811 = vmax.f32 %v3809, %v3810
        %v3812 = vsel %vm762, %v3113, -inf
        %v3813 = vrot.slane %v3812, 4
        %v3814 = vmax.f32 %v3812, %v3813
        %v3815 = vrot.slane %v3814, 2
        %v3816 = vmax.f32 %v3814, %v3815
        %v3817 = vrot.slane %v3816, 1
        %v3818 = vmax.f32 %v3816, %v3817
        %v3819 = vsel %vm762, %v3121, -inf
        %v3820 = vrot.slane %v3819, 4
        %v3821 = vmax.f32 %v3819, %v3820
        %v3822 = vrot.slane %v3821, 2
        %v3823 = vmax.f32 %v3821, %v3822
        %v3824 = vrot.slane %v3823, 1
        %v3825 = vmax.f32 %v3823, %v3824
        %v3826 = vsel %vm762, %v3129, -inf
        %v3827 = vrot.slane %v3826, 4
        %v3828 = vmax.f32 %v3826, %v3827
        %v3829 = vrot.slane %v3828, 2
        %v3830 = vmax.f32 %v3828, %v3829
        %v3831 = vrot.slane %v3830, 1
        %v3832 = vmax.f32 %v3830, %v3831
        %v3833 = vsel %vm762, %v3128, -inf
        %v3834 = vrot.slane %v3833, 4
        %v3835 = vmax.f32 %v3833, %v3834
        %v3836 = vrot.slane %v3835, 2
        %v3837 = vmax.f32 %v3835, %v3836
        %v3838 = vrot.slane %v3837, 1
        %v3839 = vmax.f32 %v3837, %v3838
        %v3840 = vsel %vm762, %v3130, -inf
        %v3841 = vrot.slane %v3840, 4
        %v3842 = vmax.f32 %v3840, %v3841
        %v3843 = vrot.slane %v3842, 2
        %v3844 = vmax.f32 %v3842, %v3843
        %v3845 = vrot.slane %v3844, 1
        %v3846 = vmax.f32 %v3844, %v3845
        %v3847 = vsel %vm762, %v3138, -inf
        %v3848 = vrot.slane %v3847, 4
        %v3849 = vmax.f32 %v3847, %v3848
        %v3850 = vrot.slane %v3849, 2
        %v3851 = vmax.f32 %v3849, %v3850
        %v3852 = vrot.slane %v3851, 1
        %v3853 = vmax.f32 %v3851, %v3852
        %v3854 = vsel %vm762, %v3146, -inf
        %v3855 = vrot.slane %v3854, 4
        %v3856 = vmax.f32 %v3854, %v3855
        %v3857 = vrot.slane %v3856, 2
        %v3858 = vmax.f32 %v3856, %v3857
        %v3859 = vrot.slane %v3858, 1
        %v3860 = vmax.f32 %v3858, %v3859
        %v3861 = vsel %vm762, %v3145, -inf
        %v3862 = vrot.slane %v3861, 4
        %v3863 = vmax.f32 %v3861, %v3862
        %v3864 = vrot.slane %v3863, 2
        %v3865 = vmax.f32 %v3863, %v3864
        %v3866 = vrot.slane %v3865, 1
        %v3867 = vmax.f32 %v3865, %v3866
        %v3868 = vsel %vm762, %v3147, -inf
        %v3869 = vrot.slane %v3868, 4
        %v3870 = vmax.f32 %v3868, %v3869
        %v3871 = vrot.slane %v3870, 2
        %v3872 = vmax.f32 %v3870, %v3871
        %v3873 = vrot.slane %v3872, 1
        %v3874 = vmax.f32 %v3872, %v3873
        %v3875 = vsel %vm762, %v3155, -inf
        %v3876 = vrot.slane %v3875, 4
        %v3877 = vmax.f32 %v3875, %v3876
        %v3878 = vrot.slane %v3877, 2
        %v3879 = vmax.f32 %v3877, %v3878
        %v3880 = vrot.slane %v3879, 1
        %v3881 = vmax.f32 %v3879, %v3880
        %v3882 = vsel %vm762, %v3163, -inf
        %v3883 = vrot.slane %v3882, 4
        %v3884 = vmax.f32 %v3882, %v3883
        %v3885 = vrot.slane %v3884, 2
        %v3886 = vmax.f32 %v3884, %v3885
        %v3887 = vrot.slane %v3886, 1
        %v3888 = vmax.f32 %v3886, %v3887
        %v3889 = vsel %vm762, %v3162, -inf
        %v3890 = vrot.slane %v3889, 4
        %v3891 = vmax.f32 %v3889, %v3890
        %v3892 = vrot.slane %v3891, 2
        %v3893 = vmax.f32 %v3891, %v3892
        %v3894 = vrot.slane %v3893, 1
        %v3895 = vmax.f32 %v3893, %v3894
        %v3896 = vsel %vm762, %v3164, -inf
        %v3897 = vrot.slane %v3896, 4
        %v3898 = vmax.f32 %v3896, %v3897
        %v3899 = vrot.slane %v3898, 2
        %v3900 = vmax.f32 %v3898, %v3899
        %v3901 = vrot.slane %v3900, 1
        %v3902 = vmax.f32 %v3900, %v3901
        %v3903 = vsel %vm762, %v3172, -inf
        %v3904 = vrot.slane %v3903, 4
        %v3905 = vmax.f32 %v3903, %v3904
        %v3906 = vrot.slane %v3905, 2
        %v3907 = vmax.f32 %v3905, %v3906
        %v3908 = vrot.slane %v3907, 1
        %v3909 = vmax.f32 %v3907, %v3908
        %v3910 = vsel %vm762, %v3180, -inf
        %v3911 = vrot.slane %v3910, 4
        %v3912 = vmax.f32 %v3910, %v3911
        %v3913 = vrot.slane %v3912, 2
        %v3914 = vmax.f32 %v3912, %v3913
        %v3915 = vrot.slane %v3914, 1
        %v3916 = vmax.f32 %v3914, %v3915
        %v3917 = vsel %vm762, %v3179, -inf
        %v3918 = vrot.slane %v3917, 4
        %v3919 = vmax.f32 %v3917, %v3918
        %v3920 = vrot.slane %v3919, 2
        %v3921 = vmax.f32 %v3919, %v3920
        %v3922 = vrot.slane %v3921, 1
        %v3923 = vmax.f32 %v3921, %v3922
        %v3924 = vsel %vm762, %v3181, -inf
        %v3925 = vrot.slane %v3924, 4
        %v3926 = vmax.f32 %v3924, %v3925
        %v3927 = vrot.slane %v3926, 2
        %v3928 = vmax.f32 %v3926, %v3927
        %v3929 = vrot.slane %v3928, 1
        %v3930 = vmax.f32 %v3928, %v3929
        %v3931 = vsel %vm762, %v3189, -inf
        %v3932 = vrot.slane %v3931, 4
        %v3933 = vmax.f32 %v3931, %v3932
        %v3934 = vrot.slane %v3933, 2
        %v3935 = vmax.f32 %v3933, %v3934
        %v3936 = vrot.slane %v3935, 1
        %v3937 = vmax.f32 %v3935, %v3936
        %v3938 = vsel %vm762, %v3197, -inf
        %v3939 = vrot.slane %v3938, 4
        %v3940 = vmax.f32 %v3938, %v3939
        %v3941 = vrot.slane %v3940, 2
        %v3942 = vmax.f32 %v3940, %v3941
        %v3943 = vrot.slane %v3942, 1
        %v3944 = vmax.f32 %v3942, %v3943
        %v3945 = vsel %vm762, %v3196, -inf
        %v3946 = vrot.slane %v3945, 4
        %v3947 = vmax.f32 %v3945, %v3946
        %v3948 = vrot.slane %v3947, 2
        %v3949 = vmax.f32 %v3947, %v3948
        %v3950 = vrot.slane %v3949, 1
        %v3951 = vmax.f32 %v3949, %v3950
        %v3952 = vsel %vm762, %v3198, -inf
        %v3953 = vrot.slane %v3952, 4
        %v3954 = vmax.f32 %v3952, %v3953
        %v3955 = vrot.slane %v3954, 2
        %v3956 = vmax.f32 %v3954, %v3955
        %v3957 = vrot.slane %v3956, 1
        %v3958 = vmax.f32 %v3956, %v3957
        %v3959 = vsel %vm762, %v3206, -inf
        %v3960 = vrot.slane %v3959, 4
        %v3961 = vmax.f32 %v3959, %v3960
        %v3962 = vrot.slane %v3961, 2
        %v3963 = vmax.f32 %v3961, %v3962
        %v3964 = vrot.slane %v3963, 1
        %v3965 = vmax.f32 %v3963, %v3964
        %v3966 = vsel %vm762, %v3214, -inf
        %v3967 = vrot.slane %v3966, 4
        %v3968 = vmax.f32 %v3966, %v3967
        %v3969 = vrot.slane %v3968, 2
        %v3970 = vmax.f32 %v3968, %v3969
        %v3971 = vrot.slane %v3970, 1
        %v3972 = vmax.f32 %v3970, %v3971
        %v3973 = vsel %vm762, %v3213, -inf
        %v3974 = vrot.slane %v3973, 4
        %v3975 = vmax.f32 %v3973, %v3974
        %v3976 = vrot.slane %v3975, 2
        %v3977 = vmax.f32 %v3975, %v3976
        %v3978 = vrot.slane %v3977, 1
        %v3979 = vmax.f32 %v3977, %v3978
        %v3980 = vsel %vm762, %v3215, -inf
        %v3981 = vrot.slane %v3980, 4
        %v3982 = vmax.f32 %v3980, %v3981
        %v3983 = vrot.slane %v3982, 2
        %v3984 = vmax.f32 %v3982, %v3983
        %v3985 = vrot.slane %v3984, 1
        %v3986 = vmax.f32 %v3984, %v3985
        %v3987 = vsel %vm762, %v3223, -inf
        %v3988 = vrot.slane %v3987, 4
        %v3989 = vmax.f32 %v3987, %v3988
        %v3990 = vrot.slane %v3989, 2
        %v3991 = vmax.f32 %v3989, %v3990
        %v3992 = vrot.slane %v3991, 1
        %v3993 = vmax.f32 %v3991, %v3992
        %v3994 = vsel %vm762, %v3231, -inf
        %v3995 = vrot.slane %v3994, 4
        %v3996 = vmax.f32 %v3994, %v3995
        %v3997 = vrot.slane %v3996, 2
        %v3998 = vmax.f32 %v3996, %v3997
        %v3999 = vrot.slane %v3998, 1
        %v4000 = vmax.f32 %v3998, %v3999
        %v4001 = vsel %vm762, %v3230, -inf
        %v4002 = vrot.slane %v4001, 4
        %v4003 = vmax.f32 %v4001, %v4002
        %v4004 = vrot.slane %v4003, 2
        %v4005 = vmax.f32 %v4003, %v4004
        %v4006 = vrot.slane %v4005, 1
        %v4007 = vmax.f32 %v4005, %v4006
        %v4008 = vsel %vm762, %v3232, -inf
        %v4009 = vrot.slane %v4008, 4
        %v4010 = vmax.f32 %v4008, %v4009
        %v4011 = vrot.slane %v4010, 2
        %v4012 = vmax.f32 %v4010, %v4011
        %v4013 = vrot.slane %v4012, 1
        %v4014 = vmax.f32 %v4012, %v4013
        %v4015 = vsel %vm762, %v3240, -inf
        %v4016 = vrot.slane %v4015, 4
        %v4017 = vmax.f32 %v4015, %v4016
        %v4018 = vrot.slane %v4017, 2
        %v4019 = vmax.f32 %v4017, %v4018
        %v4020 = vrot.slane %v4019, 1
        %v4021 = vmax.f32 %v4019, %v4020
        %v4022 = vsel %vm762, %v3248, -inf
        %v4023 = vrot.slane %v4022, 4
        %v4024 = vmax.f32 %v4022, %v4023
        %v4025 = vrot.slane %v4024, 2
        %v4026 = vmax.f32 %v4024, %v4025
        %v4027 = vrot.slane %v4026, 1
        %v4028 = vmax.f32 %v4026, %v4027
        %v4029 = vsel %vm762, %v3247, -inf
        %v4030 = vrot.slane %v4029, 4
        %v4031 = vmax.f32 %v4029, %v4030
        %v4032 = vrot.slane %v4031, 2
        %v4033 = vmax.f32 %v4031, %v4032
        %v4034 = vrot.slane %v4033, 1
        %v4035 = vmax.f32 %v4033, %v4034
        %v4036 = vsel %vm762, %v3249, -inf
        %v4037 = vrot.slane %v4036, 4
        %v4038 = vmax.f32 %v4036, %v4037
        %v4039 = vrot.slane %v4038, 2
        %v4040 = vmax.f32 %v4038, %v4039
        %v4041 = vrot.slane %v4040, 1
        %v4042 = vmax.f32 %v4040, %v4041
        %v4043 = vsel %vm762, %v3257, -inf
        %v4044 = vrot.slane %v4043, 4
        %v4045 = vmax.f32 %v4043, %v4044
        %v4046 = vrot.slane %v4045, 2
        %v4047 = vmax.f32 %v4045, %v4046
        %v4048 = vrot.slane %v4047, 1
        %v4049 = vmax.f32 %v4047, %v4048
        %v4050 = vsel %vm762, %v3265, -inf
        %v4051 = vrot.slane %v4050, 4
        %v4052 = vmax.f32 %v4050, %v4051
        %v4053 = vrot.slane %v4052, 2
        %v4054 = vmax.f32 %v4052, %v4053
        %v4055 = vrot.slane %v4054, 1
        %v4056 = vmax.f32 %v4054, %v4055
        %v4057 = vsel %vm762, %v3264, -inf
        %v4058 = vrot.slane %v4057, 4
        %v4059 = vmax.f32 %v4057, %v4058
        %v4060 = vrot.slane %v4059, 2
        %v4061 = vmax.f32 %v4059, %v4060
        %v4062 = vrot.slane %v4061, 1
        %v4063 = vmax.f32 %v4061, %v4062
        %v4064 = vsel %vm762, %v3266, -inf
        %v4065 = vrot.slane %v4064, 4
        %v4066 = vmax.f32 %v4064, %v4065
        %v4067 = vrot.slane %v4066, 2
        %v4068 = vmax.f32 %v4066, %v4067
        %v4069 = vrot.slane %v4068, 1
        %v4070 = vmax.f32 %v4068, %v4069
        %v4071 = vsel %vm762, %v3274, -inf
        %v4072 = vrot.slane %v4071, 4
        %v4073 = vmax.f32 %v4071, %v4072
        %v4074 = vrot.slane %v4073, 2
        %v4075 = vmax.f32 %v4073, %v4074
        %v4076 = vrot.slane %v4075, 1
        %v4077 = vmax.f32 %v4075, %v4076
        %v4078 = vsel %vm762, %v3282, -inf
        %v4079 = vrot.slane %v4078, 4
        %v4080 = vmax.f32 %v4078, %v4079
        %v4081 = vrot.slane %v4080, 2
        %v4082 = vmax.f32 %v4080, %v4081
        %v4083 = vrot.slane %v4082, 1
        %v4084 = vmax.f32 %v4082, %v4083
        %v4085 = vsel %vm762, %v3281, -inf
        %v4086 = vrot.slane %v4085, 4
        %v4087 = vmax.f32 %v4085, %v4086
        %v4088 = vrot.slane %v4087, 2
        %v4089 = vmax.f32 %v4087, %v4088
        %v4090 = vrot.slane %v4089, 1
        %v4091 = vmax.f32 %v4089, %v4090
        %v4092 = vsel %vm762, %v3283, -inf
        %v4093 = vrot.slane %v4092, 4
        %v4094 = vmax.f32 %v4092, %v4093
        %v4095 = vrot.slane %v4094, 2
        %v4096 = vmax.f32 %v4094, %v4095
        %v4097 = vrot.slane %v4096, 1
        %v4098 = vmax.f32 %v4096, %v4097
        %v4099 = vsel %vm762, %v3291, -inf
        %v4100 = vrot.slane %v4099, 4
        %v4101 = vmax.f32 %v4099, %v4100
        %v4102 = vrot.slane %v4101, 2
        %v4103 = vmax.f32 %v4101, %v4102
        %v4104 = vrot.slane %v4103, 1
        %v4105 = vmax.f32 %v4103, %v4104
        %v4106 = vsel %vm762, %v3299, -inf
        %v4107 = vrot.slane %v4106, 4
        %v4108 = vmax.f32 %v4106, %v4107
        %v4109 = vrot.slane %v4108, 2
        %v4110 = vmax.f32 %v4108, %v4109
        %v4111 = vrot.slane %v4110, 1
        %v4112 = vmax.f32 %v4110, %v4111
        %v4113 = vsel %vm762, %v3298, -inf
        %v4114 = vrot.slane %v4113, 4
        %v4115 = vmax.f32 %v4113, %v4114
        %v4116 = vrot.slane %v4115, 2
        %v4117 = vmax.f32 %v4115, %v4116
        %v4118 = vrot.slane %v4117, 1
        %v4119 = vmax.f32 %v4117, %v4118
        %v4120 = vsel %vm762, %v3300, -inf
        %v4121 = vrot.slane %v4120, 4
        %v4122 = vmax.f32 %v4120, %v4121
        %v4123 = vrot.slane %v4122, 2
        %v4124 = vmax.f32 %v4122, %v4123
        %v4125 = vrot.slane %v4124, 1
        %v4126 = vmax.f32 %v4124, %v4125
        %v4127 = vsel %vm762, %v3308, -inf
        %v4128 = vrot.slane %v4127, 4
        %v4129 = vmax.f32 %v4127, %v4128
        %v4130 = vrot.slane %v4129, 2
        %v4131 = vmax.f32 %v4129, %v4130
        %v4132 = vrot.slane %v4131, 1
        %v4133 = vmax.f32 %v4131, %v4132
        %v4134 = vsel %vm762, %v3316, -inf
        %v4135 = vrot.slane %v4134, 4
        %v4136 = vmax.f32 %v4134, %v4135
        %v4137 = vrot.slane %v4136, 2
        %v4138 = vmax.f32 %v4136, %v4137
        %v4139 = vrot.slane %v4138, 1
        %v4140 = vmax.f32 %v4138, %v4139
        %v4141 = vsel %vm762, %v3315, -inf
        %v4142 = vrot.slane %v4141, 4
        %v4143 = vmax.f32 %v4141, %v4142
        %v4144 = vrot.slane %v4143, 2
        %v4145 = vmax.f32 %v4143, %v4144
        %v4146 = vrot.slane %v4145, 1
        %v4147 = vmax.f32 %v4145, %v4146
        %v4148 = vsel %vm762, %v3317, -inf
        %v4149 = vrot.slane %v4148, 4
        %v4150 = vmax.f32 %v4148, %v4149
        %v4151 = vrot.slane %v4150, 2
        %v4152 = vmax.f32 %v4150, %v4151
        %v4153 = vrot.slane %v4152, 1
        %v4154 = vmax.f32 %v4152, %v4153
        %v4155 = vsel %vm762, %v3325, -inf
        %v4156 = vrot.slane %v4155, 4
        %v4157 = vmax.f32 %v4155, %v4156
        %v4158 = vrot.slane %v4157, 2
        %v4159 = vmax.f32 %v4157, %v4158
        %v4160 = vrot.slane %v4159, 1
        %v4161 = vmax.f32 %v4159, %v4160
        %v4162 = vsel %vm762, %v3333, -inf
        %v4163 = vrot.slane %v4162, 4
        %v4164 = vmax.f32 %v4162, %v4163
        %v4165 = vrot.slane %v4164, 2
        %v4166 = vmax.f32 %v4164, %v4165
        %v4167 = vrot.slane %v4166, 1
        %v4168 = vmax.f32 %v4166, %v4167
        %v4169 = vsel %vm762, %v3332, -inf
        %v4170 = vrot.slane %v4169, 4
        %v4171 = vmax.f32 %v4169, %v4170
        %v4172 = vrot.slane %v4171, 2
        %v4173 = vmax.f32 %v4171, %v4172
        %v4174 = vrot.slane %v4173, 1
        %v4175 = vmax.f32 %v4173, %v4174
        %v4176 = vsel %vm762, %v3334, -inf
        %v4177 = vrot.slane %v4176, 4
        %v4178 = vmax.f32 %v4176, %v4177
        %v4179 = vrot.slane %v4178, 2
        %v4180 = vmax.f32 %v4178, %v4179
        %v4181 = vrot.slane %v4180, 1
        %v4182 = vmax.f32 %v4180, %v4181
        %v4183 = vsel %vm762, %v3342, -inf
        %v4184 = vrot.slane %v4183, 4
        %v4185 = vmax.f32 %v4183, %v4184
        %v4186 = vrot.slane %v4185, 2
        %v4187 = vmax.f32 %v4185, %v4186
        %v4188 = vrot.slane %v4187, 1
        %v4189 = vmax.f32 %v4187, %v4188
        %v4190 = vsel %vm762, %v3350, -inf
        %v4191 = vrot.slane %v4190, 4
        %v4192 = vmax.f32 %v4190, %v4191
        %v4193 = vrot.slane %v4192, 2
        %v4194 = vmax.f32 %v4192, %v4193
        %v4195 = vrot.slane %v4194, 1
        %v4196 = vmax.f32 %v4194, %v4195
        %v4197 = vsel %vm762, %v3349, -inf
        %v4198 = vrot.slane %v4197, 4
        %v4199 = vmax.f32 %v4197, %v4198
        %v4200 = vrot.slane %v4199, 2
        %v4201 = vmax.f32 %v4199, %v4200
        %v4202 = vrot.slane %v4201, 1
        %v4203 = vmax.f32 %v4201, %v4202
        %v4204 = vsel %vm762, %v3351, -inf
        %v4205 = vrot.slane %v4204, 4
        %v4206 = vmax.f32 %v4204, %v4205
        %v4207 = vrot.slane %v4206, 2
        %v4208 = vmax.f32 %v4206, %v4207
        %v4209 = vrot.slane %v4208, 1
        %v4210 = vmax.f32 %v4208, %v4209
        %v4211 = vsel %vm762, %v3359, -inf
        %v4212 = vrot.slane %v4211, 4
        %v4213 = vmax.f32 %v4211, %v4212
        %v4214 = vrot.slane %v4213, 2
        %v4215 = vmax.f32 %v4213, %v4214
        %v4216 = vrot.slane %v4215, 1
        %v4217 = vmax.f32 %v4215, %v4216
        %v4218 = vsel %vm762, %v3367, -inf
        %v4219 = vrot.slane %v4218, 4
        %v4220 = vmax.f32 %v4218, %v4219
        %v4221 = vrot.slane %v4220, 2
        %v4222 = vmax.f32 %v4220, %v4221
        %v4223 = vrot.slane %v4222, 1
        %v4224 = vmax.f32 %v4222, %v4223
        %v4225 = vsel %vm762, %v3366, -inf
        %v4226 = vrot.slane %v4225, 4
        %v4227 = vmax.f32 %v4225, %v4226
        %v4228 = vrot.slane %v4227, 2
        %v4229 = vmax.f32 %v4227, %v4228
        %v4230 = vrot.slane %v4229, 1
        %v4231 = vmax.f32 %v4229, %v4230
        %v4232 = vsel %vm762, %v3368, -inf
        %v4233 = vrot.slane %v4232, 4
        %v4234 = vmax.f32 %v4232, %v4233
        %v4235 = vrot.slane %v4234, 2
        %v4236 = vmax.f32 %v4234, %v4235
        %v4237 = vrot.slane %v4236, 1
        %v4238 = vmax.f32 %v4236, %v4237
        %v4239 = vsel %vm762, %v3376, -inf
        %v4240 = vrot.slane %v4239, 4
        %v4241 = vmax.f32 %v4239, %v4240
        %v4242 = vrot.slane %v4241, 2
        %v4243 = vmax.f32 %v4241, %v4242
        %v4244 = vrot.slane %v4243, 1
        %v4245 = vmax.f32 %v4243, %v4244
        %v4246 = vsel %vm762, %v3384, -inf
        %v4247 = vrot.slane %v4246, 4
        %v4248 = vmax.f32 %v4246, %v4247
        %v4249 = vrot.slane %v4248, 2
        %v4250 = vmax.f32 %v4248, %v4249
        %v4251 = vrot.slane %v4250, 1
        %v4252 = vmax.f32 %v4250, %v4251
        %v4253 = vsel %vm762, %v3383, -inf
        %v4254 = vrot.slane %v4253, 4
        %v4255 = vmax.f32 %v4253, %v4254
        %v4256 = vrot.slane %v4255, 2
        %v4257 = vmax.f32 %v4255, %v4256
        %v4258 = vrot.slane %v4257, 1
        %v4259 = vmax.f32 %v4257, %v4258
        %v4260 = vsel %vm762, %v3385, -inf
        %v4261 = vrot.slane %v4260, 4
        %v4262 = vmax.f32 %v4260, %v4261
        %v4263 = vrot.slane %v4262, 2
        %v4264 = vmax.f32 %v4262, %v4263
        %v4265 = vrot.slane %v4264, 1
        %v4266 = vmax.f32 %v4264, %v4265
        %v4267 = vsel %vm762, %v3393, -inf
        %v4268 = vrot.slane %v4267, 4
        %v4269 = vmax.f32 %v4267, %v4268
        %v4270 = vrot.slane %v4269, 2
        %v4271 = vmax.f32 %v4269, %v4270
        %v4272 = vrot.slane %v4271, 1
        %v4273 = vmax.f32 %v4271, %v4272
        %v4274 = vsel %vm762, %v3401, -inf
        %v4275 = vrot.slane %v4274, 4
        %v4276 = vmax.f32 %v4274, %v4275
        %v4277 = vrot.slane %v4276, 2
        %v4278 = vmax.f32 %v4276, %v4277
        %v4279 = vrot.slane %v4278, 1
        %v4280 = vmax.f32 %v4278, %v4279
        %v4281 = vsel %vm762, %v3400, -inf
        %v4282 = vrot.slane %v4281, 4
        %v4283 = vmax.f32 %v4281, %v4282
        %v4284 = vrot.slane %v4283, 2
        %v4285 = vmax.f32 %v4283, %v4284
        %v4286 = vrot.slane %v4285, 1
        %v4287 = vmax.f32 %v4285, %v4286
        %v4288 = vsel %vm762, %v3402, -inf
        %v4289 = vrot.slane %v4288, 4
        %v4290 = vmax.f32 %v4288, %v4289
        %v4291 = vrot.slane %v4290, 2
        %v4292 = vmax.f32 %v4290, %v4291
        %v4293 = vrot.slane %v4292, 1
        %v4294 = vmax.f32 %v4292, %v4293
        %v4295 = vsel %vm762, %v3410, -inf
        %v4296 = vrot.slane %v4295, 4
        %v4297 = vmax.f32 %v4295, %v4296
        %v4298 = vrot.slane %v4297, 2
        %v4299 = vmax.f32 %v4297, %v4298
        %v4300 = vrot.slane %v4299, 1
        %v4301 = vmax.f32 %v4299, %v4300
        %v4302 = vsel %vm762, %v3418, -inf
        %v4303 = vrot.slane %v4302, 4
        %v4304 = vmax.f32 %v4302, %v4303
        %v4305 = vrot.slane %v4304, 2
        %v4306 = vmax.f32 %v4304, %v4305
        %v4307 = vrot.slane %v4306, 1
        %v4308 = vmax.f32 %v4306, %v4307
        %v4309 = vsel %vm762, %v3417, -inf
        %v4310 = vrot.slane %v4309, 4
        %v4311 = vmax.f32 %v4309, %v4310
        %v4312 = vrot.slane %v4311, 2
        %v4313 = vmax.f32 %v4311, %v4312
        %v4314 = vrot.slane %v4313, 1
        %v4315 = vmax.f32 %v4313, %v4314
        %v4316 = vsel %vm762, %v3419, -inf
        %v4317 = vrot.slane %v4316, 4
        %v4318 = vmax.f32 %v4316, %v4317
        %v4319 = vrot.slane %v4318, 2
        %v4320 = vmax.f32 %v4318, %v4319
        %v4321 = vrot.slane %v4320, 1
        %v4322 = vmax.f32 %v4320, %v4321
        %v4323 = vsel %vm762, %v3427, -inf
        %v4324 = vrot.slane %v4323, 4
        %v4325 = vmax.f32 %v4323, %v4324
        %v4326 = vrot.slane %v4325, 2
        %v4327 = vmax.f32 %v4325, %v4326
        %v4328 = vrot.slane %v4327, 1
        %v4329 = vmax.f32 %v4327, %v4328
        %v4330 = vsel %vm762, %v3435, -inf
        %v4331 = vrot.slane %v4330, 4
        %v4332 = vmax.f32 %v4330, %v4331
        %v4333 = vrot.slane %v4332, 2
        %v4334 = vmax.f32 %v4332, %v4333
        %v4335 = vrot.slane %v4334, 1
        %v4336 = vmax.f32 %v4334, %v4335
        %v4337 = vsel %vm762, %v3434, -inf
        %v4338 = vrot.slane %v4337, 4
        %v4339 = vmax.f32 %v4337, %v4338
        %v4340 = vrot.slane %v4339, 2
        %v4341 = vmax.f32 %v4339, %v4340
        %v4342 = vrot.slane %v4341, 1
        %v4343 = vmax.f32 %v4341, %v4342
        %v4344 = vsel %vm762, %v3436, -inf
        %v4345 = vrot.slane %v4344, 4
        %v4346 = vmax.f32 %v4344, %v4345
        %v4347 = vrot.slane %v4346, 2
        %v4348 = vmax.f32 %v4346, %v4347
        %v4349 = vrot.slane %v4348, 1
        %v4350 = vmax.f32 %v4348, %v4349
        %v4351 = vsel %vm762, %v3444, -inf
        %v4352 = vrot.slane %v4351, 4
        %v4353 = vmax.f32 %v4351, %v4352
        %v4354 = vrot.slane %v4353, 2
        %v4355 = vmax.f32 %v4353, %v4354
        %v4356 = vrot.slane %v4355, 1
        %v4357 = vmax.f32 %v4355, %v4356
        %v4358 = vsel %vm762, %v3452, -inf
        %v4359 = vrot.slane %v4358, 4
        %v4360 = vmax.f32 %v4358, %v4359
        %v4361 = vrot.slane %v4360, 2
        %v4362 = vmax.f32 %v4360, %v4361
        %v4363 = vrot.slane %v4362, 1
        %v4364 = vmax.f32 %v4362, %v4363
        %v4365 = vsel %vm762, %v3451, -inf
        %v4366 = vrot.slane %v4365, 4
        %v4367 = vmax.f32 %v4365, %v4366
        %v4368 = vrot.slane %v4367, 2
        %v4369 = vmax.f32 %v4367, %v4368
        %v4370 = vrot.slane %v4369, 1
        %v4371 = vmax.f32 %v4369, %v4370
        %v4372 = vsel %vm762, %v3453, -inf
        %v4373 = vrot.slane %v4372, 4
        %v4374 = vmax.f32 %v4372, %v4373
        %v4375 = vrot.slane %v4374, 2
        %v4376 = vmax.f32 %v4374, %v4375
        %v4377 = vrot.slane %v4376, 1
        %v4378 = vmax.f32 %v4376, %v4377
        %v4379 = vsel %vm762, %v3461, -inf
        %v4380 = vrot.slane %v4379, 4
        %v4381 = vmax.f32 %v4379, %v4380
        %v4382 = vrot.slane %v4381, 2
        %v4383 = vmax.f32 %v4381, %v4382
        %v4384 = vrot.slane %v4383, 1
        %v4385 = vmax.f32 %v4383, %v4384
        %v4386 = vsel %vm762, %v3469, -inf
        %v4387 = vrot.slane %v4386, 4
        %v4388 = vmax.f32 %v4386, %v4387
        %v4389 = vrot.slane %v4388, 2
        %v4390 = vmax.f32 %v4388, %v4389
        %v4391 = vrot.slane %v4390, 1
        %v4392 = vmax.f32 %v4390, %v4391
        %v4393 = vsel %vm762, %v3468, -inf
        %v4394 = vrot.slane %v4393, 4
        %v4395 = vmax.f32 %v4393, %v4394
        %v4396 = vrot.slane %v4395, 2
        %v4397 = vmax.f32 %v4395, %v4396
        %v4398 = vrot.slane %v4397, 1
        %v4399 = vmax.f32 %v4397, %v4398
        %v4400 = vsel %vm762, %v3470, -inf
        %v4401 = vrot.slane %v4400, 4
        %v4402 = vmax.f32 %v4400, %v4401
        %v4403 = vrot.slane %v4402, 2
        %v4404 = vmax.f32 %v4402, %v4403
        %v4405 = vrot.slane %v4404, 1
        %v4406 = vmax.f32 %v4404, %v4405
        %v4407 = vsel %vm762, %v3478, -inf
        %v4408 = vrot.slane %v4407, 4
        %v4409 = vmax.f32 %v4407, %v4408
        %v4410 = vrot.slane %v4409, 2
        %v4411 = vmax.f32 %v4409, %v4410
        %v4412 = vrot.slane %v4411, 1
        %v4413 = vmax.f32 %v4411, %v4412
        %v4414 = vsel %vm762, %v3486, -inf
        %v4415 = vrot.slane %v4414, 4
        %v4416 = vmax.f32 %v4414, %v4415
        %v4417 = vrot.slane %v4416, 2
        %v4418 = vmax.f32 %v4416, %v4417
        %v4419 = vrot.slane %v4418, 1
        %v4420 = vmax.f32 %v4418, %v4419
        %v4421 = vsel %vm762, %v3485, -inf
        %v4422 = vrot.slane %v4421, 4
        %v4423 = vmax.f32 %v4421, %v4422
        %v4424 = vrot.slane %v4423, 2
        %v4425 = vmax.f32 %v4423, %v4424
        %v4426 = vrot.slane %v4425, 1
        %v4427 = vmax.f32 %v4425, %v4426
        %v4428 = vsel %vm762, %v3487, -inf
        %v4429 = vrot.slane %v4428, 4
        %v4430 = vmax.f32 %v4428, %v4429
        %v4431 = vrot.slane %v4430, 2
        %v4432 = vmax.f32 %v4430, %v4431
        %v4433 = vrot.slane %v4432, 1
        %v4434 = vmax.f32 %v4432, %v4433
        %v4435 = vsel %vm762, %v3495, -inf
        %v4436 = vrot.slane %v4435, 4
        %v4437 = vmax.f32 %v4435, %v4436
        %v4438 = vrot.slane %v4437, 2
        %v4439 = vmax.f32 %v4437, %v4438
        %v4440 = vrot.slane %v4439, 1
        %v4441 = vmax.f32 %v4439, %v4440
        %v4442 = vsel %vm762, %v3503, -inf
        %v4443 = vrot.slane %v4442, 4
        %v4444 = vmax.f32 %v4442, %v4443
        %v4445 = vrot.slane %v4444, 2
        %v4446 = vmax.f32 %v4444, %v4445
        %v4447 = vrot.slane %v4446, 1
        %v4448 = vmax.f32 %v4446, %v4447
        %v4449 = vsel %vm762, %v3502, -inf
        %v4450 = vrot.slane %v4449, 4
        %v4451 = vmax.f32 %v4449, %v4450
        %v4452 = vrot.slane %v4451, 2
        %v4453 = vmax.f32 %v4451, %v4452
        %v4454 = vrot.slane %v4453, 1
        %v4455 = vmax.f32 %v4453, %v4454
        %v4456 = vsel %vm762, %v3504, -inf
        %v4457 = vrot.slane %v4456, 4
        %v4458 = vmax.f32 %v4456, %v4457
        %v4459 = vrot.slane %v4458, 2
        %v4460 = vmax.f32 %v4458, %v4459
        %v4461 = vrot.slane %v4460, 1
        %v4462 = vmax.f32 %v4460, %v4461
        %v4463 = vsel %vm762, %v3512, -inf
        %v4464 = vrot.slane %v4463, 4
        %v4465 = vmax.f32 %v4463, %v4464
        %v4466 = vrot.slane %v4465, 2
        %v4467 = vmax.f32 %v4465, %v4466
        %v4468 = vrot.slane %v4467, 1
        %v4469 = vmax.f32 %v4467, %v4468
        %v4470 = vsel %vm762, %v3520, -inf
        %v4471 = vrot.slane %v4470, 4
        %v4472 = vmax.f32 %v4470, %v4471
        %v4473 = vrot.slane %v4472, 2
        %v4474 = vmax.f32 %v4472, %v4473
        %v4475 = vrot.slane %v4474, 1
        %v4476 = vmax.f32 %v4474, %v4475
        %v4477 = vsel %vm762, %v3519, -inf
        %v4478 = vrot.slane %v4477, 4
        %v4479 = vmax.f32 %v4477, %v4478
        %v4480 = vrot.slane %v4479, 2
        %v4481 = vmax.f32 %v4479, %v4480
        %v4482 = vrot.slane %v4481, 1
        %v4483 = vmax.f32 %v4481, %v4482
        %v4484 = vsel %vm762, %v3521, -inf
        %v4485 = vrot.slane %v4484, 4
        %v4486 = vmax.f32 %v4484, %v4485
        %v4487 = vrot.slane %v4486, 2
        %v4488 = vmax.f32 %v4486, %v4487
        %v4489 = vrot.slane %v4488, 1
        %v4490 = vmax.f32 %v4488, %v4489
        %v4491 = vsel %vm762, %v3529, -inf
        %v4492 = vrot.slane %v4491, 4
        %v4493 = vmax.f32 %v4491, %v4492
        %v4494 = vrot.slane %v4493, 2
        %v4495 = vmax.f32 %v4493, %v4494
        %v4496 = vrot.slane %v4495, 1
        %v4497 = vmax.f32 %v4495, %v4496
        %v4498 = vsel %vm762, %v3537, -inf
        %v4499 = vrot.slane %v4498, 4
        %v4500 = vmax.f32 %v4498, %v4499
        %v4501 = vrot.slane %v4500, 2
        %v4502 = vmax.f32 %v4500, %v4501
        %v4503 = vrot.slane %v4502, 1
        %v4504 = vmax.f32 %v4502, %v4503
        %v4505 = vsel %vm762, %v3536, -inf
        %v4506 = vrot.slane %v4505, 4
        %v4507 = vmax.f32 %v4505, %v4506
        %v4508 = vrot.slane %v4507, 2
        %v4509 = vmax.f32 %v4507, %v4508
        %v4510 = vrot.slane %v4509, 1
        %v4511 = vmax.f32 %v4509, %v4510
        %v4512 = vsel %vm762, %v3538, -inf
        %v4513 = vrot.slane %v4512, 4
        %v4514 = vmax.f32 %v4512, %v4513
        %v4515 = vrot.slane %v4514, 2
        %v4516 = vmax.f32 %v4514, %v4515
        %v4517 = vrot.slane %v4516, 1
        %v4518 = vmax.f32 %v4516, %v4517
        %v4519 = vsel %vm762, %v3546, -inf
        %v4520 = vrot.slane %v4519, 4
        %v4521 = vmax.f32 %v4519, %v4520
        %v4522 = vrot.slane %v4521, 2
        %v4523 = vmax.f32 %v4521, %v4522
        %v4524 = vrot.slane %v4523, 1
        %v4525 = vmax.f32 %v4523, %v4524
        %v4526 = vsel %vm762, %v3554, -inf
        %v4527 = vrot.slane %v4526, 4
        %v4528 = vmax.f32 %v4526, %v4527
        %v4529 = vrot.slane %v4528, 2
        %v4530 = vmax.f32 %v4528, %v4529
        %v4531 = vrot.slane %v4530, 1
        %v4532 = vmax.f32 %v4530, %v4531
        %v4533 = vsel %vm762, %v3553, -inf
        %v4534 = vrot.slane %v4533, 4
        %v4535 = vmax.f32 %v4533, %v4534
        %v4536 = vrot.slane %v4535, 2
        %v4537 = vmax.f32 %v4535, %v4536
        %v4538 = vrot.slane %v4537, 1
        %v4539 = vmax.f32 %v4537, %v4538
        %v4540 = vsel %vm762, %v3555, -inf
        %v4541 = vrot.slane %v4540, 4
        %v4542 = vmax.f32 %v4540, %v4541
        %v4543 = vrot.slane %v4542, 2
        %v4544 = vmax.f32 %v4542, %v4543
        %v4545 = vrot.slane %v4544, 1
        %v4546 = vmax.f32 %v4544, %v4545
        %v4547 = vsel %vm762, %v3563, -inf
        %v4548 = vrot.slane %v4547, 4
        %v4549 = vmax.f32 %v4547, %v4548
        %v4550 = vrot.slane %v4549, 2
        %v4551 = vmax.f32 %v4549, %v4550
        %v4552 = vrot.slane %v4551, 1
        %v4553 = vmax.f32 %v4551, %v4552
        %v4554 = vsel %vm762, %v3571, -inf
        %v4555 = vrot.slane %v4554, 4
        %v4556 = vmax.f32 %v4554, %v4555
        %v4557 = vrot.slane %v4556, 2
        %v4558 = vmax.f32 %v4556, %v4557
        %v4559 = vrot.slane %v4558, 1
        %v4560 = vmax.f32 %v4558, %v4559
        %v4561 = vsel %vm762, %v3570, -inf
        %v4562 = vrot.slane %v4561, 4
        %v4563 = vmax.f32 %v4561, %v4562
        %v4564 = vrot.slane %v4563, 2
        %v4565 = vmax.f32 %v4563, %v4564
        %v4566 = vrot.slane %v4565, 1
        %v4567 = vmax.f32 %v4565, %v4566
        %v4568 = vsel %vm762, %v3572, -inf
        %v4569 = vrot.slane %v4568, 4
        %v4570 = vmax.f32 %v4568, %v4569
        %v4571 = vrot.slane %v4570, 2
        %v4572 = vmax.f32 %v4570, %v4571
        %v4573 = vrot.slane %v4572, 1
        %v4574 = vmax.f32 %v4572, %v4573
        %v4575 = vsel %vm762, %v3580, -inf
        %v4576 = vrot.slane %v4575, 4
        %v4577 = vmax.f32 %v4575, %v4576
        %v4578 = vrot.slane %v4577, 2
        %v4579 = vmax.f32 %v4577, %v4578
        %v4580 = vrot.slane %v4579, 1
        %v4581 = vmax.f32 %v4579, %v4580
        %v4582 = vsel %vm762, %v3588, -inf
        %v4583 = vrot.slane %v4582, 4
        %v4584 = vmax.f32 %v4582, %v4583
        %v4585 = vrot.slane %v4584, 2
        %v4586 = vmax.f32 %v4584, %v4585
        %v4587 = vrot.slane %v4586, 1
        %v4588 = vmax.f32 %v4586, %v4587
        %v4589 = vsel %vm762, %v3587, -inf
        %v4590 = vrot.slane %v4589, 4
        %v4591 = vmax.f32 %v4589, %v4590
        %v4592 = vrot.slane %v4591, 2
        %v4593 = vmax.f32 %v4591, %v4592
        %v4594 = vrot.slane %v4593, 1
        %v4595 = vmax.f32 %v4593, %v4594
        %v4596 = vsel %vm762, %v3589, -inf
        %v4597 = vrot.slane %v4596, 4
        %v4598 = vmax.f32 %v4596, %v4597
        %v4599 = vrot.slane %v4598, 2
        %v4600 = vmax.f32 %v4598, %v4599
        %v4601 = vrot.slane %v4600, 1
        %v4602 = vmax.f32 %v4600, %v4601
        %v4603 = vsel %vm762, %v3597, -inf
        %v4604 = vrot.slane %v4603, 4
        %v4605 = vmax.f32 %v4603, %v4604
        %v4606 = vrot.slane %v4605, 2
        %v4607 = vmax.f32 %v4605, %v4606
        %v4608 = vrot.slane %v4607, 1
        %v4609 = vmax.f32 %v4607, %v4608
        %v4610 = vsel %vm762, %v3605, -inf
        %v4611 = vrot.slane %v4610, 4
        %v4612 = vmax.f32 %v4610, %v4611
        %v4613 = vrot.slane %v4612, 2
        %v4614 = vmax.f32 %v4612, %v4613
        %v4615 = vrot.slane %v4614, 1
        %v4616 = vmax.f32 %v4614, %v4615
        %v4617 = vsel %vm762, %v3604, -inf
        %v4618 = vrot.slane %v4617, 4
        %v4619 = vmax.f32 %v4617, %v4618
        %v4620 = vrot.slane %v4619, 2
        %v4621 = vmax.f32 %v4619, %v4620
        %v4622 = vrot.slane %v4621, 1
        %v4623 = vmax.f32 %v4621, %v4622
        %v4624 = vsel %vm762, %v3606, -inf
        %v4625 = vrot.slane %v4624, 4
        %v4626 = vmax.f32 %v4624, %v4625
        %v4627 = vrot.slane %v4626, 2
        %v4628 = vmax.f32 %v4626, %v4627
        %v4629 = vrot.slane %v4628, 1
        %v4630 = vmax.f32 %v4628, %v4629
        %v4631 = vmax.f32 %v3741, %v3797
        %v4632 = vmax.f32 %v3748, %v3804
        %v4633 = vmax.f32 %v3755, %v3811
        %v4634 = vmax.f32 %v3762, %v3818
        %v4635 = vmax.f32 %v3769, %v3825
        %v4636 = vmax.f32 %v3776, %v3832
        %v4637 = vmax.f32 %v3783, %v3839
        %v4638 = vmax.f32 %v3790, %v3846
        %v4639 = vmax.f32 %v3853, %v3909
        %v4640 = vmax.f32 %v3860, %v3916
        %v4641 = vmax.f32 %v3867, %v3923
        %v4642 = vmax.f32 %v3874, %v3930
        %v4643 = vmax.f32 %v3881, %v3937
        %v4644 = vmax.f32 %v3888, %v3944
        %v4645 = vmax.f32 %v3895, %v3951
        %v4646 = vmax.f32 %v3902, %v3958
        %v4647 = vmax.f32 %v3965, %v4021
        %v4648 = vmax.f32 %v3972, %v4028
        %v4649 = vmax.f32 %v3979, %v4035
        %v4650 = vmax.f32 %v3986, %v4042
        %v4651 = vmax.f32 %v3993, %v4049
        %v4652 = vmax.f32 %v4000, %v4056
        %v4653 = vmax.f32 %v4007, %v4063
        %v4654 = vmax.f32 %v4014, %v4070
        %v4655 = vmax.f32 %v4077, %v4133
        %v4656 = vmax.f32 %v4084, %v4140
        %v4657 = vmax.f32 %v4091, %v4147
        %v4658 = vmax.f32 %v4098, %v4154
        %v4659 = vmax.f32 %v4105, %v4161
        %v4660 = vmax.f32 %v4112, %v4168
        %v4661 = vmax.f32 %v4119, %v4175
        %v4662 = vmax.f32 %v4126, %v4182
        %v4663 = vmax.f32 %v4189, %v4245
        %v4664 = vmax.f32 %v4196, %v4252
        %v4665 = vmax.f32 %v4203, %v4259
        %v4666 = vmax.f32 %v4210, %v4266
        %v4667 = vmax.f32 %v4217, %v4273
        %v4668 = vmax.f32 %v4224, %v4280
        %v4669 = vmax.f32 %v4231, %v4287
        %v4670 = vmax.f32 %v4238, %v4294
        %v4671 = vmax.f32 %v4301, %v4357
        %v4672 = vmax.f32 %v4308, %v4364
        %v4673 = vmax.f32 %v4315, %v4371
        %v4674 = vmax.f32 %v4322, %v4378
        %v4675 = vmax.f32 %v4329, %v4385
        %v4676 = vmax.f32 %v4336, %v4392
        %v4677 = vmax.f32 %v4343, %v4399
        %v4678 = vmax.f32 %v4350, %v4406
        %v4679 = vmax.f32 %v4413, %v4469
        %v4680 = vmax.f32 %v4420, %v4476
        %v4681 = vmax.f32 %v4427, %v4483
        %v4682 = vmax.f32 %v4434, %v4490
        %v4683 = vmax.f32 %v4441, %v4497
        %v4684 = vmax.f32 %v4448, %v4504
        %v4685 = vmax.f32 %v4455, %v4511
        %v4686 = vmax.f32 %v4462, %v4518
        %v4687 = vmax.f32 %v4525, %v4581
        %v4688 = vmax.f32 %v4532, %v4588
        %v4689 = vmax.f32 %v4539, %v4595
        %v4690 = vmax.f32 %v4546, %v4602
        %v4691 = vmax.f32 %v4553, %v4609
        %v4692 = vmax.f32 %v4560, %v4616
        %v4693 = vmax.f32 %v4567, %v4623
        %v4694 = vmax.f32 %v4574, %v4630
        %v4695 = vsel %vm762, %v3070, inf
        %v4696 = vrot.slane %v4695, 4
        %v4697 = vmin.f32 %v4695, %v4696
        %v4698 = vrot.slane %v4697, 2
        %v4699 = vmin.f32 %v4697, %v4698
        %v4700 = vrot.slane %v4699, 1
        %v4701 = vmin.f32 %v4699, %v4700
        %v4702 = vsel %vm762, %v3078, inf
        %v4703 = vrot.slane %v4702, 4
        %v4704 = vmin.f32 %v4702, %v4703
        %v4705 = vrot.slane %v4704, 2
        %v4706 = vmin.f32 %v4704, %v4705
        %v4707 = vrot.slane %v4706, 1
        %v4708 = vmin.f32 %v4706, %v4707
        %v4709 = vsel %vm762, %v3077, inf
        %v4710 = vrot.slane %v4709, 4
        %v4711 = vmin.f32 %v4709, %v4710
        %v4712 = vrot.slane %v4711, 2
        %v4713 = vmin.f32 %v4711, %v4712
        %v4714 = vrot.slane %v4713, 1
        %v4715 = vmin.f32 %v4713, %v4714
        %v4716 = vsel %vm762, %v3079, inf
        %v4717 = vrot.slane %v4716, 4
        %v4718 = vmin.f32 %v4716, %v4717
        %v4719 = vrot.slane %v4718, 2
        %v4720 = vmin.f32 %v4718, %v4719
        %v4721 = vrot.slane %v4720, 1
        %v4722 = vmin.f32 %v4720, %v4721
        %v4723 = vsel %vm762, %v3087, inf
        %v4724 = vrot.slane %v4723, 4
        %v4725 = vmin.f32 %v4723, %v4724
        %v4726 = vrot.slane %v4725, 2
        %v4727 = vmin.f32 %v4725, %v4726
        %v4728 = vrot.slane %v4727, 1
        %v4729 = vmin.f32 %v4727, %v4728
        %v4730 = vsel %vm762, %v3095, inf
        %v4731 = vrot.slane %v4730, 4
        %v4732 = vmin.f32 %v4730, %v4731
        %v4733 = vrot.slane %v4732, 2
        %v4734 = vmin.f32 %v4732, %v4733
        %v4735 = vrot.slane %v4734, 1
        %v4736 = vmin.f32 %v4734, %v4735
        %v4737 = vsel %vm762, %v3094, inf
        %v4738 = vrot.slane %v4737, 4
        %v4739 = vmin.f32 %v4737, %v4738
        %v4740 = vrot.slane %v4739, 2
        %v4741 = vmin.f32 %v4739, %v4740
        %v4742 = vrot.slane %v4741, 1
        %v4743 = vmin.f32 %v4741, %v4742
        %v4744 = vsel %vm762, %v3096, inf
        %v4745 = vrot.slane %v4744, 4
        %v4746 = vmin.f32 %v4744, %v4745
        %v4747 = vrot.slane %v4746, 2
        %v4748 = vmin.f32 %v4746, %v4747
        %v4749 = vrot.slane %v4748, 1
        %v4750 = vmin.f32 %v4748, %v4749
        %v4751 = vsel %vm762, %v3104, inf
        %v4752 = vrot.slane %v4751, 4
        %v4753 = vmin.f32 %v4751, %v4752
        %v4754 = vrot.slane %v4753, 2
        %v4755 = vmin.f32 %v4753, %v4754
        %v4756 = vrot.slane %v4755, 1
        %v4757 = vmin.f32 %v4755, %v4756
        %v4758 = vsel %vm762, %v3112, inf
        %v4759 = vrot.slane %v4758, 4
        %v4760 = vmin.f32 %v4758, %v4759
        %v4761 = vrot.slane %v4760, 2
        %v4762 = vmin.f32 %v4760, %v4761
        %v4763 = vrot.slane %v4762, 1
        %v4764 = vmin.f32 %v4762, %v4763
        %v4765 = vsel %vm762, %v3111, inf
        %v4766 = vrot.slane %v4765, 4
        %v4767 = vmin.f32 %v4765, %v4766
        %v4768 = vrot.slane %v4767, 2
        %v4769 = vmin.f32 %v4767, %v4768
        %v4770 = vrot.slane %v4769, 1
        %v4771 = vmin.f32 %v4769, %v4770
        %v4772 = vsel %vm762, %v3113, inf
        %v4773 = vrot.slane %v4772, 4
        %v4774 = vmin.f32 %v4772, %v4773
        %v4775 = vrot.slane %v4774, 2
        %v4776 = vmin.f32 %v4774, %v4775
        %v4777 = vrot.slane %v4776, 1
        %v4778 = vmin.f32 %v4776, %v4777
        %v4779 = vsel %vm762, %v3121, inf
        %v4780 = vrot.slane %v4779, 4
        %v4781 = vmin.f32 %v4779, %v4780
        %v4782 = vrot.slane %v4781, 2
        %v4783 = vmin.f32 %v4781, %v4782
        %v4784 = vrot.slane %v4783, 1
        %v4785 = vmin.f32 %v4783, %v4784
        %v4786 = vsel %vm762, %v3129, inf
        %v4787 = vrot.slane %v4786, 4
        %v4788 = vmin.f32 %v4786, %v4787
        %v4789 = vrot.slane %v4788, 2
        %v4790 = vmin.f32 %v4788, %v4789
        %v4791 = vrot.slane %v4790, 1
        %v4792 = vmin.f32 %v4790, %v4791
        %v4793 = vsel %vm762, %v3128, inf
        %v4794 = vrot.slane %v4793, 4
        %v4795 = vmin.f32 %v4793, %v4794
        %v4796 = vrot.slane %v4795, 2
        %v4797 = vmin.f32 %v4795, %v4796
        %v4798 = vrot.slane %v4797, 1
        %v4799 = vmin.f32 %v4797, %v4798
        %v4800 = vsel %vm762, %v3130, inf
        %v4801 = vrot.slane %v4800, 4
        %v4802 = vmin.f32 %v4800, %v4801
        %v4803 = vrot.slane %v4802, 2
        %v4804 = vmin.f32 %v4802, %v4803
        %v4805 = vrot.slane %v4804, 1
        %v4806 = vmin.f32 %v4804, %v4805
        %v4807 = vsel %vm762, %v3138, inf
        %v4808 = vrot.slane %v4807, 4
        %v4809 = vmin.f32 %v4807, %v4808
        %v4810 = vrot.slane %v4809, 2
        %v4811 = vmin.f32 %v4809, %v4810
        %v4812 = vrot.slane %v4811, 1
        %v4813 = vmin.f32 %v4811, %v4812
        %v4814 = vsel %vm762, %v3146, inf
        %v4815 = vrot.slane %v4814, 4
        %v4816 = vmin.f32 %v4814, %v4815
        %v4817 = vrot.slane %v4816, 2
        %v4818 = vmin.f32 %v4816, %v4817
        %v4819 = vrot.slane %v4818, 1
        %v4820 = vmin.f32 %v4818, %v4819
        %v4821 = vsel %vm762, %v3145, inf
        %v4822 = vrot.slane %v4821, 4
        %v4823 = vmin.f32 %v4821, %v4822
        %v4824 = vrot.slane %v4823, 2
        %v4825 = vmin.f32 %v4823, %v4824
        %v4826 = vrot.slane %v4825, 1
        %v4827 = vmin.f32 %v4825, %v4826
        %v4828 = vsel %vm762, %v3147, inf
        %v4829 = vrot.slane %v4828, 4
        %v4830 = vmin.f32 %v4828, %v4829
        %v4831 = vrot.slane %v4830, 2
        %v4832 = vmin.f32 %v4830, %v4831
        %v4833 = vrot.slane %v4832, 1
        %v4834 = vmin.f32 %v4832, %v4833
        %v4835 = vsel %vm762, %v3155, inf
        %v4836 = vrot.slane %v4835, 4
        %v4837 = vmin.f32 %v4835, %v4836
        %v4838 = vrot.slane %v4837, 2
        %v4839 = vmin.f32 %v4837, %v4838
        %v4840 = vrot.slane %v4839, 1
        %v4841 = vmin.f32 %v4839, %v4840
        %v4842 = vsel %vm762, %v3163, inf
        %v4843 = vrot.slane %v4842, 4
        %v4844 = vmin.f32 %v4842, %v4843
        %v4845 = vrot.slane %v4844, 2
        %v4846 = vmin.f32 %v4844, %v4845
        %v4847 = vrot.slane %v4846, 1
        %v4848 = vmin.f32 %v4846, %v4847
        %v4849 = vsel %vm762, %v3162, inf
        %v4850 = vrot.slane %v4849, 4
        %v4851 = vmin.f32 %v4849, %v4850
        %v4852 = vrot.slane %v4851, 2
        %v4853 = vmin.f32 %v4851, %v4852
        %v4854 = vrot.slane %v4853, 1
        %v4855 = vmin.f32 %v4853, %v4854
        %v4856 = vsel %vm762, %v3164, inf
        %v4857 = vrot.slane %v4856, 4
        %v4858 = vmin.f32 %v4856, %v4857
        %v4859 = vrot.slane %v4858, 2
        %v4860 = vmin.f32 %v4858, %v4859
        %v4861 = vrot.slane %v4860, 1
        %v4862 = vmin.f32 %v4860, %v4861
        %v4863 = vsel %vm762, %v3172, inf
        %v4864 = vrot.slane %v4863, 4
        %v4865 = vmin.f32 %v4863, %v4864
        %v4866 = vrot.slane %v4865, 2
        %v4867 = vmin.f32 %v4865, %v4866
        %v4868 = vrot.slane %v4867, 1
        %v4869 = vmin.f32 %v4867, %v4868
        %v4870 = vsel %vm762, %v3180, inf
        %v4871 = vrot.slane %v4870, 4
        %v4872 = vmin.f32 %v4870, %v4871
        %v4873 = vrot.slane %v4872, 2
        %v4874 = vmin.f32 %v4872, %v4873
        %v4875 = vrot.slane %v4874, 1
        %v4876 = vmin.f32 %v4874, %v4875
        %v4877 = vsel %vm762, %v3179, inf
        %v4878 = vrot.slane %v4877, 4
        %v4879 = vmin.f32 %v4877, %v4878
        %v4880 = vrot.slane %v4879, 2
        %v4881 = vmin.f32 %v4879, %v4880
        %v4882 = vrot.slane %v4881, 1
        %v4883 = vmin.f32 %v4881, %v4882
        %v4884 = vsel %vm762, %v3181, inf
        %v4885 = vrot.slane %v4884, 4
        %v4886 = vmin.f32 %v4884, %v4885
        %v4887 = vrot.slane %v4886, 2
        %v4888 = vmin.f32 %v4886, %v4887
        %v4889 = vrot.slane %v4888, 1
        %v4890 = vmin.f32 %v4888, %v4889
        %v4891 = vsel %vm762, %v3189, inf
        %v4892 = vrot.slane %v4891, 4
        %v4893 = vmin.f32 %v4891, %v4892
        %v4894 = vrot.slane %v4893, 2
        %v4895 = vmin.f32 %v4893, %v4894
        %v4896 = vrot.slane %v4895, 1
        %v4897 = vmin.f32 %v4895, %v4896
        %v4898 = vsel %vm762, %v3197, inf
        %v4899 = vrot.slane %v4898, 4
        %v4900 = vmin.f32 %v4898, %v4899
        %v4901 = vrot.slane %v4900, 2
        %v4902 = vmin.f32 %v4900, %v4901
        %v4903 = vrot.slane %v4902, 1
        %v4904 = vmin.f32 %v4902, %v4903
        %v4905 = vsel %vm762, %v3196, inf
        %v4906 = vrot.slane %v4905, 4
        %v4907 = vmin.f32 %v4905, %v4906
        %v4908 = vrot.slane %v4907, 2
        %v4909 = vmin.f32 %v4907, %v4908
        %v4910 = vrot.slane %v4909, 1
        %v4911 = vmin.f32 %v4909, %v4910
        %v4912 = vsel %vm762, %v3198, inf
        %v4913 = vrot.slane %v4912, 4
        %v4914 = vmin.f32 %v4912, %v4913
        %v4915 = vrot.slane %v4914, 2
        %v4916 = vmin.f32 %v4914, %v4915
        %v4917 = vrot.slane %v4916, 1
        %v4918 = vmin.f32 %v4916, %v4917
        %v4919 = vsel %vm762, %v3206, inf
        %v4920 = vrot.slane %v4919, 4
        %v4921 = vmin.f32 %v4919, %v4920
        %v4922 = vrot.slane %v4921, 2
        %v4923 = vmin.f32 %v4921, %v4922
        %v4924 = vrot.slane %v4923, 1
        %v4925 = vmin.f32 %v4923, %v4924
        %v4926 = vsel %vm762, %v3214, inf
        %v4927 = vrot.slane %v4926, 4
        %v4928 = vmin.f32 %v4926, %v4927
        %v4929 = vrot.slane %v4928, 2
        %v4930 = vmin.f32 %v4928, %v4929
        %v4931 = vrot.slane %v4930, 1
        %v4932 = vmin.f32 %v4930, %v4931
        %v4933 = vsel %vm762, %v3213, inf
        %v4934 = vrot.slane %v4933, 4
        %v4935 = vmin.f32 %v4933, %v4934
        %v4936 = vrot.slane %v4935, 2
        %v4937 = vmin.f32 %v4935, %v4936
        %v4938 = vrot.slane %v4937, 1
        %v4939 = vmin.f32 %v4937, %v4938
        %v4940 = vsel %vm762, %v3215, inf
        %v4941 = vrot.slane %v4940, 4
        %v4942 = vmin.f32 %v4940, %v4941
        %v4943 = vrot.slane %v4942, 2
        %v4944 = vmin.f32 %v4942, %v4943
        %v4945 = vrot.slane %v4944, 1
        %v4946 = vmin.f32 %v4944, %v4945
        %v4947 = vsel %vm762, %v3223, inf
        %v4948 = vrot.slane %v4947, 4
        %v4949 = vmin.f32 %v4947, %v4948
        %v4950 = vrot.slane %v4949, 2
        %v4951 = vmin.f32 %v4949, %v4950
        %v4952 = vrot.slane %v4951, 1
        %v4953 = vmin.f32 %v4951, %v4952
        %v4954 = vsel %vm762, %v3231, inf
        %v4955 = vrot.slane %v4954, 4
        %v4956 = vmin.f32 %v4954, %v4955
        %v4957 = vrot.slane %v4956, 2
        %v4958 = vmin.f32 %v4956, %v4957
        %v4959 = vrot.slane %v4958, 1
        %v4960 = vmin.f32 %v4958, %v4959
        %v4961 = vsel %vm762, %v3230, inf
        %v4962 = vrot.slane %v4961, 4
        %v4963 = vmin.f32 %v4961, %v4962
        %v4964 = vrot.slane %v4963, 2
        %v4965 = vmin.f32 %v4963, %v4964
        %v4966 = vrot.slane %v4965, 1
        %v4967 = vmin.f32 %v4965, %v4966
        %v4968 = vsel %vm762, %v3232, inf
        %v4969 = vrot.slane %v4968, 4
        %v4970 = vmin.f32 %v4968, %v4969
        %v4971 = vrot.slane %v4970, 2
        %v4972 = vmin.f32 %v4970, %v4971
        %v4973 = vrot.slane %v4972, 1
        %v4974 = vmin.f32 %v4972, %v4973
        %v4975 = vsel %vm762, %v3240, inf
        %v4976 = vrot.slane %v4975, 4
        %v4977 = vmin.f32 %v4975, %v4976
        %v4978 = vrot.slane %v4977, 2
        %v4979 = vmin.f32 %v4977, %v4978
        %v4980 = vrot.slane %v4979, 1
        %v4981 = vmin.f32 %v4979, %v4980
        %v4982 = vsel %vm762, %v3248, inf
        %v4983 = vrot.slane %v4982, 4
        %v4984 = vmin.f32 %v4982, %v4983
        %v4985 = vrot.slane %v4984, 2
        %v4986 = vmin.f32 %v4984, %v4985
        %v4987 = vrot.slane %v4986, 1
        %v4988 = vmin.f32 %v4986, %v4987
        %v4989 = vsel %vm762, %v3247, inf
        %v4990 = vrot.slane %v4989, 4
        %v4991 = vmin.f32 %v4989, %v4990
        %v4992 = vrot.slane %v4991, 2
        %v4993 = vmin.f32 %v4991, %v4992
        %v4994 = vrot.slane %v4993, 1
        %v4995 = vmin.f32 %v4993, %v4994
        %v4996 = vsel %vm762, %v3249, inf
        %v4997 = vrot.slane %v4996, 4
        %v4998 = vmin.f32 %v4996, %v4997
        %v4999 = vrot.slane %v4998, 2
        %v5000 = vmin.f32 %v4998, %v4999
        %v5001 = vrot.slane %v5000, 1
        %v5002 = vmin.f32 %v5000, %v5001
        %v5003 = vsel %vm762, %v3257, inf
        %v5004 = vrot.slane %v5003, 4
        %v5005 = vmin.f32 %v5003, %v5004
        %v5006 = vrot.slane %v5005, 2
        %v5007 = vmin.f32 %v5005, %v5006
        %v5008 = vrot.slane %v5007, 1
        %v5009 = vmin.f32 %v5007, %v5008
        %v5010 = vsel %vm762, %v3265, inf
        %v5011 = vrot.slane %v5010, 4
        %v5012 = vmin.f32 %v5010, %v5011
        %v5013 = vrot.slane %v5012, 2
        %v5014 = vmin.f32 %v5012, %v5013
        %v5015 = vrot.slane %v5014, 1
        %v5016 = vmin.f32 %v5014, %v5015
        %v5017 = vsel %vm762, %v3264, inf
        %v5018 = vrot.slane %v5017, 4
        %v5019 = vmin.f32 %v5017, %v5018
        %v5020 = vrot.slane %v5019, 2
        %v5021 = vmin.f32 %v5019, %v5020
        %v5022 = vrot.slane %v5021, 1
        %v5023 = vmin.f32 %v5021, %v5022
        %v5024 = vsel %vm762, %v3266, inf
        %v5025 = vrot.slane %v5024, 4
        %v5026 = vmin.f32 %v5024, %v5025
        %v5027 = vrot.slane %v5026, 2
        %v5028 = vmin.f32 %v5026, %v5027
        %v5029 = vrot.slane %v5028, 1
        %v5030 = vmin.f32 %v5028, %v5029
        %v5031 = vsel %vm762, %v3274, inf
        %v5032 = vrot.slane %v5031, 4
        %v5033 = vmin.f32 %v5031, %v5032
        %v5034 = vrot.slane %v5033, 2
        %v5035 = vmin.f32 %v5033, %v5034
        %v5036 = vrot.slane %v5035, 1
        %v5037 = vmin.f32 %v5035, %v5036
        %v5038 = vsel %vm762, %v3282, inf
        %v5039 = vrot.slane %v5038, 4
        %v5040 = vmin.f32 %v5038, %v5039
        %v5041 = vrot.slane %v5040, 2
        %v5042 = vmin.f32 %v5040, %v5041
        %v5043 = vrot.slane %v5042, 1
        %v5044 = vmin.f32 %v5042, %v5043
        %v5045 = vsel %vm762, %v3281, inf
        %v5046 = vrot.slane %v5045, 4
        %v5047 = vmin.f32 %v5045, %v5046
        %v5048 = vrot.slane %v5047, 2
        %v5049 = vmin.f32 %v5047, %v5048
        %v5050 = vrot.slane %v5049, 1
        %v5051 = vmin.f32 %v5049, %v5050
        %v5052 = vsel %vm762, %v3283, inf
        %v5053 = vrot.slane %v5052, 4
        %v5054 = vmin.f32 %v5052, %v5053
        %v5055 = vrot.slane %v5054, 2
        %v5056 = vmin.f32 %v5054, %v5055
        %v5057 = vrot.slane %v5056, 1
        %v5058 = vmin.f32 %v5056, %v5057
        %v5059 = vsel %vm762, %v3291, inf
        %v5060 = vrot.slane %v5059, 4
        %v5061 = vmin.f32 %v5059, %v5060
        %v5062 = vrot.slane %v5061, 2
        %v5063 = vmin.f32 %v5061, %v5062
        %v5064 = vrot.slane %v5063, 1
        %v5065 = vmin.f32 %v5063, %v5064
        %v5066 = vsel %vm762, %v3299, inf
        %v5067 = vrot.slane %v5066, 4
        %v5068 = vmin.f32 %v5066, %v5067
        %v5069 = vrot.slane %v5068, 2
        %v5070 = vmin.f32 %v5068, %v5069
        %v5071 = vrot.slane %v5070, 1
        %v5072 = vmin.f32 %v5070, %v5071
        %v5073 = vsel %vm762, %v3298, inf
        %v5074 = vrot.slane %v5073, 4
        %v5075 = vmin.f32 %v5073, %v5074
        %v5076 = vrot.slane %v5075, 2
        %v5077 = vmin.f32 %v5075, %v5076
        %v5078 = vrot.slane %v5077, 1
        %v5079 = vmin.f32 %v5077, %v5078
        %v5080 = vsel %vm762, %v3300, inf
        %v5081 = vrot.slane %v5080, 4
        %v5082 = vmin.f32 %v5080, %v5081
        %v5083 = vrot.slane %v5082, 2
        %v5084 = vmin.f32 %v5082, %v5083
        %v5085 = vrot.slane %v5084, 1
        %v5086 = vmin.f32 %v5084, %v5085
        %v5087 = vsel %vm762, %v3308, inf
        %v5088 = vrot.slane %v5087, 4
        %v5089 = vmin.f32 %v5087, %v5088
        %v5090 = vrot.slane %v5089, 2
        %v5091 = vmin.f32 %v5089, %v5090
        %v5092 = vrot.slane %v5091, 1
        %v5093 = vmin.f32 %v5091, %v5092
        %v5094 = vsel %vm762, %v3316, inf
        %v5095 = vrot.slane %v5094, 4
        %v5096 = vmin.f32 %v5094, %v5095
        %v5097 = vrot.slane %v5096, 2
        %v5098 = vmin.f32 %v5096, %v5097
        %v5099 = vrot.slane %v5098, 1
        %v5100 = vmin.f32 %v5098, %v5099
        %v5101 = vsel %vm762, %v3315, inf
        %v5102 = vrot.slane %v5101, 4
        %v5103 = vmin.f32 %v5101, %v5102
        %v5104 = vrot.slane %v5103, 2
        %v5105 = vmin.f32 %v5103, %v5104
        %v5106 = vrot.slane %v5105, 1
        %v5107 = vmin.f32 %v5105, %v5106
        %v5108 = vsel %vm762, %v3317, inf
        %v5109 = vrot.slane %v5108, 4
        %v5110 = vmin.f32 %v5108, %v5109
        %v5111 = vrot.slane %v5110, 2
        %v5112 = vmin.f32 %v5110, %v5111
        %v5113 = vrot.slane %v5112, 1
        %v5114 = vmin.f32 %v5112, %v5113
        %v5115 = vsel %vm762, %v3325, inf
        %v5116 = vrot.slane %v5115, 4
        %v5117 = vmin.f32 %v5115, %v5116
        %v5118 = vrot.slane %v5117, 2
        %v5119 = vmin.f32 %v5117, %v5118
        %v5120 = vrot.slane %v5119, 1
        %v5121 = vmin.f32 %v5119, %v5120
        %v5122 = vsel %vm762, %v3333, inf
        %v5123 = vrot.slane %v5122, 4
        %v5124 = vmin.f32 %v5122, %v5123
        %v5125 = vrot.slane %v5124, 2
        %v5126 = vmin.f32 %v5124, %v5125
        %v5127 = vrot.slane %v5126, 1
        %v5128 = vmin.f32 %v5126, %v5127
        %v5129 = vsel %vm762, %v3332, inf
        %v5130 = vrot.slane %v5129, 4
        %v5131 = vmin.f32 %v5129, %v5130
        %v5132 = vrot.slane %v5131, 2
        %v5133 = vmin.f32 %v5131, %v5132
        %v5134 = vrot.slane %v5133, 1
        %v5135 = vmin.f32 %v5133, %v5134
        %v5136 = vsel %vm762, %v3334, inf
        %v5137 = vrot.slane %v5136, 4
        %v5138 = vmin.f32 %v5136, %v5137
        %v5139 = vrot.slane %v5138, 2
        %v5140 = vmin.f32 %v5138, %v5139
        %v5141 = vrot.slane %v5140, 1
        %v5142 = vmin.f32 %v5140, %v5141
        %v5143 = vsel %vm762, %v3342, inf
        %v5144 = vrot.slane %v5143, 4
        %v5145 = vmin.f32 %v5143, %v5144
        %v5146 = vrot.slane %v5145, 2
        %v5147 = vmin.f32 %v5145, %v5146
        %v5148 = vrot.slane %v5147, 1
        %v5149 = vmin.f32 %v5147, %v5148
        %v5150 = vsel %vm762, %v3350, inf
        %v5151 = vrot.slane %v5150, 4
        %v5152 = vmin.f32 %v5150, %v5151
        %v5153 = vrot.slane %v5152, 2
        %v5154 = vmin.f32 %v5152, %v5153
        %v5155 = vrot.slane %v5154, 1
        %v5156 = vmin.f32 %v5154, %v5155
        %v5157 = vsel %vm762, %v3349, inf
        %v5158 = vrot.slane %v5157, 4
        %v5159 = vmin.f32 %v5157, %v5158
        %v5160 = vrot.slane %v5159, 2
        %v5161 = vmin.f32 %v5159, %v5160
        %v5162 = vrot.slane %v5161, 1
        %v5163 = vmin.f32 %v5161, %v5162
        %v5164 = vsel %vm762, %v3351, inf
        %v5165 = vrot.slane %v5164, 4
        %v5166 = vmin.f32 %v5164, %v5165
        %v5167 = vrot.slane %v5166, 2
        %v5168 = vmin.f32 %v5166, %v5167
        %v5169 = vrot.slane %v5168, 1
        %v5170 = vmin.f32 %v5168, %v5169
        %v5171 = vsel %vm762, %v3359, inf
        %v5172 = vrot.slane %v5171, 4
        %v5173 = vmin.f32 %v5171, %v5172
        %v5174 = vrot.slane %v5173, 2
        %v5175 = vmin.f32 %v5173, %v5174
        %v5176 = vrot.slane %v5175, 1
        %v5177 = vmin.f32 %v5175, %v5176
        %v5178 = vsel %vm762, %v3367, inf
        %v5179 = vrot.slane %v5178, 4
        %v5180 = vmin.f32 %v5178, %v5179
        %v5181 = vrot.slane %v5180, 2
        %v5182 = vmin.f32 %v5180, %v5181
        %v5183 = vrot.slane %v5182, 1
        %v5184 = vmin.f32 %v5182, %v5183
        %v5185 = vsel %vm762, %v3366, inf
        %v5186 = vrot.slane %v5185, 4
        %v5187 = vmin.f32 %v5185, %v5186
        %v5188 = vrot.slane %v5187, 2
        %v5189 = vmin.f32 %v5187, %v5188
        %v5190 = vrot.slane %v5189, 1
        %v5191 = vmin.f32 %v5189, %v5190
        %v5192 = vsel %vm762, %v3368, inf
        %v5193 = vrot.slane %v5192, 4
        %v5194 = vmin.f32 %v5192, %v5193
        %v5195 = vrot.slane %v5194, 2
        %v5196 = vmin.f32 %v5194, %v5195
        %v5197 = vrot.slane %v5196, 1
        %v5198 = vmin.f32 %v5196, %v5197
        %v5199 = vsel %vm762, %v3376, inf
        %v5200 = vrot.slane %v5199, 4
        %v5201 = vmin.f32 %v5199, %v5200
        %v5202 = vrot.slane %v5201, 2
        %v5203 = vmin.f32 %v5201, %v5202
        %v5204 = vrot.slane %v5203, 1
        %v5205 = vmin.f32 %v5203, %v5204
        %v5206 = vsel %vm762, %v3384, inf
        %v5207 = vrot.slane %v5206, 4
        %v5208 = vmin.f32 %v5206, %v5207
        %v5209 = vrot.slane %v5208, 2
        %v5210 = vmin.f32 %v5208, %v5209
        %v5211 = vrot.slane %v5210, 1
        %v5212 = vmin.f32 %v5210, %v5211
        %v5213 = vsel %vm762, %v3383, inf
        %v5214 = vrot.slane %v5213, 4
        %v5215 = vmin.f32 %v5213, %v5214
        %v5216 = vrot.slane %v5215, 2
        %v5217 = vmin.f32 %v5215, %v5216
        %v5218 = vrot.slane %v5217, 1
        %v5219 = vmin.f32 %v5217, %v5218
        %v5220 = vsel %vm762, %v3385, inf
        %v5221 = vrot.slane %v5220, 4
        %v5222 = vmin.f32 %v5220, %v5221
        %v5223 = vrot.slane %v5222, 2
        %v5224 = vmin.f32 %v5222, %v5223
        %v5225 = vrot.slane %v5224, 1
        %v5226 = vmin.f32 %v5224, %v5225
        %v5227 = vsel %vm762, %v3393, inf
        %v5228 = vrot.slane %v5227, 4
        %v5229 = vmin.f32 %v5227, %v5228
        %v5230 = vrot.slane %v5229, 2
        %v5231 = vmin.f32 %v5229, %v5230
        %v5232 = vrot.slane %v5231, 1
        %v5233 = vmin.f32 %v5231, %v5232
        %v5234 = vsel %vm762, %v3401, inf
        %v5235 = vrot.slane %v5234, 4
        %v5236 = vmin.f32 %v5234, %v5235
        %v5237 = vrot.slane %v5236, 2
        %v5238 = vmin.f32 %v5236, %v5237
        %v5239 = vrot.slane %v5238, 1
        %v5240 = vmin.f32 %v5238, %v5239
        %v5241 = vsel %vm762, %v3400, inf
        %v5242 = vrot.slane %v5241, 4
        %v5243 = vmin.f32 %v5241, %v5242
        %v5244 = vrot.slane %v5243, 2
        %v5245 = vmin.f32 %v5243, %v5244
        %v5246 = vrot.slane %v5245, 1
        %v5247 = vmin.f32 %v5245, %v5246
        %v5248 = vsel %vm762, %v3402, inf
        %v5249 = vrot.slane %v5248, 4
        %v5250 = vmin.f32 %v5248, %v5249
        %v5251 = vrot.slane %v5250, 2
        %v5252 = vmin.f32 %v5250, %v5251
        %v5253 = vrot.slane %v5252, 1
        %v5254 = vmin.f32 %v5252, %v5253
        %v5255 = vsel %vm762, %v3410, inf
        %v5256 = vrot.slane %v5255, 4
        %v5257 = vmin.f32 %v5255, %v5256
        %v5258 = vrot.slane %v5257, 2
        %v5259 = vmin.f32 %v5257, %v5258
        %v5260 = vrot.slane %v5259, 1
        %v5261 = vmin.f32 %v5259, %v5260
        %v5262 = vsel %vm762, %v3418, inf
        %v5263 = vrot.slane %v5262, 4
        %v5264 = vmin.f32 %v5262, %v5263
        %v5265 = vrot.slane %v5264, 2
        %v5266 = vmin.f32 %v5264, %v5265
        %v5267 = vrot.slane %v5266, 1
        %v5268 = vmin.f32 %v5266, %v5267
        %v5269 = vsel %vm762, %v3417, inf
        %v5270 = vrot.slane %v5269, 4
        %v5271 = vmin.f32 %v5269, %v5270
        %v5272 = vrot.slane %v5271, 2
        %v5273 = vmin.f32 %v5271, %v5272
        %v5274 = vrot.slane %v5273, 1
        %v5275 = vmin.f32 %v5273, %v5274
        %v5276 = vsel %vm762, %v3419, inf
        %v5277 = vrot.slane %v5276, 4
        %v5278 = vmin.f32 %v5276, %v5277
        %v5279 = vrot.slane %v5278, 2
        %v5280 = vmin.f32 %v5278, %v5279
        %v5281 = vrot.slane %v5280, 1
        %v5282 = vmin.f32 %v5280, %v5281
        %v5283 = vsel %vm762, %v3427, inf
        %v5284 = vrot.slane %v5283, 4
        %v5285 = vmin.f32 %v5283, %v5284
        %v5286 = vrot.slane %v5285, 2
        %v5287 = vmin.f32 %v5285, %v5286
        %v5288 = vrot.slane %v5287, 1
        %v5289 = vmin.f32 %v5287, %v5288
        %v5290 = vsel %vm762, %v3435, inf
        %v5291 = vrot.slane %v5290, 4
        %v5292 = vmin.f32 %v5290, %v5291
        %v5293 = vrot.slane %v5292, 2
        %v5294 = vmin.f32 %v5292, %v5293
        %v5295 = vrot.slane %v5294, 1
        %v5296 = vmin.f32 %v5294, %v5295
        %v5297 = vsel %vm762, %v3434, inf
        %v5298 = vrot.slane %v5297, 4
        %v5299 = vmin.f32 %v5297, %v5298
        %v5300 = vrot.slane %v5299, 2
        %v5301 = vmin.f32 %v5299, %v5300
        %v5302 = vrot.slane %v5301, 1
        %v5303 = vmin.f32 %v5301, %v5302
        %v5304 = vsel %vm762, %v3436, inf
        %v5305 = vrot.slane %v5304, 4
        %v5306 = vmin.f32 %v5304, %v5305
        %v5307 = vrot.slane %v5306, 2
        %v5308 = vmin.f32 %v5306, %v5307
        %v5309 = vrot.slane %v5308, 1
        %v5310 = vmin.f32 %v5308, %v5309
        %v5311 = vsel %vm762, %v3444, inf
        %v5312 = vrot.slane %v5311, 4
        %v5313 = vmin.f32 %v5311, %v5312
        %v5314 = vrot.slane %v5313, 2
        %v5315 = vmin.f32 %v5313, %v5314
        %v5316 = vrot.slane %v5315, 1
        %v5317 = vmin.f32 %v5315, %v5316
        %v5318 = vsel %vm762, %v3452, inf
        %v5319 = vrot.slane %v5318, 4
        %v5320 = vmin.f32 %v5318, %v5319
        %v5321 = vrot.slane %v5320, 2
        %v5322 = vmin.f32 %v5320, %v5321
        %v5323 = vrot.slane %v5322, 1
        %v5324 = vmin.f32 %v5322, %v5323
        %v5325 = vsel %vm762, %v3451, inf
        %v5326 = vrot.slane %v5325, 4
        %v5327 = vmin.f32 %v5325, %v5326
        %v5328 = vrot.slane %v5327, 2
        %v5329 = vmin.f32 %v5327, %v5328
        %v5330 = vrot.slane %v5329, 1
        %v5331 = vmin.f32 %v5329, %v5330
        %v5332 = vsel %vm762, %v3453, inf
        %v5333 = vrot.slane %v5332, 4
        %v5334 = vmin.f32 %v5332, %v5333
        %v5335 = vrot.slane %v5334, 2
        %v5336 = vmin.f32 %v5334, %v5335
        %v5337 = vrot.slane %v5336, 1
        %v5338 = vmin.f32 %v5336, %v5337
        %v5339 = vsel %vm762, %v3461, inf
        %v5340 = vrot.slane %v5339, 4
        %v5341 = vmin.f32 %v5339, %v5340
        %v5342 = vrot.slane %v5341, 2
        %v5343 = vmin.f32 %v5341, %v5342
        %v5344 = vrot.slane %v5343, 1
        %v5345 = vmin.f32 %v5343, %v5344
        %v5346 = vsel %vm762, %v3469, inf
        %v5347 = vrot.slane %v5346, 4
        %v5348 = vmin.f32 %v5346, %v5347
        %v5349 = vrot.slane %v5348, 2
        %v5350 = vmin.f32 %v5348, %v5349
        %v5351 = vrot.slane %v5350, 1
        %v5352 = vmin.f32 %v5350, %v5351
        %v5353 = vsel %vm762, %v3468, inf
        %v5354 = vrot.slane %v5353, 4
        %v5355 = vmin.f32 %v5353, %v5354
        %v5356 = vrot.slane %v5355, 2
        %v5357 = vmin.f32 %v5355, %v5356
        %v5358 = vrot.slane %v5357, 1
        %v5359 = vmin.f32 %v5357, %v5358
        %v5360 = vsel %vm762, %v3470, inf
        %v5361 = vrot.slane %v5360, 4
        %v5362 = vmin.f32 %v5360, %v5361
        %v5363 = vrot.slane %v5362, 2
        %v5364 = vmin.f32 %v5362, %v5363
        %v5365 = vrot.slane %v5364, 1
        %v5366 = vmin.f32 %v5364, %v5365
        %v5367 = vsel %vm762, %v3478, inf
        %v5368 = vrot.slane %v5367, 4
        %v5369 = vmin.f32 %v5367, %v5368
        %v5370 = vrot.slane %v5369, 2
        %v5371 = vmin.f32 %v5369, %v5370
        %v5372 = vrot.slane %v5371, 1
        %v5373 = vmin.f32 %v5371, %v5372
        %v5374 = vsel %vm762, %v3486, inf
        %v5375 = vrot.slane %v5374, 4
        %v5376 = vmin.f32 %v5374, %v5375
        %v5377 = vrot.slane %v5376, 2
        %v5378 = vmin.f32 %v5376, %v5377
        %v5379 = vrot.slane %v5378, 1
        %v5380 = vmin.f32 %v5378, %v5379
        %v5381 = vsel %vm762, %v3485, inf
        %v5382 = vrot.slane %v5381, 4
        %v5383 = vmin.f32 %v5381, %v5382
        %v5384 = vrot.slane %v5383, 2
        %v5385 = vmin.f32 %v5383, %v5384
        %v5386 = vrot.slane %v5385, 1
        %v5387 = vmin.f32 %v5385, %v5386
        %v5388 = vsel %vm762, %v3487, inf
        %v5389 = vrot.slane %v5388, 4
        %v5390 = vmin.f32 %v5388, %v5389
        %v5391 = vrot.slane %v5390, 2
        %v5392 = vmin.f32 %v5390, %v5391
        %v5393 = vrot.slane %v5392, 1
        %v5394 = vmin.f32 %v5392, %v5393
        %v5395 = vsel %vm762, %v3495, inf
        %v5396 = vrot.slane %v5395, 4
        %v5397 = vmin.f32 %v5395, %v5396
        %v5398 = vrot.slane %v5397, 2
        %v5399 = vmin.f32 %v5397, %v5398
        %v5400 = vrot.slane %v5399, 1
        %v5401 = vmin.f32 %v5399, %v5400
        %v5402 = vsel %vm762, %v3503, inf
        %v5403 = vrot.slane %v5402, 4
        %v5404 = vmin.f32 %v5402, %v5403
        %v5405 = vrot.slane %v5404, 2
        %v5406 = vmin.f32 %v5404, %v5405
        %v5407 = vrot.slane %v5406, 1
        %v5408 = vmin.f32 %v5406, %v5407
        %v5409 = vsel %vm762, %v3502, inf
        %v5410 = vrot.slane %v5409, 4
        %v5411 = vmin.f32 %v5409, %v5410
        %v5412 = vrot.slane %v5411, 2
        %v5413 = vmin.f32 %v5411, %v5412
        %v5414 = vrot.slane %v5413, 1
        %v5415 = vmin.f32 %v5413, %v5414
        %v5416 = vsel %vm762, %v3504, inf
        %v5417 = vrot.slane %v5416, 4
        %v5418 = vmin.f32 %v5416, %v5417
        %v5419 = vrot.slane %v5418, 2
        %v5420 = vmin.f32 %v5418, %v5419
        %v5421 = vrot.slane %v5420, 1
        %v5422 = vmin.f32 %v5420, %v5421
        %v5423 = vsel %vm762, %v3512, inf
        %v5424 = vrot.slane %v5423, 4
        %v5425 = vmin.f32 %v5423, %v5424
        %v5426 = vrot.slane %v5425, 2
        %v5427 = vmin.f32 %v5425, %v5426
        %v5428 = vrot.slane %v5427, 1
        %v5429 = vmin.f32 %v5427, %v5428
        %v5430 = vsel %vm762, %v3520, inf
        %v5431 = vrot.slane %v5430, 4
        %v5432 = vmin.f32 %v5430, %v5431
        %v5433 = vrot.slane %v5432, 2
        %v5434 = vmin.f32 %v5432, %v5433
        %v5435 = vrot.slane %v5434, 1
        %v5436 = vmin.f32 %v5434, %v5435
        %v5437 = vsel %vm762, %v3519, inf
        %v5438 = vrot.slane %v5437, 4
        %v5439 = vmin.f32 %v5437, %v5438
        %v5440 = vrot.slane %v5439, 2
        %v5441 = vmin.f32 %v5439, %v5440
        %v5442 = vrot.slane %v5441, 1
        %v5443 = vmin.f32 %v5441, %v5442
        %v5444 = vsel %vm762, %v3521, inf
        %v5445 = vrot.slane %v5444, 4
        %v5446 = vmin.f32 %v5444, %v5445
        %v5447 = vrot.slane %v5446, 2
        %v5448 = vmin.f32 %v5446, %v5447
        %v5449 = vrot.slane %v5448, 1
        %v5450 = vmin.f32 %v5448, %v5449
        %v5451 = vsel %vm762, %v3529, inf
        %v5452 = vrot.slane %v5451, 4
        %v5453 = vmin.f32 %v5451, %v5452
        %v5454 = vrot.slane %v5453, 2
        %v5455 = vmin.f32 %v5453, %v5454
        %v5456 = vrot.slane %v5455, 1
        %v5457 = vmin.f32 %v5455, %v5456
        %v5458 = vsel %vm762, %v3537, inf
        %v5459 = vrot.slane %v5458, 4
        %v5460 = vmin.f32 %v5458, %v5459
        %v5461 = vrot.slane %v5460, 2
        %v5462 = vmin.f32 %v5460, %v5461
        %v5463 = vrot.slane %v5462, 1
        %v5464 = vmin.f32 %v5462, %v5463
        %v5465 = vsel %vm762, %v3536, inf
        %v5466 = vrot.slane %v5465, 4
        %v5467 = vmin.f32 %v5465, %v5466
        %v5468 = vrot.slane %v5467, 2
        %v5469 = vmin.f32 %v5467, %v5468
        %v5470 = vrot.slane %v5469, 1
        %v5471 = vmin.f32 %v5469, %v5470
        %v5472 = vsel %vm762, %v3538, inf
        %v5473 = vrot.slane %v5472, 4
        %v5474 = vmin.f32 %v5472, %v5473
        %v5475 = vrot.slane %v5474, 2
        %v5476 = vmin.f32 %v5474, %v5475
        %v5477 = vrot.slane %v5476, 1
        %v5478 = vmin.f32 %v5476, %v5477
        %v5479 = vsel %vm762, %v3546, inf
        %v5480 = vrot.slane %v5479, 4
        %v5481 = vmin.f32 %v5479, %v5480
        %v5482 = vrot.slane %v5481, 2
        %v5483 = vmin.f32 %v5481, %v5482
        %v5484 = vrot.slane %v5483, 1
        %v5485 = vmin.f32 %v5483, %v5484
        %v5486 = vsel %vm762, %v3554, inf
        %v5487 = vrot.slane %v5486, 4
        %v5488 = vmin.f32 %v5486, %v5487
        %v5489 = vrot.slane %v5488, 2
        %v5490 = vmin.f32 %v5488, %v5489
        %v5491 = vrot.slane %v5490, 1
        %v5492 = vmin.f32 %v5490, %v5491
        %v5493 = vsel %vm762, %v3553, inf
        %v5494 = vrot.slane %v5493, 4
        %v5495 = vmin.f32 %v5493, %v5494
        %v5496 = vrot.slane %v5495, 2
        %v5497 = vmin.f32 %v5495, %v5496
        %v5498 = vrot.slane %v5497, 1
        %v5499 = vmin.f32 %v5497, %v5498
        %v5500 = vsel %vm762, %v3555, inf
        %v5501 = vrot.slane %v5500, 4
        %v5502 = vmin.f32 %v5500, %v5501
        %v5503 = vrot.slane %v5502, 2
        %v5504 = vmin.f32 %v5502, %v5503
        %v5505 = vrot.slane %v5504, 1
        %v5506 = vmin.f32 %v5504, %v5505
        %v5507 = vsel %vm762, %v3563, inf
        %v5508 = vrot.slane %v5507, 4
        %v5509 = vmin.f32 %v5507, %v5508
        %v5510 = vrot.slane %v5509, 2
        %v5511 = vmin.f32 %v5509, %v5510
        %v5512 = vrot.slane %v5511, 1
        %v5513 = vmin.f32 %v5511, %v5512
        %v5514 = vsel %vm762, %v3571, inf
        %v5515 = vrot.slane %v5514, 4
        %v5516 = vmin.f32 %v5514, %v5515
        %v5517 = vrot.slane %v5516, 2
        %v5518 = vmin.f32 %v5516, %v5517
        %v5519 = vrot.slane %v5518, 1
        %v5520 = vmin.f32 %v5518, %v5519
        %v5521 = vsel %vm762, %v3570, inf
        %v5522 = vrot.slane %v5521, 4
        %v5523 = vmin.f32 %v5521, %v5522
        %v5524 = vrot.slane %v5523, 2
        %v5525 = vmin.f32 %v5523, %v5524
        %v5526 = vrot.slane %v5525, 1
        %v5527 = vmin.f32 %v5525, %v5526
        %v5528 = vsel %vm762, %v3572, inf
        %v5529 = vrot.slane %v5528, 4
        %v5530 = vmin.f32 %v5528, %v5529
        %v5531 = vrot.slane %v5530, 2
        %v5532 = vmin.f32 %v5530, %v5531
        %v5533 = vrot.slane %v5532, 1
        %v5534 = vmin.f32 %v5532, %v5533
        %v5535 = vsel %vm762, %v3580, inf
        %v5536 = vrot.slane %v5535, 4
        %v5537 = vmin.f32 %v5535, %v5536
        %v5538 = vrot.slane %v5537, 2
        %v5539 = vmin.f32 %v5537, %v5538
        %v5540 = vrot.slane %v5539, 1
        %v5541 = vmin.f32 %v5539, %v5540
        %v5542 = vsel %vm762, %v3588, inf
        %v5543 = vrot.slane %v5542, 4
        %v5544 = vmin.f32 %v5542, %v5543
        %v5545 = vrot.slane %v5544, 2
        %v5546 = vmin.f32 %v5544, %v5545
        %v5547 = vrot.slane %v5546, 1
        %v5548 = vmin.f32 %v5546, %v5547
        %v5549 = vsel %vm762, %v3587, inf
        %v5550 = vrot.slane %v5549, 4
        %v5551 = vmin.f32 %v5549, %v5550
        %v5552 = vrot.slane %v5551, 2
        %v5553 = vmin.f32 %v5551, %v5552
        %v5554 = vrot.slane %v5553, 1
        %v5555 = vmin.f32 %v5553, %v5554
        %v5556 = vsel %vm762, %v3589, inf
        %v5557 = vrot.slane %v5556, 4
        %v5558 = vmin.f32 %v5556, %v5557
        %v5559 = vrot.slane %v5558, 2
        %v5560 = vmin.f32 %v5558, %v5559
        %v5561 = vrot.slane %v5560, 1
        %v5562 = vmin.f32 %v5560, %v5561
        %v5563 = vsel %vm762, %v3597, inf
        %v5564 = vrot.slane %v5563, 4
        %v5565 = vmin.f32 %v5563, %v5564
        %v5566 = vrot.slane %v5565, 2
        %v5567 = vmin.f32 %v5565, %v5566
        %v5568 = vrot.slane %v5567, 1
        %v5569 = vmin.f32 %v5567, %v5568
        %v5570 = vsel %vm762, %v3605, inf
        %v5571 = vrot.slane %v5570, 4
        %v5572 = vmin.f32 %v5570, %v5571
        %v5573 = vrot.slane %v5572, 2
        %v5574 = vmin.f32 %v5572, %v5573
        %v5575 = vrot.slane %v5574, 1
        %v5576 = vmin.f32 %v5574, %v5575
        %v5577 = vsel %vm762, %v3604, inf
        %v5578 = vrot.slane %v5577, 4
        %v5579 = vmin.f32 %v5577, %v5578
        %v5580 = vrot.slane %v5579, 2
        %v5581 = vmin.f32 %v5579, %v5580
        %v5582 = vrot.slane %v5581, 1
        %v5583 = vmin.f32 %v5581, %v5582
        %v5584 = vsel %vm762, %v3606, inf
        %v5585 = vrot.slane %v5584, 4
        %v5586 = vmin.f32 %v5584, %v5585
        %v5587 = vrot.slane %v5586, 2
        %v5588 = vmin.f32 %v5586, %v5587
        %v5589 = vrot.slane %v5588, 1
        %v5590 = vmin.f32 %v5588, %v5589
        %v5591 = vmin.f32 %v4701, %v4757
        %v5592 = vmin.f32 %v4708, %v4764
        %v5593 = vmin.f32 %v4715, %v4771
        %v5594 = vmin.f32 %v4722, %v4778
        %v5595 = vmin.f32 %v4729, %v4785
        %v5596 = vmin.f32 %v4736, %v4792
        %v5597 = vmin.f32 %v4743, %v4799
        %v5598 = vmin.f32 %v4750, %v4806
        %v5599 = vmin.f32 %v4813, %v4869
        %v5600 = vmin.f32 %v4820, %v4876
        %v5601 = vmin.f32 %v4827, %v4883
        %v5602 = vmin.f32 %v4834, %v4890
        %v5603 = vmin.f32 %v4841, %v4897
        %v5604 = vmin.f32 %v4848, %v4904
        %v5605 = vmin.f32 %v4855, %v4911
        %v5606 = vmin.f32 %v4862, %v4918
        %v5607 = vmin.f32 %v4925, %v4981
        %v5608 = vmin.f32 %v4932, %v4988
        %v5609 = vmin.f32 %v4939, %v4995
        %v5610 = vmin.f32 %v4946, %v5002
        %v5611 = vmin.f32 %v4953, %v5009
        %v5612 = vmin.f32 %v4960, %v5016
        %v5613 = vmin.f32 %v4967, %v5023
        %v5614 = vmin.f32 %v4974, %v5030
        %v5615 = vmin.f32 %v5037, %v5093
        %v5616 = vmin.f32 %v5044, %v5100
        %v5617 = vmin.f32 %v5051, %v5107
        %v5618 = vmin.f32 %v5058, %v5114
        %v5619 = vmin.f32 %v5065, %v5121
        %v5620 = vmin.f32 %v5072, %v5128
        %v5621 = vmin.f32 %v5079, %v5135
        %v5622 = vmin.f32 %v5086, %v5142
        %v5623 = vmin.f32 %v5149, %v5205
        %v5624 = vmin.f32 %v5156, %v5212
        %v5625 = vmin.f32 %v5163, %v5219
        %v5626 = vmin.f32 %v5170, %v5226
        %v5627 = vmin.f32 %v5177, %v5233
        %v5628 = vmin.f32 %v5184, %v5240
        %v5629 = vmin.f32 %v5191, %v5247
        %v5630 = vmin.f32 %v5198, %v5254
        %v5631 = vmin.f32 %v5261, %v5317
        %v5632 = vmin.f32 %v5268, %v5324
        %v5633 = vmin.f32 %v5275, %v5331
        %v5634 = vmin.f32 %v5282, %v5338
        %v5635 = vmin.f32 %v5289, %v5345
        %v5636 = vmin.f32 %v5296, %v5352
        %v5637 = vmin.f32 %v5303, %v5359
        %v5638 = vmin.f32 %v5310, %v5366
        %v5639 = vmin.f32 %v5373, %v5429
        %v5640 = vmin.f32 %v5380, %v5436
        %v5641 = vmin.f32 %v5387, %v5443
        %v5642 = vmin.f32 %v5394, %v5450
        %v5643 = vmin.f32 %v5401, %v5457
        %v5644 = vmin.f32 %v5408, %v5464
        %v5645 = vmin.f32 %v5415, %v5471
        %v5646 = vmin.f32 %v5422, %v5478
        %v5647 = vmin.f32 %v5485, %v5541
        %v5648 = vmin.f32 %v5492, %v5548
        %v5649 = vmin.f32 %v5499, %v5555
        %v5650 = vmin.f32 %v5506, %v5562
        %v5651 = vmin.f32 %v5513, %v5569
        %v5652 = vmin.f32 %v5520, %v5576
        %v5653 = vmin.f32 %v5527, %v5583
        %v5654 = vmin.f32 %v5534, %v5590
        %vm5719 = vcmask 1041409
        %v5720 = vsel %vm5719, %v4632, %v4631
        %vm5721 = vcmask 1042434
        %v5722 = vsel %vm5721, %v4633, %v5720
        %vm5723 = vcmask 1043459
        %v5724 = vsel %vm5723, %v4634, %v5722
        %vm5725 = vcmask 1044484
        %v5726 = vsel %vm5725, %v4635, %v5724
        %vm5727 = vcmask 1045509
        %v5728 = vsel %vm5727, %v4636, %v5726
        %vm5729 = vcmask 1046534
        %v5730 = vsel %vm5729, %v4637, %v5728
        %vm5731 = vcmask 1047559
        %v5732 = vsel %vm5731, %v4638, %v5730
        %v5733 = vsel %vm5719, %v4640, %v4639
        %v5734 = vsel %vm5721, %v4641, %v5733
        %v5735 = vsel %vm5723, %v4642, %v5734
        %v5736 = vsel %vm5725, %v4643, %v5735
        %v5737 = vsel %vm5727, %v4644, %v5736
        %v5738 = vsel %vm5729, %v4645, %v5737
        %v5739 = vsel %vm5731, %v4646, %v5738
        %v5740 = vsel %vm5719, %v4648, %v4647
        %v5741 = vsel %vm5721, %v4649, %v5740
        %v5742 = vsel %vm5723, %v4650, %v5741
        %v5743 = vsel %vm5725, %v4651, %v5742
        %v5744 = vsel %vm5727, %v4652, %v5743
        %v5745 = vsel %vm5729, %v4653, %v5744
        %v5746 = vsel %vm5731, %v4654, %v5745
        %v5747 = vsel %vm5719, %v4656, %v4655
        %v5748 = vsel %vm5721, %v4657, %v5747
        %v5749 = vsel %vm5723, %v4658, %v5748
        %v5750 = vsel %vm5725, %v4659, %v5749
        %v5751 = vsel %vm5727, %v4660, %v5750
        %v5752 = vsel %vm5729, %v4661, %v5751
        %v5753 = vsel %vm5731, %v4662, %v5752
        %v5754 = vsel %vm5719, %v4664, %v4663
        %v5755 = vsel %vm5721, %v4665, %v5754
        %v5756 = vsel %vm5723, %v4666, %v5755
        %v5757 = vsel %vm5725, %v4667, %v5756
        %v5758 = vsel %vm5727, %v4668, %v5757
        %v5759 = vsel %vm5729, %v4669, %v5758
        %v5760 = vsel %vm5731, %v4670, %v5759
        %v5761 = vsel %vm5719, %v4672, %v4671
        %v5762 = vsel %vm5721, %v4673, %v5761
        %v5763 = vsel %vm5723, %v4674, %v5762
        %v5764 = vsel %vm5725, %v4675, %v5763
        %v5765 = vsel %vm5727, %v4676, %v5764
        %v5766 = vsel %vm5729, %v4677, %v5765
        %v5767 = vsel %vm5731, %v4678, %v5766
        %v5768 = vsel %vm5719, %v4680, %v4679
        %v5769 = vsel %vm5721, %v4681, %v5768
        %v5770 = vsel %vm5723, %v4682, %v5769
        %v5771 = vsel %vm5725, %v4683, %v5770
        %v5772 = vsel %vm5727, %v4684, %v5771
        %v5773 = vsel %vm5729, %v4685, %v5772
        %v5774 = vsel %vm5731, %v4686, %v5773
        %v5775 = vsel %vm5719, %v4688, %v4687
        %v5776 = vsel %vm5721, %v4689, %v5775
        %v5777 = vsel %vm5723, %v4690, %v5776
        %v5778 = vsel %vm5725, %v4691, %v5777
        %v5779 = vsel %vm5727, %v4692, %v5778
        %v5780 = vsel %vm5729, %v4693, %v5779
        %v5781 = vsel %vm5731, %v4694, %v5780
        %5790 = vst [vmem:[%s194] sm:$0xff] %v5732
        %5791 = vst [vmem:[%s194 + $0x8] sm:$0xff] %v5739
        %5792 = vst [vmem:[%s194 + $0x10] sm:$0xff] %v5746
        %5793 = vst [vmem:[%s194 + $0x18] sm:$0xff] %v5753
        %5794 = vst [vmem:[%s194 + $0x20] sm:$0xff] %v5760
        %5795 = vst [vmem:[%s194 + $0x28] sm:$0xff] %v5767
        %5796 = vst [vmem:[%s194 + $0x30] sm:$0xff] %v5774
        %5797 = vst [vmem:[%s194 + $0x38] sm:$0xff] %v5781
        %v5862 = vsel %vm5719, %v5592, %v5591
        %v5863 = vsel %vm5721, %v5593, %v5862
        %v5864 = vsel %vm5723, %v5594, %v5863
        %v5865 = vsel %vm5725, %v5595, %v5864
        %v5866 = vsel %vm5727, %v5596, %v5865
        %v5867 = vsel %vm5729, %v5597, %v5866
        %v5868 = vsel %vm5731, %v5598, %v5867
        %v5869 = vsel %vm5719, %v5600, %v5599
        %v5870 = vsel %vm5721, %v5601, %v5869
        %v5871 = vsel %vm5723, %v5602, %v5870
        %v5872 = vsel %vm5725, %v5603, %v5871
        %v5873 = vsel %vm5727, %v5604, %v5872
        %v5874 = vsel %vm5729, %v5605, %v5873
        %v5875 = vsel %vm5731, %v5606, %v5874
        %v5876 = vsel %vm5719, %v5608, %v5607
        %v5877 = vsel %vm5721, %v5609, %v5876
        %v5878 = vsel %vm5723, %v5610, %v5877
        %v5879 = vsel %vm5725, %v5611, %v5878
        %v5880 = vsel %vm5727, %v5612, %v5879
        %v5881 = vsel %vm5729, %v5613, %v5880
        %v5882 = vsel %vm5731, %v5614, %v5881
        %v5883 = vsel %vm5719, %v5616, %v5615
        %v5884 = vsel %vm5721, %v5617, %v5883
        %v5885 = vsel %vm5723, %v5618, %v5884
        %v5886 = vsel %vm5725, %v5619, %v5885
        %v5887 = vsel %vm5727, %v5620, %v5886
        %v5888 = vsel %vm5729, %v5621, %v5887
        %v5889 = vsel %vm5731, %v5622, %v5888
        %v5890 = vsel %vm5719, %v5624, %v5623
        %v5891 = vsel %vm5721, %v5625, %v5890
        %v5892 = vsel %vm5723, %v5626, %v5891
        %v5893 = vsel %vm5725, %v5627, %v5892
        %v5894 = vsel %vm5727, %v5628, %v5893
        %v5895 = vsel %vm5729, %v5629, %v5894
        %v5896 = vsel %vm5731, %v5630, %v5895
        %v5897 = vsel %vm5719, %v5632, %v5631
        %v5898 = vsel %vm5721, %v5633, %v5897
        %v5899 = vsel %vm5723, %v5634, %v5898
        %v5900 = vsel %vm5725, %v5635, %v5899
        %v5901 = vsel %vm5727, %v5636, %v5900
        %v5902 = vsel %vm5729, %v5637, %v5901
        %v5903 = vsel %vm5731, %v5638, %v5902
        %v5904 = vsel %vm5719, %v5640, %v5639
        %v5905 = vsel %vm5721, %v5641, %v5904
        %v5906 = vsel %vm5723, %v5642, %v5905
        %v5907 = vsel %vm5725, %v5643, %v5906
        %v5908 = vsel %vm5727, %v5644, %v5907
        %v5909 = vsel %vm5729, %v5645, %v5908
        %v5910 = vsel %vm5731, %v5646, %v5909
        %v5911 = vsel %vm5719, %v5648, %v5647
        %v5912 = vsel %vm5721, %v5649, %v5911
        %v5913 = vsel %vm5723, %v5650, %v5912
        %v5914 = vsel %vm5725, %v5651, %v5913
        %v5915 = vsel %vm5727, %v5652, %v5914
        %v5916 = vsel %vm5729, %v5653, %v5915
        %v5917 = vsel %vm5731, %v5654, %v5916
        %5926 = vst [vmem:[%s201] sm:$0xff] %v5868
        %5927 = vst [vmem:[%s201 + $0x8] sm:$0xff] %v5875
        %5928 = vst [vmem:[%s201 + $0x10] sm:$0xff] %v5882
        %5929 = vst [vmem:[%s201 + $0x18] sm:$0xff] %v5889
        %5930 = vst [vmem:[%s201 + $0x20] sm:$0xff] %v5896
        %5931 = vst [vmem:[%s201 + $0x28] sm:$0xff] %v5903
        %5932 = vst [vmem:[%s201 + $0x30] sm:$0xff] %v5910
        %5933 = vst [vmem:[%s201 + $0x38] sm:$0xff] %v5917
        %s5934 = sand.u32 %s77, 1
        %s5935 = scalar_lea.sflag [#allocation3], %s5934
        %s5936 = sand.u32 %s77, 1
        %s5937 = smul.addr %s5936, 64
        %s5938 = scalar_lea.vmem [#allocation2], %s5937
        %s5939 = sand.u32 %s22, 1
        %s5940 = scalar_lea.sflag [#allocation5], %s5939
        %s5941 = sand.u32 %s103, 1
        %s5942 = smul.addr %s5941, 64
        %s5943 = scalar_lea.vmem [#allocation4], %s5942
        %s5944 = sand.u32 %s22, 1
        %s5945 = scalar_lea.sflag [#allocation5], %s5944
        %s5946 = sand.u32 %s129, 1
        %s5947 = smul.addr %s5946, 2
        %s5948 = scalar_lea.vmem [#allocation6], %s5947
        // Predicated region
        $region29: #{tpu_custom_call.1} parent=27 // pred_check
          %p5949 = pneg %p87
        $region30: #{tpu_custom_call.1} parent=27 // pred_check_branch
          %5951 = sbr.rel (%p5949) target = $region32
        $region31: #{tpu_custom_call.1} parent=27 // pred_region
          %s5953 = ssub.s32 1024, 1024
          %5954 = vsyncadd %s5935, %s5953
          %s5955 = smul.addr %s22, 8
          %s5956 = smul.addr %s5955, 128
          %s5957 = scalar_lea.hbm %s2, %s5956
          %s5958 = sshll.u32 %s5938, 4
          %s5959 = int_to_ptr.vmem [resolvable:$true] %s5958
          %5964 = dma.vmem_to_hbm [thread:$0]  %s5959, 1024, %s5957, %s5935, 128, 128, 8
        $region32: #{tpu_custom_call.1} parent=27 // pred_fallthru
          _
        // Predicated region
        $region33: #{tpu_custom_call.1} parent=27 // pred_check
          %p5965 = pneg %p113
        $region34: #{tpu_custom_call.1} parent=27 // pred_check_branch
          %5967 = sbr.rel (%p5965) target = $region36
        $region35: #{tpu_custom_call.1} parent=27 // pred_region
          %s5969 = ssub.s32 1024, 1024
          %5970 = vsyncadd %s5940, %s5969
          %s5971 = smul.addr %s22, 8
          %s5972 = smul.addr %s5971, 128
          %s5973 = scalar_lea.hbm %s3, %s5972
          %s5974 = sshll.u32 %s5943, 4
          %s5975 = int_to_ptr.vmem [resolvable:$true] %s5974
          %5980 = dma.vmem_to_hbm [thread:$0]  %s5975, 1024, %s5973, %s5940, 128, 128, 8
        $region36: #{tpu_custom_call.1} parent=27 // pred_fallthru
          _
        // Predicated region
        $region37: #{tpu_custom_call.1} parent=27 // pred_check
          %p5981 = pneg %p139
        $region38: #{tpu_custom_call.1} parent=27 // pred_check_branch
          %5983 = sbr.rel (%p5981) target = $region40
        $region39: #{tpu_custom_call.1} parent=27 // pred_region
          %s5985 = ssub.s32 32, 32
          %5986 = vsyncadd %s5945, %s5985
          %s5987 = smul.addr %s22, 32
          %s5988 = scalar_lea.hbm %s4, %s5987
          %s5990 = sshll.u32 %s5948, 4
          %s5991 = int_to_ptr.vmem [resolvable:$true] %s5990
          %5993 = dma.vmem_to_hbm [thread:$0]  %s5991, 32, %s5988, %s5945
        $region40: #{tpu_custom_call.1} parent=27 // pred_fallthru
          _
      $region28: #{tpu_custom_call.1} parent=5 // pred_fallthru
        _
      %p5994 = scmp.le.s32.totalorder 2, %s17
      // Predicated region
      $region41: #{tpu_custom_call.1} parent=5 // pred_check
        %p5995 = pneg %p5994
      $region42: #{tpu_custom_call.1} parent=5 // pred_check_branch
        %5997 = sbr.rel (%p5995) target = $region44
      $region43: #{tpu_custom_call.1} parent=5 // pred_region
        %s5998 = ssub.s32 %s17, 2
        // Predicated region
        $region45: #{tpu_custom_call.1} parent=43 // pred_check
          %p5999 = pneg %p93
        $region46: #{tpu_custom_call.1} parent=43 // pred_check_branch
          %6001 = sbr.rel (%p5999) target = $region48
        $region47: #{tpu_custom_call.1} parent=43 // pred_region
          %s6002 = sand.u32 %s78, 1
          %s6003 = scalar_lea.sflag [#allocation3], %s6002
          %s6004 = sand.u32 %s78, 1
          %s6005 = smul.addr %s6004, 64
          %s6006 = scalar_lea.vmem [#allocation2], %s6005
          %6007 = dma.done %s6003, 1024
        $region48: #{tpu_custom_call.1} parent=43 // pred_fallthru
          _
        // Predicated region
        $region49: #{tpu_custom_call.1} parent=43 // pred_check
          %p6008 = pneg %p119
        $region50: #{tpu_custom_call.1} parent=43 // pred_check_branch
          %6010 = sbr.rel (%p6008) target = $region52
        $region51: #{tpu_custom_call.1} parent=43 // pred_region
          %s6011 = sand.u32 %s23, 1
          %s6012 = scalar_lea.sflag [#allocation5], %s6011
          %s6013 = sand.u32 %s104, 1
          %s6014 = smul.addr %s6013, 64
          %s6015 = scalar_lea.vmem [#allocation4], %s6014
          %6016 = dma.done %s6012, 1024
        $region52: #{tpu_custom_call.1} parent=43 // pred_fallthru
          _
        // Predicated region
        $region53: #{tpu_custom_call.1} parent=43 // pred_check
          %p6017 = pneg %p145
        $region54: #{tpu_custom_call.1} parent=43 // pred_check_branch
          %6019 = sbr.rel (%p6017) target = $region56
        $region55: #{tpu_custom_call.1} parent=43 // pred_region
          %s6020 = sand.u32 %s23, 1
          %s6021 = scalar_lea.sflag [#allocation5], %s6020
          %s6022 = sand.u32 %s130, 1
          %s6023 = smul.addr %s6022, 2
          %s6024 = scalar_lea.vmem [#allocation6], %s6023
          %6025 = dma.done %s6021, 32
        $region56: #{tpu_custom_call.1} parent=43 // pred_fallthru
          _
      $region44: #{tpu_custom_call.1} parent=5 // pred_fallthru
        _
    $region6: #{tpu_custom_call.1} parent=1 // loop_footer
      %s21 = sadd.s32 1, %s17
    $region7: #{tpu_custom_call.1} parent=1 // loop_footer_branch
      %16 = sbr.rel target = $region3
    $region8: #{tpu_custom_call.1} parent=1 // loop_exit
      _
    %6026 = vsyncpa [#allocation3], 1
    %s6027 = scalar_lea.sflag [#allocation3], 1
    %6028 = vsyncpa %s6027, 1
    %6029 = vsyncpa [#allocation5], 1
    %s6030 = scalar_lea.sflag [#allocation5], 1
    %6031 = vsyncpa %s6030, 1

</llo_original>
